<compile_context>
chip_gen: v5e
topology: v5e:2x2
jax: 0.10.0
libtpu: 0.0.40
codegen_flags: <defaults>
</compile_context>

<pallas_src>
import functools

import numpy as np
import jax
import jax.numpy as jnp
from jax import lax
from jax.experimental import pallas as pl
from jax.experimental.pallas import tpu as pltpu


_LANES = 128


def _round_up(x, m):
    return (x + m - 1) // m * m


def _pad_lanes(a, n):
    """Zero-pad the last axis of `a` up to n (lane-dense layout)."""
    pad = n - a.shape[-1]
    if pad == 0:
        return a
    cfg = [(0, 0)] * (a.ndim - 1) + [(0, pad)]
    return jnp.pad(a, cfg)


# ------------------------------ fused kernel ---------------------------------

def _fused_kernel(x1_ref, w1_ref, b1_ref,
                  x2_ref, w2_ref,
                  p3_ref, w3_ref,
                  p4_ref, w4_ref, b4_ref,
                  o1_ref, o2_ref, o3_ref, o4_ref,
                  *, conv2_in_kernel):
    # ---- conv1: Conv1d(1, 200, 3, stride=2) + tanh  (VPU-only path) --------
    # x1_ref is the stride-2 phase split of the signal: x[2q + r] == x1_ref[q, r].
    # Three broadcast FMAs instead of a (19,3)x(3,200) MXU matmul.
    n_out1 = o1_ref.shape[0]
    x1 = x1_ref[...]                                     # (L/2, 2)   f32
    w1 = w1_ref[...]                                     # (3, C1pad) f32
    acc1 = (x1[0:n_out1, 0:1] * w1[0:1, :]               # tap 0 -> x[2l]
            + x1[0:n_out1, 1:2] * w1[1:2, :]             # tap 1 -> x[2l+1]
            + x1[1:n_out1 + 1, 0:1] * w1[2:3, :]         # tap 2 -> x[2l+2]
            + b1_ref[...])
    o1_ref[...] = jnp.tanh(acc1)

    # ---- conv2: Conv2d(16, 32, 3, stride=1, bias=False) + sigmoid ----------
    if conv2_in_kernel:
        # im2col stays in VMEM: 9 rectangular tap windows of the resident
        # channels-last input, each collapsed (sublane-aligned, f32) to
        # (M2, C_in) and fed to the MXU in bf16 with f32 accumulation.
        m2 = o2_ref.shape[0]
        c_in = x2_ref.shape[-1]
        oh = x2_ref.shape[1] - 2                         # kernel 3, stride 1
        ow = x2_ref.shape[2] - 2
        acc2 = jnp.zeros(o2_ref.shape, jnp.float32)
        for kh in range(3):
            for kw in range(3):
                win = x2_ref[:, pl.ds(kh, oh), pl.ds(kw, ow), :]   # (N,oh,ow,Cin) f32
                patch = win.reshape(m2, c_in).astype(jnp.bfloat16)
                acc2 = acc2 + jnp.dot(patch, w2_ref[kh * 3 + kw],
                                      preferred_element_type=jnp.float32)
    else:
        # fallback: pre-packed (M2, 9*C_in) bf16 patches, single matmul
        acc2 = jnp.dot(x2_ref[...], w2_ref[...], preferred_element_type=jnp.float32)
    o2_ref[...] = jax.nn.sigmoid(acc2)

    # ---- conv3: Conv3d(16, 32, 3, stride=3, bias=False) + relu -------------
    acc3 = jnp.dot(p3_ref[...], w3_ref[...], preferred_element_type=jnp.float32)
    o3_ref[...] = jnp.maximum(acc3, 0.0)

    # ---- conv4: Conv2d(16, 8, 2, stride=(2,1)) + tanh(tanh) ----------------
    acc4 = jnp.dot(p4_ref[...], w4_ref[...], preferred_element_type=jnp.float32)
    o4_ref[...] = jnp.tanh(jnp.tanh(acc4 + b4_ref[...]))


# ------------------------------ forward (JAX) ---------------------------------

@functools.partial(jax.jit, static_argnames=("conv2_in_kernel",))
def model_tanh_forward(params, x1, x2, x3, x4, *, conv2_in_kernel=True):
    w1, b1 = params["w1"], params["b1"]     # (200,1,3), (200,)
    w2 = params["w2"]                       # (32,16,3,3)
    w3 = params["w3"]                       # (32,16,3,3,3)
    w4, b4 = params["w4"], params["b4"]     # (8,16,2,2), (8,)

    # ---- conv1 prep: stride-2 phase split (zero inflation), f32 VPU path ----
    N1, _, L1 = x1.shape
    L1o = (L1 - 3) // 2 + 1
    C1 = w1.shape[0]
    C1p = _round_up(C1, _LANES)
    x1p = x1.reshape(L1 // 2, 2)                                   # (20, 2)
    w1p = _pad_lanes(w1.reshape(C1, 3).T, C1p)                     # (3, 256)
    b1p = _pad_lanes(b1.reshape(1, C1), C1p)                       # (1, 256)

    # ---- conv2 prep ----------------------------------------------------------
    N2, C2i, H2, W2 = x2.shape
    H2o, W2o = H2 - 2, W2 - 2
    M2 = N2 * H2o * W2o
    C2 = w2.shape[0]
    C2p = _round_up(C2, _LANES)
    x2cl = x2.transpose(0, 2, 3, 1)                                # (N,H,W,Cin)
    # per-tap weights (tap, C_in, C_out_padded), bf16 for the MXU
    w2t = _pad_lanes(w2.transpose(2, 3, 1, 0).reshape(9, C2i, C2),
                     C2p).astype(jnp.bfloat16)                     # (9,16,128)
    if conv2_in_kernel:
        x2_arg = x2cl                                              # f32; cast to bf16
        w2_arg = w2t                                               # after in-kernel collapse
    else:
        wins2 = [x2cl[:, a:a + H2o, b:b + W2o, :] for a in range(3) for b in range(3)]
        x2_arg = jnp.concatenate(wins2, axis=-1).reshape(M2, 9 * C2i).astype(jnp.bfloat16)
        w2_arg = w2t.reshape(9 * C2i, C2p)                         # (144, 128)

    # ---- conv3 prep: stride==kernel==3 -> im2col is a pure permutation ------
    N3, C3i, D3, H3, W3 = x3.shape
    D3o, H3o, W3o = D3 // 3, H3 // 3, W3 // 3
    M3 = N3 * D3o * H3o * W3o
    C3 = w3.shape[0]
    C3p = _round_up(C3, _LANES)
    p3 = (x3.reshape(N3, C3i, D3o, 3, H3o, 3, W3o, 3)
            .transpose(0, 2, 4, 6, 1, 3, 5, 7)
            .reshape(M3, C3i * 27)).astype(jnp.bfloat16)           # (54, 432)
    w3p = _pad_lanes(w3.reshape(C3, C3i * 27).T, C3p).astype(jnp.bfloat16)   # (432,128)

    # ---- conv4 prep: only the W taps overlap -> 1.8x repack of 18 KiB -------
    N4, C4i, H4, W4 = x4.shape
    H4o, W4o = (H4 - 2) // 2 + 1, W4 - 1
    M4 = N4 * H4o * W4o
    C4 = w4.shape[0]
    C4p = _round_up(C4, _LANES)
    x4cl = x4.transpose(0, 2, 3, 1)                                # (N,H,W,Cin)
    wins4 = [x4cl[:, kh:kh + 2 * (H4o - 1) + 1:2, kw:kw + W4o, :]
             for kh in range(2) for kw in range(2)]                # each (2,4,9,16)
    p4 = jnp.stack(wins4, axis=-1).reshape(M4, C4i * 4).astype(jnp.bfloat16)  # (72,64)
    w4p = _pad_lanes(w4.reshape(C4, C4i * 4).T, C4p).astype(jnp.bfloat16)     # (64,128)
    b4p = _pad_lanes(b4.reshape(1, C4), C4p)                       # (1,128) f32

    # ---- single fused pallas_call -------------------------------------------
    out_shapes = (
        jax.ShapeDtypeStruct((L1o, C1p), jnp.float32),
        jax.ShapeDtypeStruct((M2, C2p), jnp.float32),
        jax.ShapeDtypeStruct((M3, C3p), jnp.float32),
        jax.ShapeDtypeStruct((M4, C4p), jnp.float32),
    )
    args = (x1p, w1p, b1p, x2_arg, w2_arg, p3, w3p, p4, w4p, b4p)
    vmem = pl.BlockSpec(memory_space=pltpu.MemorySpace.VMEM)

    flops = 2 * (L1o * 3 * C1p + M2 * (9 * C2i) * C2p
                 + M3 * (C3i * 27) * C3p + M4 * (C4i * 4) * C4p)
    transcendentals = L1o * C1p + M2 * C2p + 2 * M4 * C4p
    bytes_accessed = (sum(int(np.prod(a.shape)) * a.dtype.itemsize for a in args)
                      + sum(int(np.prod(s.shape)) * s.dtype.itemsize for s in out_shapes))

    o1, o2, o3, o4 = pl.pallas_call(
        functools.partial(_fused_kernel, conv2_in_kernel=conv2_in_kernel),
        out_shape=out_shapes,
        in_specs=[vmem] * len(args),
        out_specs=(vmem, vmem, vmem, vmem),
        cost_estimate=pl.CostEstimate(flops=int(flops),
                                      transcendentals=int(transcendentals),
                                      bytes_accessed=int(bytes_accessed)),
    )(*args)

    # ---- strip lane padding, restore channels-first (PyTorch) layout --------
    y1 = o1[:, :C1].T.reshape(N1, C1, L1o)                                    # (1,200,19)
    y2 = o2[:, :C2].reshape(N2, H2o, W2o, C2).transpose(0, 3, 1, 2)           # (2,32,8,8)
    y3 = o3[:, :C3].reshape(N3, D3o, H3o, W3o, C3).transpose(0, 4, 1, 2, 3)   # (2,32,3,3,3)
    y4 = o4[:, :C4].reshape(N4, H4o, W4o, C4).transpose(0, 3, 1, 2)           # (2,8,4,9)
    return y1, y2, y3, y4


# --------------------------- parameters & reference ---------------------------

def _init_conv(key, c_out, c_in, kernel, use_bias):
    """PyTorch-default U(-1/sqrt(fan_in), 1/sqrt(fan_in)) init."""
    fan_in = c_in * int(np.prod(kernel))
    bound = 1.0 / float(np.sqrt(fan_in))
    kw, kb = jax.random.split(key)
    w = jax.random.uniform(kw, (c_out, c_in) + tuple(kernel), jnp.float32, -bound, bound)
    b = jax.random.uniform(kb, (c_out,), jnp.float32, -bound, bound) if use_bias else None
    return w, b


_SPECS = {1: ("NCH", "OIH", "NCH"),
          2: ("NCHW", "OIHW", "NCHW"),
          3: ("NCDHW", "OIDHW", "NCDHW")}


def _ref_conv_act(x, w, b, strides, act, cast_dtype=None):
    nd = len(strides)
    if cast_dtype is not None:
        x = x.astype(cast_dtype)
        w = w.astype(cast_dtype)
    y = lax.conv_general_dilated(x, w, window_strides=strides, padding="VALID",
                                 dimension_numbers=_SPECS[nd],
                                 preferred_element_type=jnp.float32)
    if b is not None:
        y = y + b.reshape((1, -1) + (1,) * nd)
    return act(y)


# ----------------------------------- main -------------------------------------

if __name__ == "__main__":
    root = jax.random.PRNGKey(0)
    k_params, k_x = jax.random.split(root)
    kp = jax.random.split(k_params, 4)

    w1, b1 = _init_conv(kp[0], 200, 1, (3,), use_bias=True)       # Conv1d(1, 200, 3, stride=2)
    w2, _ = _init_conv(kp[1], 32, 16, (3, 3), use_bias=False)     # Conv2d(16, 32, 3, bias=False)
    w3, _ = _init_conv(kp[2], 32, 16, (3, 3, 3), use_bias=False)  # Conv3d(16, 32, 3, stride=3)
    w4, b4 = _init_conv(kp[3], 8, 16, (2, 2), use_bias=True)      # Conv2d(16, 8, 2, stride=(2,1))
    params = dict(w1=w1, b1=b1, w2=w2, w3=w3, w4=w4, b4=b4)

    kx = jax.random.split(k_x, 4)
    x1 = jax.random.normal(kx[0], (1, 1, 40), jnp.float32)        # Conv1d input  (N, 1, L)
    x2 = jax.random.normal(kx[1], (2, 16, 10, 10), jnp.float32)   # Conv2d input  (N, 16, H, W)
    x3 = jax.random.normal(kx[2], (2, 16, 9, 9, 9), jnp.float32)  # Conv3d input  (N, 16, D, H, W)
    x4 = jax.random.normal(kx[3], (2, 16, 8, 10), jnp.float32)    # Conv2d input  (N, 16, H, W)

    try:
        outs = jax.block_until_ready(
            model_tanh_forward(params, x1, x2, x3, x4, conv2_in_kernel=True))
    except Exception:
        # Portability guard: if this Mosaic build rejects the in-kernel
        # (N,8,8,16)->(128,16) window collapse for conv2, fall back to packing
        # conv2 patches in the wrapper (still one fused pallas_call).
        outs = jax.block_until_ready(
            model_tanh_forward(params, x1, x2, x3, x4, conv2_in_kernel=False))

    # (1) tight check vs a reference at the kernel's own precision
    #     (bf16 MXU inputs, f32 accumulation; conv1 runs fully in f32).
    relu = lambda v: jnp.maximum(v, 0.0)
    tanh2 = lambda v: jnp.tanh(jnp.tanh(v))
    refs_same_prec = (
        _ref_conv_act(x1, w1, b1, (2,), jnp.tanh),
        _ref_conv_act(x2, w2, None, (1, 1), jax.nn.sigmoid, jnp.bfloat16),
        _ref_conv_act(x3, w3, None, (3, 3, 3), relu, jnp.bfloat16),
        _ref_conv_act(x4, w4, b4, (2, 1), tanh2, jnp.bfloat16),
    )
    for o, r in zip(outs, refs_same_prec):
        assert o.shape == r.shape, (o.shape, r.shape)
        np.testing.assert_allclose(np.asarray(o), np.asarray(r), rtol=2e-3, atol=2e-3)

    # (2) looser check vs the original full-f32 module semantics
    #     (difference == bf16 rounding of the MXU inputs).
    refs_f32 = (
        _ref_conv_act(x1, w1, b1, (2,), jnp.tanh),
        _ref_conv_act(x2, w2, None, (1, 1), jax.nn.sigmoid),
        _ref_conv_act(x3, w3, None, (3, 3, 3), relu),
        _ref_conv_act(x4, w4, b4, (2, 1), tanh2),
    )
    for o, r in zip(outs, refs_f32):
        np.testing.assert_allclose(np.asarray(o), np.asarray(r), rtol=2e-2, atol=2e-2)

    print("KERNEL_OK")
</pallas_src>

<mosaic_0001>
module attributes {stable_mosaic.version = 11 : i64} {
  func.func @_fused_kernel(%arg0: memref<20x2xf32, #tpu.memory_space<vmem>>, %arg1: memref<3x256xf32, #tpu.memory_space<vmem>>, %arg2: memref<1x256xf32, #tpu.memory_space<vmem>>, %arg3: memref<2x10x10x16xf32, #tpu.memory_space<vmem>>, %arg4: memref<9x16x128xbf16, #tpu.memory_space<vmem>>, %arg5: memref<54x432xbf16, #tpu.memory_space<vmem>>, %arg6: memref<432x128xbf16, #tpu.memory_space<vmem>>, %arg7: memref<72x64xbf16, #tpu.memory_space<vmem>>, %arg8: memref<64x128xbf16, #tpu.memory_space<vmem>>, %arg9: memref<1x128xf32, #tpu.memory_space<vmem>>, %arg10: memref<19x256xf32, #tpu.memory_space<vmem>>, %arg11: memref<128x128xf32, #tpu.memory_space<vmem>>, %arg12: memref<54x128xf32, #tpu.memory_space<vmem>>, %arg13: memref<72x128xf32, #tpu.memory_space<vmem>>) attributes {dimension_semantics = [], scalar_prefetch = 0 : i64, scratch_operands = 0 : i64, tpu.core_type = #tpu.core_type<tc>} {
    %c0 = arith.constant 0 : index
    %c0_0 = arith.constant 0 : index
    %0 = vector.load %arg0[%c0, %c0_0] : memref<20x2xf32, #tpu.memory_space<vmem>>, vector<20x2xf32>
    %c0_1 = arith.constant 0 : index
    %c0_2 = arith.constant 0 : index
    %1 = vector.load %arg1[%c0_1, %c0_2] : memref<3x256xf32, #tpu.memory_space<vmem>>, vector<3x256xf32>
    %2 = vector.extract_strided_slice %0 {offsets = [0, 0], sizes = [19, 1], strides = [1, 1]} : vector<20x2xf32> to vector<19x1xf32>
    %3 = vector.extract_strided_slice %1 {offsets = [0, 0], sizes = [1, 256], strides = [1, 1]} : vector<3x256xf32> to vector<1x256xf32>
    %4 = vector.broadcast %2 : vector<19x1xf32> to vector<19x256xf32>
    %5 = vector.broadcast %3 : vector<1x256xf32> to vector<19x256xf32>
    %6 = arith.mulf %4, %5 : vector<19x256xf32>
    %7 = vector.extract_strided_slice %0 {offsets = [0, 1], sizes = [19, 1], strides = [1, 1]} : vector<20x2xf32> to vector<19x1xf32>
    %8 = vector.extract_strided_slice %1 {offsets = [1, 0], sizes = [1, 256], strides = [1, 1]} : vector<3x256xf32> to vector<1x256xf32>
    %9 = vector.broadcast %7 : vector<19x1xf32> to vector<19x256xf32>
    %10 = vector.broadcast %8 : vector<1x256xf32> to vector<19x256xf32>
    %11 = arith.mulf %9, %10 : vector<19x256xf32>
    %12 = arith.addf %6, %11 : vector<19x256xf32>
    %13 = vector.extract_strided_slice %0 {offsets = [1, 0], sizes = [19, 1], strides = [1, 1]} : vector<20x2xf32> to vector<19x1xf32>
    %14 = vector.extract_strided_slice %1 {offsets = [2, 0], sizes = [1, 256], strides = [1, 1]} : vector<3x256xf32> to vector<1x256xf32>
    %15 = vector.broadcast %13 : vector<19x1xf32> to vector<19x256xf32>
    %16 = vector.broadcast %14 : vector<1x256xf32> to vector<19x256xf32>
    %17 = arith.mulf %15, %16 : vector<19x256xf32>
    %18 = arith.addf %12, %17 : vector<19x256xf32>
    %c0_3 = arith.constant 0 : index
    %c0_4 = arith.constant 0 : index
    %19 = vector.load %arg2[%c0_3, %c0_4] : memref<1x256xf32, #tpu.memory_space<vmem>>, vector<1x256xf32>
    %20 = vector.broadcast %19 : vector<1x256xf32> to vector<19x256xf32>
    %21 = arith.addf %18, %20 : vector<19x256xf32>
    %22 = math.tanh %21 : vector<19x256xf32>
    %c0_5 = arith.constant 0 : index
    %c0_6 = arith.constant 0 : index
    %23 = vector.load %arg10[%c0_5, %c0_6] : memref<19x256xf32, #tpu.memory_space<vmem>>, vector<19x256xf32>
    tpu.vector_store %arg10[%c0_5, %c0_6], %22 {strides = array<i32>} : memref<19x256xf32, #tpu.memory_space<vmem>>, vector<19x256xf32>,
    %cst = arith.constant 0.000000e+00 : f32
    %24 = vector.broadcast %cst : f32 to vector<128x128xf32>
    %c0_7 = arith.constant 0 : index
    %c0_8 = arith.constant 0 : index
    %c0_9 = arith.constant 0 : index
    %c0_10 = arith.constant 0 : index
    %25 = vector.load %arg3[%c0_7, %c0_8, %c0_9, %c0_10] : memref<2x10x10x16xf32, #tpu.memory_space<vmem>>, vector<2x8x8x16xf32>
    %26 = vector.shape_cast %25 : vector<2x8x8x16xf32> to vector<128x16xf32>
    %27 = arith.truncf %26 : vector<128x16xf32> to vector<128x16xbf16>
    %c0_11 = arith.constant 0 : index
    %c0_12 = arith.constant 0 : index
    %c0_13 = arith.constant 0 : index
    %28 = vector.load %arg4[%c0_11, %c0_12, %c0_13] : memref<9x16x128xbf16, #tpu.memory_space<vmem>>, vector<1x16x128xbf16>
    %29 = vector.shape_cast %28 : vector<1x16x128xbf16> to vector<16x128xbf16>
    %cst_14 = arith.constant dense<0.000000e+00> : vector<128x128xf32>
    %30 = tpu.matmul %27, %29, %cst_14 {dimension_numbers = #tpu.dot_dimension_numbers<[1], [0], [0], [1], [0, 0, 1, 1], [], []>} : vector<128x16xbf16>, vector<16x128xbf16>, vector<128x128xf32> -> vector<128x128xf32>
    %31 = arith.addf %24, %30 : vector<128x128xf32>
    %c0_15 = arith.constant 0 : index
    %c0_16 = arith.constant 0 : index
    %c1 = arith.constant 1 : index
    %c0_17 = arith.constant 0 : index
    %32 = vector.load %arg3[%c0_15, %c0_16, %c1, %c0_17] : memref<2x10x10x16xf32, #tpu.memory_space<vmem>>, vector<2x8x8x16xf32>
    %33 = vector.shape_cast %32 : vector<2x8x8x16xf32> to vector<128x16xf32>
    %34 = arith.truncf %33 : vector<128x16xf32> to vector<128x16xbf16>
    %c1_18 = arith.constant 1 : index
    %c0_19 = arith.constant 0 : index
    %c0_20 = arith.constant 0 : index
    %35 = vector.load %arg4[%c1_18, %c0_19, %c0_20] : memref<9x16x128xbf16, #tpu.memory_space<vmem>>, vector<1x16x128xbf16>
    %36 = vector.shape_cast %35 : vector<1x16x128xbf16> to vector<16x128xbf16>
    %cst_21 = arith.constant dense<0.000000e+00> : vector<128x128xf32>
    %37 = tpu.matmul %34, %36, %cst_21 {dimension_numbers = #tpu.dot_dimension_numbers<[1], [0], [0], [1], [0, 0, 1, 1], [], []>} : vector<128x16xbf16>, vector<16x128xbf16>, vector<128x128xf32> -> vector<128x128xf32>
    %38 = arith.addf %31, %37 : vector<128x128xf32>
    %c0_22 = arith.constant 0 : index
    %c0_23 = arith.constant 0 : index
    %c2 = arith.constant 2 : index
    %c0_24 = arith.constant 0 : index
    %39 = vector.load %arg3[%c0_22, %c0_23, %c2, %c0_24] : memref<2x10x10x16xf32, #tpu.memory_space<vmem>>, vector<2x8x8x16xf32>
    %40 = vector.shape_cast %39 : vector<2x8x8x16xf32> to vector<128x16xf32>
    %41 = arith.truncf %40 : vector<128x16xf32> to vector<128x16xbf16>
    %c2_25 = arith.constant 2 : index
    %c0_26 = arith.constant 0 : index
    %c0_27 = arith.constant 0 : index
    %42 = vector.load %arg4[%c2_25, %c0_26, %c0_27] : memref<9x16x128xbf16, #tpu.memory_space<vmem>>, vector<1x16x128xbf16>
    %43 = vector.shape_cast %42 : vector<1x16x128xbf16> to vector<16x128xbf16>
    %cst_28 = arith.constant dense<0.000000e+00> : vector<128x128xf32>
    %44 = tpu.matmul %41, %43, %cst_28 {dimension_numbers = #tpu.dot_dimension_numbers<[1], [0], [0], [1], [0, 0, 1, 1], [], []>} : vector<128x16xbf16>, vector<16x128xbf16>, vector<128x128xf32> -> vector<128x128xf32>
    %45 = arith.addf %38, %44 : vector<128x128xf32>
    %c0_29 = arith.constant 0 : index
    %c1_30 = arith.constant 1 : index
    %c0_31 = arith.constant 0 : index
    %c0_32 = arith.constant 0 : index
    %46 = vector.load %arg3[%c0_29, %c1_30, %c0_31, %c0_32] : memref<2x10x10x16xf32, #tpu.memory_space<vmem>>, vector<2x8x8x16xf32>
    %47 = vector.shape_cast %46 : vector<2x8x8x16xf32> to vector<128x16xf32>
    %48 = arith.truncf %47 : vector<128x16xf32> to vector<128x16xbf16>
    %c3 = arith.constant 3 : index
    %c0_33 = arith.constant 0 : index
    %c0_34 = arith.constant 0 : index
    %49 = vector.load %arg4[%c3, %c0_33, %c0_34] : memref<9x16x128xbf16, #tpu.memory_space<vmem>>, vector<1x16x128xbf16>
    %50 = vector.shape_cast %49 : vector<1x16x128xbf16> to vector<16x128xbf16>
    %cst_35 = arith.constant dense<0.000000e+00> : vector<128x128xf32>
    %51 = tpu.matmul %48, %50, %cst_35 {dimension_numbers = #tpu.dot_dimension_numbers<[1], [0], [0], [1], [0, 0, 1, 1], [], []>} : vector<128x16xbf16>, vector<16x128xbf16>, vector<128x128xf32> -> vector<128x128xf32>
    %52 = arith.addf %45, %51 : vector<128x128xf32>
    %c0_36 = arith.constant 0 : index
    %c1_37 = arith.constant 1 : index
    %c1_38 = arith.constant 1 : index
    %c0_39 = arith.constant 0 : index
    %53 = vector.load %arg3[%c0_36, %c1_37, %c1_38, %c0_39] : memref<2x10x10x16xf32, #tpu.memory_space<vmem>>, vector<2x8x8x16xf32>
    %54 = vector.shape_cast %53 : vector<2x8x8x16xf32> to vector<128x16xf32>
    %55 = arith.truncf %54 : vector<128x16xf32> to vector<128x16xbf16>
    %c4 = arith.constant 4 : index
    %c0_40 = arith.constant 0 : index
    %c0_41 = arith.constant 0 : index
    %56 = vector.load %arg4[%c4, %c0_40, %c0_41] : memref<9x16x128xbf16, #tpu.memory_space<vmem>>, vector<1x16x128xbf16>
    %57 = vector.shape_cast %56 : vector<1x16x128xbf16> to vector<16x128xbf16>
    %cst_42 = arith.constant dense<0.000000e+00> : vector<128x128xf32>
    %58 = tpu.matmul %55, %57, %cst_42 {dimension_numbers = #tpu.dot_dimension_numbers<[1], [0], [0], [1], [0, 0, 1, 1], [], []>} : vector<128x16xbf16>, vector<16x128xbf16>, vector<128x128xf32> -> vector<128x128xf32>
    %59 = arith.addf %52, %58 : vector<128x128xf32>
    %c0_43 = arith.constant 0 : index
    %c1_44 = arith.constant 1 : index
    %c2_45 = arith.constant 2 : index
    %c0_46 = arith.constant 0 : index
    %60 = vector.load %arg3[%c0_43, %c1_44, %c2_45, %c0_46] : memref<2x10x10x16xf32, #tpu.memory_space<vmem>>, vector<2x8x8x16xf32>
    %61 = vector.shape_cast %60 : vector<2x8x8x16xf32> to vector<128x16xf32>
    %62 = arith.truncf %61 : vector<128x16xf32> to vector<128x16xbf16>
    %c5 = arith.constant 5 : index
    %c0_47 = arith.constant 0 : index
    %c0_48 = arith.constant 0 : index
    %63 = vector.load %arg4[%c5, %c0_47, %c0_48] : memref<9x16x128xbf16, #tpu.memory_space<vmem>>, vector<1x16x128xbf16>
    %64 = vector.shape_cast %63 : vector<1x16x128xbf16> to vector<16x128xbf16>
    %cst_49 = arith.constant dense<0.000000e+00> : vector<128x128xf32>
    %65 = tpu.matmul %62, %64, %cst_49 {dimension_numbers = #tpu.dot_dimension_numbers<[1], [0], [0], [1], [0, 0, 1, 1], [], []>} : vector<128x16xbf16>, vector<16x128xbf16>, vector<128x128xf32> -> vector<128x128xf32>
    %66 = arith.addf %59, %65 : vector<128x128xf32>
    %c0_50 = arith.constant 0 : index
    %c2_51 = arith.constant 2 : index
    %c0_52 = arith.constant 0 : index
    %c0_53 = arith.constant 0 : index
    %67 = vector.load %arg3[%c0_50, %c2_51, %c0_52, %c0_53] : memref<2x10x10x16xf32, #tpu.memory_space<vmem>>, vector<2x8x8x16xf32>
    %68 = vector.shape_cast %67 : vector<2x8x8x16xf32> to vector<128x16xf32>
    %69 = arith.truncf %68 : vector<128x16xf32> to vector<128x16xbf16>
    %c6 = arith.constant 6 : index
    %c0_54 = arith.constant 0 : index
    %c0_55 = arith.constant 0 : index
    %70 = vector.load %arg4[%c6, %c0_54, %c0_55] : memref<9x16x128xbf16, #tpu.memory_space<vmem>>, vector<1x16x128xbf16>
    %71 = vector.shape_cast %70 : vector<1x16x128xbf16> to vector<16x128xbf16>
    %cst_56 = arith.constant dense<0.000000e+00> : vector<128x128xf32>
    %72 = tpu.matmul %69, %71, %cst_56 {dimension_numbers = #tpu.dot_dimension_numbers<[1], [0], [0], [1], [0, 0, 1, 1], [], []>} : vector<128x16xbf16>, vector<16x128xbf16>, vector<128x128xf32> -> vector<128x128xf32>
    %73 = arith.addf %66, %72 : vector<128x128xf32>
    %c0_57 = arith.constant 0 : index
    %c2_58 = arith.constant 2 : index
    %c1_59 = arith.constant 1 : index
    %c0_60 = arith.constant 0 : index
    %74 = vector.load %arg3[%c0_57, %c2_58, %c1_59, %c0_60] : memref<2x10x10x16xf32, #tpu.memory_space<vmem>>, vector<2x8x8x16xf32>
    %75 = vector.shape_cast %74 : vector<2x8x8x16xf32> to vector<128x16xf32>
    %76 = arith.truncf %75 : vector<128x16xf32> to vector<128x16xbf16>
    %c7 = arith.constant 7 : index
    %c0_61 = arith.constant 0 : index
    %c0_62 = arith.constant 0 : index
    %77 = vector.load %arg4[%c7, %c0_61, %c0_62] : memref<9x16x128xbf16, #tpu.memory_space<vmem>>, vector<1x16x128xbf16>
    %78 = vector.shape_cast %77 : vector<1x16x128xbf16> to vector<16x128xbf16>
    %cst_63 = arith.constant dense<0.000000e+00> : vector<128x128xf32>
    %79 = tpu.matmul %76, %78, %cst_63 {dimension_numbers = #tpu.dot_dimension_numbers<[1], [0], [0], [1], [0, 0, 1, 1], [], []>} : vector<128x16xbf16>, vector<16x128xbf16>, vector<128x128xf32> -> vector<128x128xf32>
    %80 = arith.addf %73, %79 : vector<128x128xf32>
    %c0_64 = arith.constant 0 : index
    %c2_65 = arith.constant 2 : index
    %c2_66 = arith.constant 2 : index
    %c0_67 = arith.constant 0 : index
    %81 = vector.load %arg3[%c0_64, %c2_65, %c2_66, %c0_67] : memref<2x10x10x16xf32, #tpu.memory_space<vmem>>, vector<2x8x8x16xf32>
    %82 = vector.shape_cast %81 : vector<2x8x8x16xf32> to vector<128x16xf32>
    %83 = arith.truncf %82 : vector<128x16xf32> to vector<128x16xbf16>
    %c8 = arith.constant 8 : index
    %c0_68 = arith.constant 0 : index
    %c0_69 = arith.constant 0 : index
    %84 = vector.load %arg4[%c8, %c0_68, %c0_69] : memref<9x16x128xbf16, #tpu.memory_space<vmem>>, vector<1x16x128xbf16>
    %85 = vector.shape_cast %84 : vector<1x16x128xbf16> to vector<16x128xbf16>
    %cst_70 = arith.constant dense<0.000000e+00> : vector<128x128xf32>
    %86 = tpu.matmul %83, %85, %cst_70 {dimension_numbers = #tpu.dot_dimension_numbers<[1], [0], [0], [1], [0, 0, 1, 1], [], []>} : vector<128x16xbf16>, vector<16x128xbf16>, vector<128x128xf32> -> vector<128x128xf32>
    %87 = arith.addf %80, %86 : vector<128x128xf32>
    %88 = arith.negf %87 : vector<128x128xf32>
    %89 = math.exp %88 : vector<128x128xf32>
    %cst_71 = arith.constant 1.000000e+00 : f32
    %90 = vector.broadcast %cst_71 : f32 to vector<128x128xf32>
    %91 = arith.addf %90, %89 : vector<128x128xf32>
    %92 = arith.divf %90, %91 : vector<128x128xf32>
    %c0_72 = arith.constant 0 : index
    %c0_73 = arith.constant 0 : index
    %93 = vector.load %arg11[%c0_72, %c0_73] : memref<128x128xf32, #tpu.memory_space<vmem>>, vector<128x128xf32>
    tpu.vector_store %arg11[%c0_72, %c0_73], %92 {strides = array<i32>} : memref<128x128xf32, #tpu.memory_space<vmem>>, vector<128x128xf32>,
    %c0_74 = arith.constant 0 : index
    %c0_75 = arith.constant 0 : index
    %94 = vector.load %arg5[%c0_74, %c0_75] : memref<54x432xbf16, #tpu.memory_space<vmem>>, vector<54x432xbf16>
    %c0_76 = arith.constant 0 : index
    %c0_77 = arith.constant 0 : index
    %95 = vector.load %arg6[%c0_76, %c0_77] : memref<432x128xbf16, #tpu.memory_space<vmem>>, vector<432x128xbf16>
    %cst_78 = arith.constant dense<0.000000e+00> : vector<54x128xf32>
    %96 = tpu.matmul %94, %95, %cst_78 {dimension_numbers = #tpu.dot_dimension_numbers<[1], [0], [0], [1], [0, 0, 1, 1], [], []>} : vector<54x432xbf16>, vector<432x128xbf16>, vector<54x128xf32> -> vector<54x128xf32>
    %cst_79 = arith.constant 0.000000e+00 : f32
    %97 = vector.broadcast %cst_79 : f32 to vector<54x128xf32>
    %98 = arith.maximumf %96, %97 : vector<54x128xf32>
    %c0_80 = arith.constant 0 : index
    %c0_81 = arith.constant 0 : index
    %99 = vector.load %arg12[%c0_80, %c0_81] : memref<54x128xf32, #tpu.memory_space<vmem>>, vector<54x128xf32>
    tpu.vector_store %arg12[%c0_80, %c0_81], %98 {strides = array<i32>} : memref<54x128xf32, #tpu.memory_space<vmem>>, vector<54x128xf32>,
    %c0_82 = arith.constant 0 : index
    %c0_83 = arith.constant 0 : index
    %100 = vector.load %arg7[%c0_82, %c0_83] : memref<72x64xbf16, #tpu.memory_space<vmem>>, vector<72x64xbf16>
    %c0_84 = arith.constant 0 : index
    %c0_85 = arith.constant 0 : index
    %101 = vector.load %arg8[%c0_84, %c0_85] : memref<64x128xbf16, #tpu.memory_space<vmem>>, vector<64x128xbf16>
    %cst_86 = arith.constant dense<0.000000e+00> : vector<72x128xf32>
    %102 = tpu.matmul %100, %101, %cst_86 {dimension_numbers = #tpu.dot_dimension_numbers<[1], [0], [0], [1], [0, 0, 1, 1], [], []>} : vector<72x64xbf16>, vector<64x128xbf16>, vector<72x128xf32> -> vector<72x128xf32>
    %c0_87 = arith.constant 0 : index
    %c0_88 = arith.constant 0 : index
    %103 = vector.load %arg9[%c0_87, %c0_88] : memref<1x128xf32, #tpu.memory_space<vmem>>, vector<1x128xf32>
    %104 = vector.broadcast %103 : vector<1x128xf32> to vector<72x128xf32>
    %105 = arith.addf %102, %104 : vector<72x128xf32>
    %106 = math.tanh %105 : vector<72x128xf32>
    %107 = math.tanh %106 : vector<72x128xf32>
    %c0_89 = arith.constant 0 : index
    %c0_90 = arith.constant 0 : index
    %108 = vector.load %arg13[%c0_89, %c0_90] : memref<72x128xf32, #tpu.memory_space<vmem>>, vector<72x128xf32>
    tpu.vector_store %arg13[%c0_89, %c0_90], %107 {strides = array<i32>} : memref<72x128xf32, #tpu.memory_space<vmem>>, vector<72x128xf32>,
    return
  }
}

module attributes {stable_mosaic.version = 11 : i64} {
  func.func @_fused_kernel(%arg0: memref<20x2xf32, #tpu.memory_space<vmem>>, %arg1: memref<3x256xf32, #tpu.memory_space<vmem>>, %arg2: memref<1x256xf32, #tpu.memory_space<vmem>>, %arg3: memref<128x144xbf16, #tpu.memory_space<vmem>>, %arg4: memref<144x128xbf16, #tpu.memory_space<vmem>>, %arg5: memref<54x432xbf16, #tpu.memory_space<vmem>>, %arg6: memref<432x128xbf16, #tpu.memory_space<vmem>>, %arg7: memref<72x64xbf16, #tpu.memory_space<vmem>>, %arg8: memref<64x128xbf16, #tpu.memory_space<vmem>>, %arg9: memref<1x128xf32, #tpu.memory_space<vmem>>, %arg10: memref<19x256xf32, #tpu.memory_space<vmem>>, %arg11: memref<128x128xf32, #tpu.memory_space<vmem>>, %arg12: memref<54x128xf32, #tpu.memory_space<vmem>>, %arg13: memref<72x128xf32, #tpu.memory_space<vmem>>) attributes {dimension_semantics = [], scalar_prefetch = 0 : i64, scratch_operands = 0 : i64, tpu.core_type = #tpu.core_type<tc>} {
    %c0 = arith.constant 0 : index
    %c0_0 = arith.constant 0 : index
    %0 = vector.load %arg0[%c0, %c0_0] : memref<20x2xf32, #tpu.memory_space<vmem>>, vector<20x2xf32>
    %c0_1 = arith.constant 0 : index
    %c0_2 = arith.constant 0 : index
    %1 = vector.load %arg1[%c0_1, %c0_2] : memref<3x256xf32, #tpu.memory_space<vmem>>, vector<3x256xf32>
    %2 = vector.extract_strided_slice %0 {offsets = [0, 0], sizes = [19, 1], strides = [1, 1]} : vector<20x2xf32> to vector<19x1xf32>
    %3 = vector.extract_strided_slice %1 {offsets = [0, 0], sizes = [1, 256], strides = [1, 1]} : vector<3x256xf32> to vector<1x256xf32>
    %4 = vector.broadcast %2 : vector<19x1xf32> to vector<19x256xf32>
    %5 = vector.broadcast %3 : vector<1x256xf32> to vector<19x256xf32>
    %6 = arith.mulf %4, %5 : vector<19x256xf32>
    %7 = vector.extract_strided_slice %0 {offsets = [0, 1], sizes = [19, 1], strides = [1, 1]} : vector<20x2xf32> to vector<19x1xf32>
    %8 = vector.extract_strided_slice %1 {offsets = [1, 0], sizes = [1, 256], strides = [1, 1]} : vector<3x256xf32> to vector<1x256xf32>
    %9 = vector.broadcast %7 : vector<19x1xf32> to vector<19x256xf32>
    %10 = vector.broadcast %8 : vector<1x256xf32> to vector<19x256xf32>
    %11 = arith.mulf %9, %10 : vector<19x256xf32>
    %12 = arith.addf %6, %11 : vector<19x256xf32>
    %13 = vector.extract_strided_slice %0 {offsets = [1, 0], sizes = [19, 1], strides = [1, 1]} : vector<20x2xf32> to vector<19x1xf32>
    %14 = vector.extract_strided_slice %1 {offsets = [2, 0], sizes = [1, 256], strides = [1, 1]} : vector<3x256xf32> to vector<1x256xf32>
    %15 = vector.broadcast %13 : vector<19x1xf32> to vector<19x256xf32>
    %16 = vector.broadcast %14 : vector<1x256xf32> to vector<19x256xf32>
    %17 = arith.mulf %15, %16 : vector<19x256xf32>
    %18 = arith.addf %12, %17 : vector<19x256xf32>
    %c0_3 = arith.constant 0 : index
    %c0_4 = arith.constant 0 : index
    %19 = vector.load %arg2[%c0_3, %c0_4] : memref<1x256xf32, #tpu.memory_space<vmem>>, vector<1x256xf32>
    %20 = vector.broadcast %19 : vector<1x256xf32> to vector<19x256xf32>
    %21 = arith.addf %18, %20 : vector<19x256xf32>
    %22 = math.tanh %21 : vector<19x256xf32>
    %c0_5 = arith.constant 0 : index
    %c0_6 = arith.constant 0 : index
    %23 = vector.load %arg10[%c0_5, %c0_6] : memref<19x256xf32, #tpu.memory_space<vmem>>, vector<19x256xf32>
    tpu.vector_store %arg10[%c0_5, %c0_6], %22 {strides = array<i32>} : memref<19x256xf32, #tpu.memory_space<vmem>>, vector<19x256xf32>,
    %c0_7 = arith.constant 0 : index
    %c0_8 = arith.constant 0 : index
    %24 = vector.load %arg3[%c0_7, %c0_8] : memref<128x144xbf16, #tpu.memory_space<vmem>>, vector<128x144xbf16>
    %c0_9 = arith.constant 0 : index
    %c0_10 = arith.constant 0 : index
    %25 = vector.load %arg4[%c0_9, %c0_10] : memref<144x128xbf16, #tpu.memory_space<vmem>>, vector<144x128xbf16>
    %cst = arith.constant dense<0.000000e+00> : vector<128x128xf32>
    %26 = tpu.matmul %24, %25, %cst {dimension_numbers = #tpu.dot_dimension_numbers<[1], [0], [0], [1], [0, 0, 1, 1], [], []>} : vector<128x144xbf16>, vector<144x128xbf16>, vector<128x128xf32> -> vector<128x128xf32>
    %27 = arith.negf %26 : vector<128x128xf32>
    %28 = math.exp %27 : vector<128x128xf32>
    %cst_11 = arith.constant 1.000000e+00 : f32
    %29 = vector.broadcast %cst_11 : f32 to vector<128x128xf32>
    %30 = arith.addf %29, %28 : vector<128x128xf32>
    %31 = arith.divf %29, %30 : vector<128x128xf32>
    %c0_12 = arith.constant 0 : index
    %c0_13 = arith.constant 0 : index
    %32 = vector.load %arg11[%c0_12, %c0_13] : memref<128x128xf32, #tpu.memory_space<vmem>>, vector<128x128xf32>
    tpu.vector_store %arg11[%c0_12, %c0_13], %31 {strides = array<i32>} : memref<128x128xf32, #tpu.memory_space<vmem>>, vector<128x128xf32>,
    %c0_14 = arith.constant 0 : index
    %c0_15 = arith.constant 0 : index
    %33 = vector.load %arg5[%c0_14, %c0_15] : memref<54x432xbf16, #tpu.memory_space<vmem>>, vector<54x432xbf16>
    %c0_16 = arith.constant 0 : index
    %c0_17 = arith.constant 0 : index
    %34 = vector.load %arg6[%c0_16, %c0_17] : memref<432x128xbf16, #tpu.memory_space<vmem>>, vector<432x128xbf16>
    %cst_18 = arith.constant dense<0.000000e+00> : vector<54x128xf32>
    %35 = tpu.matmul %33, %34, %cst_18 {dimension_numbers = #tpu.dot_dimension_numbers<[1], [0], [0], [1], [0, 0, 1, 1], [], []>} : vector<54x432xbf16>, vector<432x128xbf16>, vector<54x128xf32> -> vector<54x128xf32>
    %cst_19 = arith.constant 0.000000e+00 : f32
    %36 = vector.broadcast %cst_19 : f32 to vector<54x128xf32>
    %37 = arith.maximumf %35, %36 : vector<54x128xf32>
    %c0_20 = arith.constant 0 : index
    %c0_21 = arith.constant 0 : index
    %38 = vector.load %arg12[%c0_20, %c0_21] : memref<54x128xf32, #tpu.memory_space<vmem>>, vector<54x128xf32>
    tpu.vector_store %arg12[%c0_20, %c0_21], %37 {strides = array<i32>} : memref<54x128xf32, #tpu.memory_space<vmem>>, vector<54x128xf32>,
    %c0_22 = arith.constant 0 : index
    %c0_23 = arith.constant 0 : index
    %39 = vector.load %arg7[%c0_22, %c0_23] : memref<72x64xbf16, #tpu.memory_space<vmem>>, vector<72x64xbf16>
    %c0_24 = arith.constant 0 : index
    %c0_25 = arith.constant 0 : index
    %40 = vector.load %arg8[%c0_24, %c0_25] : memref<64x128xbf16, #tpu.memory_space<vmem>>, vector<64x128xbf16>
    %cst_26 = arith.constant dense<0.000000e+00> : vector<72x128xf32>
    %41 = tpu.matmul %39, %40, %cst_26 {dimension_numbers = #tpu.dot_dimension_numbers<[1], [0], [0], [1], [0, 0, 1, 1], [], []>} : vector<72x64xbf16>, vector<64x128xbf16>, vector<72x128xf32> -> vector<72x128xf32>
    %c0_27 = arith.constant 0 : index
    %c0_28 = arith.constant 0 : index
    %42 = vector.load %arg9[%c0_27, %c0_28] : memref<1x128xf32, #tpu.memory_space<vmem>>, vector<1x128xf32>
    %43 = vector.broadcast %42 : vector<1x128xf32> to vector<72x128xf32>
    %44 = arith.addf %41, %43 : vector<72x128xf32>
    %45 = math.tanh %44 : vector<72x128xf32>
    %46 = math.tanh %45 : vector<72x128xf32>
    %c0_29 = arith.constant 0 : index
    %c0_30 = arith.constant 0 : index
    %47 = vector.load %arg13[%c0_29, %c0_30] : memref<72x128xf32, #tpu.memory_space<vmem>>, vector<72x128xf32>
    tpu.vector_store %arg13[%c0_29, %c0_30], %46 {strides = array<i32>} : memref<72x128xf32, #tpu.memory_space<vmem>>, vector<72x128xf32>,
    return
  }
}

</mosaic_0001>

<llo_original>
// kernel: model_tanh_forward.1
$region0: #{model_tanh_forward.1}
  #allocation0 [shape = 'u32[]', space=smem, size = 0x4, offset = 0x4, fixed_abs, tag = 'smem constant byte address 0x4 - core index']
  #allocation1 [shape = 'u32[72,128]{1,0:T(1,128)}', space=vmem, size = 0x9000, scoped, tag = 'internal scratch']
  %s0 = inlined_call_operand.vmem [shape: f32[20,2], index: 0, kind: input, shape index: {}]
  %s1 = inlined_call_operand.vmem [shape: f32[3,256], index: 1, kind: input, shape index: {}]
  %s2 = inlined_call_operand.vmem [shape: f32[1,256], index: 2, kind: input, shape index: {}]
  %s3 = inlined_call_operand.vmem [shape: f32[2,10,10,16], index: 3, kind: input, shape index: {}]
  %s4 = inlined_call_operand.vmem [shape: bf16[9,16,128], index: 4, kind: input, shape index: {}]
  %s5 = inlined_call_operand.vmem [shape: bf16[54,432], index: 5, kind: input, shape index: {}]
  %s6 = inlined_call_operand.vmem [shape: bf16[432,128], index: 6, kind: input, shape index: {}]
  %s7 = inlined_call_operand.vmem [shape: bf16[72,64], index: 7, kind: input, shape index: {}]
  %s8 = inlined_call_operand.vmem [shape: bf16[64,128], index: 8, kind: input, shape index: {}]
  %s9 = inlined_call_operand.vmem [shape: f32[1,128], index: 9, kind: input, shape index: {}]
  %s10 = inlined_call_operand.vmem [shape: f32[19,256], index: 10, kind: output, shape index: {0}]
  %s11 = inlined_call_operand.hbm [shape: f32[128,128], index: 11, kind: output, shape index: {1}]
  %s12 = inlined_call_operand.vmem [shape: f32[54,128], index: 12, kind: output, shape index: {2}]
  %s13 = inlined_call_operand.vmem [shape: f32[72,128], index: 13, kind: output, shape index: {3}]
  %14 = xla_tuple %s10, %s11, %s12, %s13
  %s15 = sld [smem:[#allocation0]]
  $region74: #{model_tanh_forward.1} parent=0
    _
  %s17 = ssub.s32 1, %s15
  %s18 = scalar_select 0, %s17, %s15
  $region1: #{model_tanh_forward.1} parent=0
    #allocation2 [shape = 'u8[65536]{0}', space=vmem, size = 0x10000, scoped, tag = 'output window, operand 1, single buffered']
    #allocation3 [shape = 's32[1]{0}', space=sflag, size = 0x4, scoped, tag = 'scoped memory for model_tanh_forward.1']
    %19 = vsyncpa [#allocation3], 0
    // Predicated region
    $region2: #{model_tanh_forward.1} parent=1 // pred_check
      _
    $region3: #{model_tanh_forward.1} parent=1 // pred_check_branch
      %21 = sbr.rel (0) target = $region5
    $region4: #{model_tanh_forward.1} parent=1 // pred_region
      _
    $region5: #{model_tanh_forward.1} parent=1 // pred_fallthru
      _
    // Predicated region
    $region6: #{model_tanh_forward.1} parent=1 // pred_check
      _
    $region7: #{model_tanh_forward.1} parent=1 // pred_check_branch
      %23 = sbr.rel (0) target = $region9
    $region8: #{model_tanh_forward.1} parent=1 // pred_region
      _
    $region9: #{model_tanh_forward.1} parent=1 // pred_fallthru
      _
    // Predicated region
    $region10: #{model_tanh_forward.1} parent=1 // pred_check
      _
    $region11: #{model_tanh_forward.1} parent=1 // pred_check_branch
      %25 = sbr.rel (0) target = $region13
    $region12: #{model_tanh_forward.1} parent=1 // pred_region
      _
    $region13: #{model_tanh_forward.1} parent=1 // pred_fallthru
      _
    // Predicated region
    $region14: #{model_tanh_forward.1} parent=1 // pred_check
      _
    $region15: #{model_tanh_forward.1} parent=1 // pred_check_branch
      %27 = sbr.rel (0) target = $region17
    $region16: #{model_tanh_forward.1} parent=1 // pred_region
      _
    $region17: #{model_tanh_forward.1} parent=1 // pred_fallthru
      _
    // Predicated region
    $region18: #{model_tanh_forward.1} parent=1 // pred_check
      _
    $region19: #{model_tanh_forward.1} parent=1 // pred_check_branch
      %29 = sbr.rel (0) target = $region21
    $region20: #{model_tanh_forward.1} parent=1 // pred_region
      _
    $region21: #{model_tanh_forward.1} parent=1 // pred_fallthru
      _
    // Predicated region
    $region22: #{model_tanh_forward.1} parent=1 // pred_check
      _
    $region23: #{model_tanh_forward.1} parent=1 // pred_check_branch
      %31 = sbr.rel (0) target = $region25
    $region24: #{model_tanh_forward.1} parent=1 // pred_region
      _
    $region25: #{model_tanh_forward.1} parent=1 // pred_fallthru
      _
    // Predicated region
    $region26: #{model_tanh_forward.1} parent=1 // pred_check
      _
    $region27: #{model_tanh_forward.1} parent=1 // pred_check_branch
      %33 = sbr.rel (0) target = $region29
    $region28: #{model_tanh_forward.1} parent=1 // pred_region
      _
    $region29: #{model_tanh_forward.1} parent=1 // pred_fallthru
      _
    // Predicated region
    $region30: #{model_tanh_forward.1} parent=1 // pred_check
      _
    $region31: #{model_tanh_forward.1} parent=1 // pred_check_branch
      %35 = sbr.rel (0) target = $region33
    $region32: #{model_tanh_forward.1} parent=1 // pred_region
      _
    $region33: #{model_tanh_forward.1} parent=1 // pred_fallthru
      _
    // Predicated region
    $region34: #{model_tanh_forward.1} parent=1 // pred_check
      _
    $region35: #{model_tanh_forward.1} parent=1 // pred_check_branch
      %37 = sbr.rel (0) target = $region37
    $region36: #{model_tanh_forward.1} parent=1 // pred_region
      _
    $region37: #{model_tanh_forward.1} parent=1 // pred_fallthru
      _
    // Predicated region
    $region38: #{model_tanh_forward.1} parent=1 // pred_check
      _
    $region39: #{model_tanh_forward.1} parent=1 // pred_check_branch
      %39 = sbr.rel (0) target = $region41
    $region40: #{model_tanh_forward.1} parent=1 // pred_region
      _
    $region41: #{model_tanh_forward.1} parent=1 // pred_fallthru
      _
    %v41 = vld [vmem:[%s0] sm:$0xff]
    %v42 = vld [vmem:[%s0 + $0x8] sm:$0xff]
    %v43 = vld [vmem:[%s0 + $0x10] sm:$0xf]
    %v44 = vld [vmem:[%s1] sm:$0x77]
    %46 = vset.pattern.permute.xlu0 0
    %47 = vperm.xlu0 %46, %v41
    %v48 = vpop.permute.xlu0 %47
    %51 = vset.pattern.permute.xlu0 0
    %52 = vperm.xlu0 %51, %v42
    %v53 = vpop.permute.xlu0 %52
    %56 = vset.pattern.permute.xlu0 0
    %57 = vperm.xlu0 %56, %v43
    %v58 = vpop.permute.xlu0 %57
    %v61 = vperm.slane %v44, 0
    %v62 = vperm.slane %v44, 4
    %v65 = vperm.slane %v61, 0
    %v66 = vperm.slane %v62, 0
    %v67 = vmul.f32 %v48, %v65
    %v68 = vmul.f32 %v48, %v66
    %v69 = vmul.f32 %v53, %v65
    %v70 = vmul.f32 %v53, %v66
    %v71 = vmul.f32 %v58, %v65
    %v72 = vmul.f32 %v58, %v66
    %73 = vset.pattern.permute.xlu0 1
    %74 = vperm.xlu0 %73, %v41
    %v75 = vpop.permute.xlu0 %74
    %77 = vset.pattern.permute.xlu0 1
    %78 = vperm.xlu0 %77, %v42
    %v79 = vpop.permute.xlu0 %78
    %81 = vset.pattern.permute.xlu0 1
    %82 = vperm.xlu0 %81, %v43
    %v83 = vpop.permute.xlu0 %82
    %v85 = vperm.slane %v44, 1
    %v86 = vperm.slane %v44, 5
    %v89 = vperm.slane %v85, 1
    %v90 = vperm.slane %v86, 1
    %v91 = vmul.f32 %v75, %v89
    %v92 = vmul.f32 %v75, %v90
    %v93 = vmul.f32 %v79, %v89
    %v94 = vmul.f32 %v79, %v90
    %v95 = vmul.f32 %v83, %v89
    %v96 = vmul.f32 %v83, %v90
    %v97 = vadd.f32 %v67, %v91
    %v98 = vadd.f32 %v68, %v92
    %v99 = vadd.f32 %v69, %v93
    %v100 = vadd.f32 %v70, %v94
    %v101 = vadd.f32 %v71, %v95
    %v102 = vadd.f32 %v72, %v96
    %v103 = vperm.slane %v44, 2
    %v104 = vperm.slane %v44, 6
    %v107 = vperm.slane %v103, 2
    %v108 = vperm.slane %v104, 2
    %v109 = vmul.f32 %v48, %v107
    %v110 = vmul.f32 %v48, %v108
    %v111 = vmul.f32 %v53, %v107
    %v112 = vmul.f32 %v53, %v108
    %v113 = vmul.f32 %v58, %v107
    %v114 = vmul.f32 %v58, %v108
    %vm121 = vcmask 1046528
    %v122 = vrot.slane %v109, 1
    %v123 = vrot.slane %v111, 1
    %v124 = vsel %vm121, %v122, %v123
    %v125 = vrot.slane %v110, 1
    %v126 = vrot.slane %v112, 1
    %v127 = vsel %vm121, %v125, %v126
    %v128 = vrot.slane %v113, 1
    %v129 = vsel %vm121, %v123, %v128
    %v130 = vrot.slane %v114, 1
    %v131 = vsel %vm121, %v126, %v130
    %v138 = vadd.f32 %v97, %v124
    %v139 = vadd.f32 %v98, %v127
    %v140 = vadd.f32 %v99, %v129
    %v141 = vadd.f32 %v100, %v131
    %v142 = vadd.f32 %v101, %v128
    %v143 = vadd.f32 %v102, %v130
    %v144 = vld [vmem:[%s2] sm:$0x3]
    %v146 = vperm.slane %v144, 0
    %v147 = vperm.slane %v144, 1
    %v150 = vadd.f32 %v138, %v146
    %v151 = vadd.f32 %v139, %v147
    %v152 = vadd.f32 %v140, %v146
    %v153 = vadd.f32 %v141, %v147
    %v154 = vadd.f32 %v142, %v146
    %v155 = vadd.f32 %v143, %v147
    %v156 = vtanh.pop %v150
    %v157 = vtanh.pop %v151
    %v158 = vtanh.pop %v152
    %v159 = vtanh.pop %v153
    %v160 = vtanh.pop %v154
    %v161 = vtanh.pop %v155
    %162 = vst [vmem:[%s10] sm:$0xff] %v156
    %163 = vst [vmem:[%s10 + $0x8] sm:$0xff] %v157
    %164 = vst [vmem:[%s10 + $0x10] sm:$0xff] %v158
    %165 = vst [vmem:[%s10 + $0x18] sm:$0xff] %v159
    %166 = vst [vmem:[%s10 + $0x20] sm:$0x7] %v160
    %167 = vst [vmem:[%s10 + $0x28] sm:$0x7] %v161
    %v168 = vld [vmem:[%s3] sm:$0xff]
    %v169 = vld [vmem:[%s3 + $0x10] sm:$0xff]
    %v170 = vld [vmem:[%s3 + $0x20] sm:$0xff]
    %v171 = vld [vmem:[%s3 + $0x30] sm:$0xff]
    %v172 = vld [vmem:[%s3 + $0x40] sm:$0xff]
    %v173 = vld [vmem:[%s3 + $0x50] sm:$0xff]
    %v174 = vld [vmem:[%s3 + $0x60] sm:$0xff]
    %v175 = vld [vmem:[%s3 + $0x70] sm:$0xff]
    %v176 = vld [vmem:[%s3 + $0xa0] sm:$0xff]
    %v177 = vld [vmem:[%s3 + $0xb0] sm:$0xff]
    %v178 = vld [vmem:[%s3 + $0xc0] sm:$0xff]
    %v179 = vld [vmem:[%s3 + $0xd0] sm:$0xff]
    %v180 = vld [vmem:[%s3 + $0xe0] sm:$0xff]
    %v181 = vld [vmem:[%s3 + $0xf0] sm:$0xff]
    %v182 = vld [vmem:[%s3 + $0x100] sm:$0xff]
    %v183 = vld [vmem:[%s3 + $0x110] sm:$0xff]
    %v184 = vpack.c.bf16 %v169, %v168
    %v185 = vpack.c.bf16 %v171, %v170
    %v186 = vpack.c.bf16 %v173, %v172
    %v187 = vpack.c.bf16 %v175, %v174
    %v188 = vpack.c.bf16 %v177, %v176
    %v189 = vpack.c.bf16 %v179, %v178
    %v190 = vpack.c.bf16 %v181, %v180
    %v191 = vpack.c.bf16 %v183, %v182
    %v192 = vld [vmem:[%s4] sm:$0xf]
    %v193 = vld [vmem:[%s4 + $0x4] sm:$0xf]
    %v194 = vld [vmem:[%s3 + $0x1] sm:$0xff]
    %v195 = vld [vmem:[%s3 + $0x11] sm:$0xff]
    %v196 = vld [vmem:[%s3 + $0x21] sm:$0xff]
    %v197 = vld [vmem:[%s3 + $0x31] sm:$0xff]
    %v198 = vld [vmem:[%s3 + $0x41] sm:$0xff]
    %v199 = vld [vmem:[%s3 + $0x51] sm:$0xff]
    %v200 = vld [vmem:[%s3 + $0x61] sm:$0xff]
    %v201 = vld [vmem:[%s3 + $0x71] sm:$0xff]
    %v202 = vld [vmem:[%s3 + $0xa1] sm:$0xff]
    %v203 = vld [vmem:[%s3 + $0xb1] sm:$0xff]
    %v204 = vld [vmem:[%s3 + $0xc1] sm:$0xff]
    %v205 = vld [vmem:[%s3 + $0xd1] sm:$0xff]
    %v206 = vld [vmem:[%s3 + $0xe1] sm:$0xff]
    %v207 = vld [vmem:[%s3 + $0xf1] sm:$0xff]
    %v208 = vld [vmem:[%s3 + $0x101] sm:$0xff]
    %v209 = vld [vmem:[%s3 + $0x111] sm:$0xff]
    %v210 = vpack.c.bf16 %v195, %v194
    %v211 = vpack.c.bf16 %v197, %v196
    %v212 = vpack.c.bf16 %v199, %v198
    %v213 = vpack.c.bf16 %v201, %v200
    %v214 = vpack.c.bf16 %v203, %v202
    %v215 = vpack.c.bf16 %v205, %v204
    %v216 = vpack.c.bf16 %v207, %v206
    %v217 = vpack.c.bf16 %v209, %v208
    %s218 = scalar_lea.vmem %s4, 8
    %v219 = vld [vmem:[%s218] sm:$0xf]
    %v220 = vld [vmem:[%s218 + $0x4] sm:$0xf]
    %v223 = vunpack.c.l.b16 %v219
    %v224 = vunpack.c.l.b16 %v220
    %v225 = vpack.c.b16 %v224, %v223
    %vm227 = vcmask 130048
    %v229 = vsel %vm227, %v210, 0
    %v232 = vsel %vm227, %v211, 0
    %v235 = vsel %vm227, %v212, 0
    %v238 = vsel %vm227, %v213, 0
    %v241 = vsel %vm227, %v214, 0
    %v244 = vsel %vm227, %v215, 0
    %v247 = vsel %vm227, %v216, 0
    %v250 = vsel %vm227, %v217, 0
    %252 = vmatpush.bf16.msra.mxu0 0
    %253 = vmatpush.bf16.msra.mxu0 0
    %254 = vmatpush.bf16.msra.mxu0 0
    %255 = vmatpush.bf16.msra.mxu0 0
    %256 = vmatpush.bf16.msra.mxu0 0
    %257 = vmatpush.bf16.msra.mxu0 0
    %258 = vmatpush.bf16.msra.mxu0 0
    %259 = vmatpush.bf16.msra.mxu0 %v225
    %260 = vmatmul.bf16.gmra.mxu0 %v229
    %v261 = vpop.f32.mrf.mxu0
    %v262 = vadd.f32 0.0, %v261
    %v263 = vpop.f32.mrf.mxu0
    %v264 = vadd.f32 0.0, %v263
    %265 = vmatmul.bf16.gmra.mxu0 %v232
    %v266 = vpop.f32.mrf.mxu0
    %v267 = vadd.f32 0.0, %v266
    %v268 = vpop.f32.mrf.mxu0
    %v269 = vadd.f32 0.0, %v268
    %270 = vmatmul.bf16.gmra.mxu0 %v235
    %v271 = vpop.f32.mrf.mxu0
    %v272 = vadd.f32 0.0, %v271
    %v273 = vpop.f32.mrf.mxu0
    %v274 = vadd.f32 0.0, %v273
    %275 = vmatmul.bf16.gmra.mxu0 %v238
    %v276 = vpop.f32.mrf.mxu0
    %v277 = vadd.f32 0.0, %v276
    %v278 = vpop.f32.mrf.mxu0
    %v279 = vadd.f32 0.0, %v278
    %280 = vmatmul.bf16.gmra.mxu0 %v241
    %v281 = vpop.f32.mrf.mxu0
    %v282 = vadd.f32 0.0, %v281
    %v283 = vpop.f32.mrf.mxu0
    %v284 = vadd.f32 0.0, %v283
    %285 = vmatmul.bf16.gmra.mxu0 %v244
    %v286 = vpop.f32.mrf.mxu0
    %v287 = vadd.f32 0.0, %v286
    %v288 = vpop.f32.mrf.mxu0
    %v289 = vadd.f32 0.0, %v288
    %290 = vmatmul.bf16.gmra.mxu0 %v247
    %v291 = vpop.f32.mrf.mxu0
    %v292 = vadd.f32 0.0, %v291
    %v293 = vpop.f32.mrf.mxu0
    %v294 = vadd.f32 0.0, %v293
    %295 = vmatmul.bf16.gmra.mxu0 %v250
    %v296 = vpop.f32.mrf.mxu0
    %v297 = vadd.f32 0.0, %v296
    %v298 = vpop.f32.mrf.mxu0
    %v299 = vadd.f32 0.0, %v298
    %300 = vdwg.mxu0
    %v303 = vunpack.c.l.b16 %v192
    %v304 = vunpack.c.l.b16 %v193
    %v305 = vpack.c.b16 %v304, %v303
    %v308 = vsel %vm227, %v184, 0
    %v311 = vsel %vm227, %v185, 0
    %v314 = vsel %vm227, %v186, 0
    %v317 = vsel %vm227, %v187, 0
    %v320 = vsel %vm227, %v188, 0
    %v323 = vsel %vm227, %v189, 0
    %v326 = vsel %vm227, %v190, 0
    %v329 = vsel %vm227, %v191, 0
    %331 = vmatpush.bf16.msra.mxu0 0
    %332 = vmatpush.bf16.msra.mxu0 0
    %333 = vmatpush.bf16.msra.mxu0 0
    %334 = vmatpush.bf16.msra.mxu0 0
    %335 = vmatpush.bf16.msra.mxu0 0
    %336 = vmatpush.bf16.msra.mxu0 0
    %337 = vmatpush.bf16.msra.mxu0 0
    %338 = vmatpush.bf16.msra.mxu0 %v305
    %339 = vmatmul.bf16.gmra.mxu0 %v308
    %v340 = vpop.f32.mrf.mxu0
    %v341 = vadd.f32 %v262, %v340
    %v342 = vpop.f32.mrf.mxu0
    %v343 = vadd.f32 %v264, %v342
    %344 = vmatmul.bf16.gmra.mxu0 %v311
    %v345 = vpop.f32.mrf.mxu0
    %v346 = vadd.f32 %v267, %v345
    %v347 = vpop.f32.mrf.mxu0
    %v348 = vadd.f32 %v269, %v347
    %349 = vmatmul.bf16.gmra.mxu0 %v314
    %v350 = vpop.f32.mrf.mxu0
    %v351 = vadd.f32 %v272, %v350
    %v352 = vpop.f32.mrf.mxu0
    %v353 = vadd.f32 %v274, %v352
    %354 = vmatmul.bf16.gmra.mxu0 %v317
    %v355 = vpop.f32.mrf.mxu0
    %v356 = vadd.f32 %v277, %v355
    %v357 = vpop.f32.mrf.mxu0
    %v358 = vadd.f32 %v279, %v357
    %359 = vmatmul.bf16.gmra.mxu0 %v320
    %v360 = vpop.f32.mrf.mxu0
    %v361 = vadd.f32 %v282, %v360
    %v362 = vpop.f32.mrf.mxu0
    %v363 = vadd.f32 %v284, %v362
    %364 = vmatmul.bf16.gmra.mxu0 %v323
    %v365 = vpop.f32.mrf.mxu0
    %v366 = vadd.f32 %v287, %v365
    %v367 = vpop.f32.mrf.mxu0
    %v368 = vadd.f32 %v289, %v367
    %369 = vmatmul.bf16.gmra.mxu0 %v326
    %v370 = vpop.f32.mrf.mxu0
    %v371 = vadd.f32 %v292, %v370
    %v372 = vpop.f32.mrf.mxu0
    %v373 = vadd.f32 %v294, %v372
    %374 = vmatmul.bf16.gmra.mxu0 %v329
    %v375 = vpop.f32.mrf.mxu0
    %v376 = vadd.f32 %v297, %v375
    %v377 = vpop.f32.mrf.mxu0
    %v378 = vadd.f32 %v299, %v377
    %379 = vdwg.mxu0
    %v380 = vld [vmem:[%s3 + $0x2] sm:$0xff]
    %v381 = vld [vmem:[%s3 + $0x12] sm:$0xff]
    %v382 = vld [vmem:[%s3 + $0x22] sm:$0xff]
    %v383 = vld [vmem:[%s3 + $0x32] sm:$0xff]
    %v384 = vld [vmem:[%s3 + $0x42] sm:$0xff]
    %v385 = vld [vmem:[%s3 + $0x52] sm:$0xff]
    %v386 = vld [vmem:[%s3 + $0x62] sm:$0xff]
    %v387 = vld [vmem:[%s3 + $0x72] sm:$0xff]
    %v388 = vld [vmem:[%s3 + $0xa2] sm:$0xff]
    %v389 = vld [vmem:[%s3 + $0xb2] sm:$0xff]
    %v390 = vld [vmem:[%s3 + $0xc2] sm:$0xff]
    %v391 = vld [vmem:[%s3 + $0xd2] sm:$0xff]
    %v392 = vld [vmem:[%s3 + $0xe2] sm:$0xff]
    %v393 = vld [vmem:[%s3 + $0xf2] sm:$0xff]
    %v394 = vld [vmem:[%s3 + $0x102] sm:$0xff]
    %v395 = vld [vmem:[%s3 + $0x112] sm:$0xff]
    %v396 = vpack.c.bf16 %v381, %v380
    %v397 = vpack.c.bf16 %v383, %v382
    %v398 = vpack.c.bf16 %v385, %v384
    %v399 = vpack.c.bf16 %v387, %v386
    %v400 = vpack.c.bf16 %v389, %v388
    %v401 = vpack.c.bf16 %v391, %v390
    %v402 = vpack.c.bf16 %v393, %v392
    %v403 = vpack.c.bf16 %v395, %v394
    %s404 = scalar_lea.vmem %s4, 16
    %v405 = vld [vmem:[%s404] sm:$0xf]
    %v406 = vld [vmem:[%s404 + $0x4] sm:$0xf]
    %v409 = vunpack.c.l.b16 %v405
    %v410 = vunpack.c.l.b16 %v406
    %v411 = vpack.c.b16 %v410, %v409
    %v414 = vsel %vm227, %v396, 0
    %v417 = vsel %vm227, %v397, 0
    %v420 = vsel %vm227, %v398, 0
    %v423 = vsel %vm227, %v399, 0
    %v426 = vsel %vm227, %v400, 0
    %v429 = vsel %vm227, %v401, 0
    %v432 = vsel %vm227, %v402, 0
    %v435 = vsel %vm227, %v403, 0
    %437 = vmatpush.bf16.msra.mxu0 0
    %438 = vmatpush.bf16.msra.mxu0 0
    %439 = vmatpush.bf16.msra.mxu0 0
    %440 = vmatpush.bf16.msra.mxu0 0
    %441 = vmatpush.bf16.msra.mxu0 0
    %442 = vmatpush.bf16.msra.mxu0 0
    %443 = vmatpush.bf16.msra.mxu0 0
    %444 = vmatpush.bf16.msra.mxu0 %v411
    %445 = vmatmul.bf16.gmra.mxu0 %v414
    %v446 = vpop.f32.mrf.mxu0
    %v447 = vadd.f32 0.0, %v446
    %v448 = vpop.f32.mrf.mxu0
    %v449 = vadd.f32 0.0, %v448
    %450 = vmatmul.bf16.gmra.mxu0 %v417
    %v451 = vpop.f32.mrf.mxu0
    %v452 = vadd.f32 0.0, %v451
    %v453 = vpop.f32.mrf.mxu0
    %v454 = vadd.f32 0.0, %v453
    %455 = vmatmul.bf16.gmra.mxu0 %v420
    %v456 = vpop.f32.mrf.mxu0
    %v457 = vadd.f32 0.0, %v456
    %v458 = vpop.f32.mrf.mxu0
    %v459 = vadd.f32 0.0, %v458
    %460 = vmatmul.bf16.gmra.mxu0 %v423
    %v461 = vpop.f32.mrf.mxu0
    %v462 = vadd.f32 0.0, %v461
    %v463 = vpop.f32.mrf.mxu0
    %v464 = vadd.f32 0.0, %v463
    %465 = vmatmul.bf16.gmra.mxu0 %v426
    %v466 = vpop.f32.mrf.mxu0
    %v467 = vadd.f32 0.0, %v466
    %v468 = vpop.f32.mrf.mxu0
    %v469 = vadd.f32 0.0, %v468
    %470 = vmatmul.bf16.gmra.mxu0 %v429
    %v471 = vpop.f32.mrf.mxu0
    %v472 = vadd.f32 0.0, %v471
    %v473 = vpop.f32.mrf.mxu0
    %v474 = vadd.f32 0.0, %v473
    %475 = vmatmul.bf16.gmra.mxu0 %v432
    %v476 = vpop.f32.mrf.mxu0
    %v477 = vadd.f32 0.0, %v476
    %v478 = vpop.f32.mrf.mxu0
    %v479 = vadd.f32 0.0, %v478
    %480 = vmatmul.bf16.gmra.mxu0 %v435
    %v481 = vpop.f32.mrf.mxu0
    %v482 = vadd.f32 0.0, %v481
    %v483 = vpop.f32.mrf.mxu0
    %v484 = vadd.f32 0.0, %v483
    %485 = vdwg.mxu0
    %v486 = vadd.f32 %v341, %v447
    %v487 = vadd.f32 %v343, %v449
    %v488 = vadd.f32 %v346, %v452
    %v489 = vadd.f32 %v348, %v454
    %v490 = vadd.f32 %v351, %v457
    %v491 = vadd.f32 %v353, %v459
    %v492 = vadd.f32 %v356, %v462
    %v493 = vadd.f32 %v358, %v464
    %v494 = vadd.f32 %v361, %v467
    %v495 = vadd.f32 %v363, %v469
    %v496 = vadd.f32 %v366, %v472
    %v497 = vadd.f32 %v368, %v474
    %v498 = vadd.f32 %v371, %v477
    %v499 = vadd.f32 %v373, %v479
    %v500 = vadd.f32 %v376, %v482
    %v501 = vadd.f32 %v378, %v484
    %s502 = scalar_lea.vmem %s3, 16
    %v503 = vld [vmem:[%s502] sm:$0xff]
    %v504 = vld [vmem:[%s502 + $0x10] sm:$0xff]
    %v505 = vld [vmem:[%s502 + $0x20] sm:$0xff]
    %v506 = vld [vmem:[%s502 + $0x30] sm:$0xff]
    %v507 = vld [vmem:[%s502 + $0x40] sm:$0xff]
    %v508 = vld [vmem:[%s502 + $0x50] sm:$0xff]
    %v509 = vld [vmem:[%s502 + $0x60] sm:$0xff]
    %v510 = vld [vmem:[%s502 + $0x70] sm:$0xff]
    %v511 = vld [vmem:[%s502 + $0xa0] sm:$0xff]
    %v512 = vld [vmem:[%s502 + $0xb0] sm:$0xff]
    %v513 = vld [vmem:[%s502 + $0xc0] sm:$0xff]
    %v514 = vld [vmem:[%s502 + $0xd0] sm:$0xff]
    %v515 = vld [vmem:[%s502 + $0xe0] sm:$0xff]
    %v516 = vld [vmem:[%s502 + $0xf0] sm:$0xff]
    %v517 = vld [vmem:[%s502 + $0x100] sm:$0xff]
    %v518 = vld [vmem:[%s502 + $0x110] sm:$0xff]
    %v519 = vpack.c.bf16 %v504, %v503
    %v520 = vpack.c.bf16 %v506, %v505
    %v521 = vpack.c.bf16 %v508, %v507
    %v522 = vpack.c.bf16 %v510, %v509
    %v523 = vpack.c.bf16 %v512, %v511
    %v524 = vpack.c.bf16 %v514, %v513
    %v525 = vpack.c.bf16 %v516, %v515
    %v526 = vpack.c.bf16 %v518, %v517
    %s527 = scalar_lea.vmem %s4, 24
    %v528 = vld [vmem:[%s527] sm:$0xf]
    %v529 = vld [vmem:[%s527 + $0x4] sm:$0xf]
    %v532 = vunpack.c.l.b16 %v528
    %v533 = vunpack.c.l.b16 %v529
    %v534 = vpack.c.b16 %v533, %v532
    %v537 = vsel %vm227, %v519, 0
    %v540 = vsel %vm227, %v520, 0
    %v543 = vsel %vm227, %v521, 0
    %v546 = vsel %vm227, %v522, 0
    %v549 = vsel %vm227, %v523, 0
    %v552 = vsel %vm227, %v524, 0
    %v555 = vsel %vm227, %v525, 0
    %v558 = vsel %vm227, %v526, 0
    %560 = vmatpush.bf16.msra.mxu0 0
    %561 = vmatpush.bf16.msra.mxu0 0
    %562 = vmatpush.bf16.msra.mxu0 0
    %563 = vmatpush.bf16.msra.mxu0 0
    %564 = vmatpush.bf16.msra.mxu0 0
    %565 = vmatpush.bf16.msra.mxu0 0
    %566 = vmatpush.bf16.msra.mxu0 0
    %567 = vmatpush.bf16.msra.mxu0 %v534
    %568 = vmatmul.bf16.gmra.mxu0 %v537
    %v569 = vpop.f32.mrf.mxu0
    %v570 = vadd.f32 0.0, %v569
    %v571 = vpop.f32.mrf.mxu0
    %v572 = vadd.f32 0.0, %v571
    %573 = vmatmul.bf16.gmra.mxu0 %v540
    %v574 = vpop.f32.mrf.mxu0
    %v575 = vadd.f32 0.0, %v574
    %v576 = vpop.f32.mrf.mxu0
    %v577 = vadd.f32 0.0, %v576
    %578 = vmatmul.bf16.gmra.mxu0 %v543
    %v579 = vpop.f32.mrf.mxu0
    %v580 = vadd.f32 0.0, %v579
    %v581 = vpop.f32.mrf.mxu0
    %v582 = vadd.f32 0.0, %v581
    %583 = vmatmul.bf16.gmra.mxu0 %v546
    %v584 = vpop.f32.mrf.mxu0
    %v585 = vadd.f32 0.0, %v584
    %v586 = vpop.f32.mrf.mxu0
    %v587 = vadd.f32 0.0, %v586
    %588 = vmatmul.bf16.gmra.mxu0 %v549
    %v589 = vpop.f32.mrf.mxu0
    %v590 = vadd.f32 0.0, %v589
    %v591 = vpop.f32.mrf.mxu0
    %v592 = vadd.f32 0.0, %v591
    %593 = vmatmul.bf16.gmra.mxu0 %v552
    %v594 = vpop.f32.mrf.mxu0
    %v595 = vadd.f32 0.0, %v594
    %v596 = vpop.f32.mrf.mxu0
    %v597 = vadd.f32 0.0, %v596
    %598 = vmatmul.bf16.gmra.mxu0 %v555
    %v599 = vpop.f32.mrf.mxu0
    %v600 = vadd.f32 0.0, %v599
    %v601 = vpop.f32.mrf.mxu0
    %v602 = vadd.f32 0.0, %v601
    %603 = vmatmul.bf16.gmra.mxu0 %v558
    %v604 = vpop.f32.mrf.mxu0
    %v605 = vadd.f32 0.0, %v604
    %v606 = vpop.f32.mrf.mxu0
    %v607 = vadd.f32 0.0, %v606
    %608 = vdwg.mxu0
    %v609 = vadd.f32 %v486, %v570
    %v610 = vadd.f32 %v487, %v572
    %v611 = vadd.f32 %v488, %v575
    %v612 = vadd.f32 %v489, %v577
    %v613 = vadd.f32 %v490, %v580
    %v614 = vadd.f32 %v491, %v582
    %v615 = vadd.f32 %v492, %v585
    %v616 = vadd.f32 %v493, %v587
    %v617 = vadd.f32 %v494, %v590
    %v618 = vadd.f32 %v495, %v592
    %v619 = vadd.f32 %v496, %v595
    %v620 = vadd.f32 %v497, %v597
    %v621 = vadd.f32 %v498, %v600
    %v622 = vadd.f32 %v499, %v602
    %v623 = vadd.f32 %v500, %v605
    %v624 = vadd.f32 %v501, %v607
    %v625 = vld [vmem:[%s502 + $0x1] sm:$0xff]
    %v626 = vld [vmem:[%s502 + $0x11] sm:$0xff]
    %v627 = vld [vmem:[%s502 + $0x21] sm:$0xff]
    %v628 = vld [vmem:[%s502 + $0x31] sm:$0xff]
    %v629 = vld [vmem:[%s502 + $0x41] sm:$0xff]
    %v630 = vld [vmem:[%s502 + $0x51] sm:$0xff]
    %v631 = vld [vmem:[%s502 + $0x61] sm:$0xff]
    %v632 = vld [vmem:[%s502 + $0x71] sm:$0xff]
    %v633 = vld [vmem:[%s502 + $0xa1] sm:$0xff]
    %v634 = vld [vmem:[%s502 + $0xb1] sm:$0xff]
    %v635 = vld [vmem:[%s502 + $0xc1] sm:$0xff]
    %v636 = vld [vmem:[%s502 + $0xd1] sm:$0xff]
    %v637 = vld [vmem:[%s502 + $0xe1] sm:$0xff]
    %v638 = vld [vmem:[%s502 + $0xf1] sm:$0xff]
    %v639 = vld [vmem:[%s502 + $0x101] sm:$0xff]
    %v640 = vld [vmem:[%s502 + $0x111] sm:$0xff]
    %v641 = vpack.c.bf16 %v626, %v625
    %v642 = vpack.c.bf16 %v628, %v627
    %v643 = vpack.c.bf16 %v630, %v629
    %v644 = vpack.c.bf16 %v632, %v631
    %v645 = vpack.c.bf16 %v634, %v633
    %v646 = vpack.c.bf16 %v636, %v635
    %v647 = vpack.c.bf16 %v638, %v637
    %v648 = vpack.c.bf16 %v640, %v639
    %s649 = scalar_lea.vmem %s4, 32
    %v650 = vld [vmem:[%s649] sm:$0xf]
    %v651 = vld [vmem:[%s649 + $0x4] sm:$0xf]
    %v654 = vunpack.c.l.b16 %v650
    %v655 = vunpack.c.l.b16 %v651
    %v656 = vpack.c.b16 %v655, %v654
    %v659 = vsel %vm227, %v641, 0
    %v662 = vsel %vm227, %v642, 0
    %v665 = vsel %vm227, %v643, 0
    %v668 = vsel %vm227, %v644, 0
    %v671 = vsel %vm227, %v645, 0
    %v674 = vsel %vm227, %v646, 0
    %v677 = vsel %vm227, %v647, 0
    %v680 = vsel %vm227, %v648, 0
    %682 = vmatpush.bf16.msra.mxu0 0
    %683 = vmatpush.bf16.msra.mxu0 0
    %684 = vmatpush.bf16.msra.mxu0 0
    %685 = vmatpush.bf16.msra.mxu0 0
    %686 = vmatpush.bf16.msra.mxu0 0
    %687 = vmatpush.bf16.msra.mxu0 0
    %688 = vmatpush.bf16.msra.mxu0 0
    %689 = vmatpush.bf16.msra.mxu0 %v656
    %690 = vmatmul.bf16.gmra.mxu0 %v659
    %v691 = vpop.f32.mrf.mxu0
    %v692 = vadd.f32 0.0, %v691
    %v693 = vpop.f32.mrf.mxu0
    %v694 = vadd.f32 0.0, %v693
    %695 = vmatmul.bf16.gmra.mxu0 %v662
    %v696 = vpop.f32.mrf.mxu0
    %v697 = vadd.f32 0.0, %v696
    %v698 = vpop.f32.mrf.mxu0
    %v699 = vadd.f32 0.0, %v698
    %700 = vmatmul.bf16.gmra.mxu0 %v665
    %v701 = vpop.f32.mrf.mxu0
    %v702 = vadd.f32 0.0, %v701
    %v703 = vpop.f32.mrf.mxu0
    %v704 = vadd.f32 0.0, %v703
    %705 = vmatmul.bf16.gmra.mxu0 %v668
    %v706 = vpop.f32.mrf.mxu0
    %v707 = vadd.f32 0.0, %v706
    %v708 = vpop.f32.mrf.mxu0
    %v709 = vadd.f32 0.0, %v708
    %710 = vmatmul.bf16.gmra.mxu0 %v671
    %v711 = vpop.f32.mrf.mxu0
    %v712 = vadd.f32 0.0, %v711
    %v713 = vpop.f32.mrf.mxu0
    %v714 = vadd.f32 0.0, %v713
    %715 = vmatmul.bf16.gmra.mxu0 %v674
    %v716 = vpop.f32.mrf.mxu0
    %v717 = vadd.f32 0.0, %v716
    %v718 = vpop.f32.mrf.mxu0
    %v719 = vadd.f32 0.0, %v718
    %720 = vmatmul.bf16.gmra.mxu0 %v677
    %v721 = vpop.f32.mrf.mxu0
    %v722 = vadd.f32 0.0, %v721
    %v723 = vpop.f32.mrf.mxu0
    %v724 = vadd.f32 0.0, %v723
    %725 = vmatmul.bf16.gmra.mxu0 %v680
    %v726 = vpop.f32.mrf.mxu0
    %v727 = vadd.f32 0.0, %v726
    %v728 = vpop.f32.mrf.mxu0
    %v729 = vadd.f32 0.0, %v728
    %730 = vdwg.mxu0
    %v731 = vadd.f32 %v609, %v692
    %v732 = vadd.f32 %v610, %v694
    %v733 = vadd.f32 %v611, %v697
    %v734 = vadd.f32 %v612, %v699
    %v735 = vadd.f32 %v613, %v702
    %v736 = vadd.f32 %v614, %v704
    %v737 = vadd.f32 %v615, %v707
    %v738 = vadd.f32 %v616, %v709
    %v739 = vadd.f32 %v617, %v712
    %v740 = vadd.f32 %v618, %v714
    %v741 = vadd.f32 %v619, %v717
    %v742 = vadd.f32 %v620, %v719
    %v743 = vadd.f32 %v621, %v722
    %v744 = vadd.f32 %v622, %v724
    %v745 = vadd.f32 %v623, %v727
    %v746 = vadd.f32 %v624, %v729
    %v747 = vld [vmem:[%s502 + $0x2] sm:$0xff]
    %v748 = vld [vmem:[%s502 + $0x12] sm:$0xff]
    %v749 = vld [vmem:[%s502 + $0x22] sm:$0xff]
    %v750 = vld [vmem:[%s502 + $0x32] sm:$0xff]
    %v751 = vld [vmem:[%s502 + $0x42] sm:$0xff]
    %v752 = vld [vmem:[%s502 + $0x52] sm:$0xff]
    %v753 = vld [vmem:[%s502 + $0x62] sm:$0xff]
    %v754 = vld [vmem:[%s502 + $0x72] sm:$0xff]
    %v755 = vld [vmem:[%s502 + $0xa2] sm:$0xff]
    %v756 = vld [vmem:[%s502 + $0xb2] sm:$0xff]
    %v757 = vld [vmem:[%s502 + $0xc2] sm:$0xff]
    %v758 = vld [vmem:[%s502 + $0xd2] sm:$0xff]
    %v759 = vld [vmem:[%s502 + $0xe2] sm:$0xff]
    %v760 = vld [vmem:[%s502 + $0xf2] sm:$0xff]
    %v761 = vld [vmem:[%s502 + $0x102] sm:$0xff]
    %v762 = vld [vmem:[%s502 + $0x112] sm:$0xff]
    %v763 = vpack.c.bf16 %v748, %v747
    %v764 = vpack.c.bf16 %v750, %v749
    %v765 = vpack.c.bf16 %v752, %v751
    %v766 = vpack.c.bf16 %v754, %v753
    %v767 = vpack.c.bf16 %v756, %v755
    %v768 = vpack.c.bf16 %v758, %v757
    %v769 = vpack.c.bf16 %v760, %v759
    %v770 = vpack.c.bf16 %v762, %v761
    %s771 = scalar_lea.vmem %s4, 40
    %v772 = vld [vmem:[%s771] sm:$0xf]
    %v773 = vld [vmem:[%s771 + $0x4] sm:$0xf]
    %v776 = vunpack.c.l.b16 %v772
    %v777 = vunpack.c.l.b16 %v773
    %v778 = vpack.c.b16 %v777, %v776
    %v781 = vsel %vm227, %v763, 0
    %v784 = vsel %vm227, %v764, 0
    %v787 = vsel %vm227, %v765, 0
    %v790 = vsel %vm227, %v766, 0
    %v793 = vsel %vm227, %v767, 0
    %v796 = vsel %vm227, %v768, 0
    %v799 = vsel %vm227, %v769, 0
    %v802 = vsel %vm227, %v770, 0
    %804 = vmatpush.bf16.msra.mxu0 0
    %805 = vmatpush.bf16.msra.mxu0 0
    %806 = vmatpush.bf16.msra.mxu0 0
    %807 = vmatpush.bf16.msra.mxu0 0
    %808 = vmatpush.bf16.msra.mxu0 0
    %809 = vmatpush.bf16.msra.mxu0 0
    %810 = vmatpush.bf16.msra.mxu0 0
    %811 = vmatpush.bf16.msra.mxu0 %v778
    %812 = vmatmul.bf16.gmra.mxu0 %v781
    %v813 = vpop.f32.mrf.mxu0
    %v814 = vadd.f32 0.0, %v813
    %v815 = vpop.f32.mrf.mxu0
    %v816 = vadd.f32 0.0, %v815
    %817 = vmatmul.bf16.gmra.mxu0 %v784
    %v818 = vpop.f32.mrf.mxu0
    %v819 = vadd.f32 0.0, %v818
    %v820 = vpop.f32.mrf.mxu0
    %v821 = vadd.f32 0.0, %v820
    %822 = vmatmul.bf16.gmra.mxu0 %v787
    %v823 = vpop.f32.mrf.mxu0
    %v824 = vadd.f32 0.0, %v823
    %v825 = vpop.f32.mrf.mxu0
    %v826 = vadd.f32 0.0, %v825
    %827 = vmatmul.bf16.gmra.mxu0 %v790
    %v828 = vpop.f32.mrf.mxu0
    %v829 = vadd.f32 0.0, %v828
    %v830 = vpop.f32.mrf.mxu0
    %v831 = vadd.f32 0.0, %v830
    %832 = vmatmul.bf16.gmra.mxu0 %v793
    %v833 = vpop.f32.mrf.mxu0
    %v834 = vadd.f32 0.0, %v833
    %v835 = vpop.f32.mrf.mxu0
    %v836 = vadd.f32 0.0, %v835
    %837 = vmatmul.bf16.gmra.mxu0 %v796
    %v838 = vpop.f32.mrf.mxu0
    %v839 = vadd.f32 0.0, %v838
    %v840 = vpop.f32.mrf.mxu0
    %v841 = vadd.f32 0.0, %v840
    %842 = vmatmul.bf16.gmra.mxu0 %v799
    %v843 = vpop.f32.mrf.mxu0
    %v844 = vadd.f32 0.0, %v843
    %v845 = vpop.f32.mrf.mxu0
    %v846 = vadd.f32 0.0, %v845
    %847 = vmatmul.bf16.gmra.mxu0 %v802
    %v848 = vpop.f32.mrf.mxu0
    %v849 = vadd.f32 0.0, %v848
    %v850 = vpop.f32.mrf.mxu0
    %v851 = vadd.f32 0.0, %v850
    %852 = vdwg.mxu0
    %v853 = vadd.f32 %v731, %v814
    %v854 = vadd.f32 %v732, %v816
    %v855 = vadd.f32 %v733, %v819
    %v856 = vadd.f32 %v734, %v821
    %v857 = vadd.f32 %v735, %v824
    %v858 = vadd.f32 %v736, %v826
    %v859 = vadd.f32 %v737, %v829
    %v860 = vadd.f32 %v738, %v831
    %v861 = vadd.f32 %v739, %v834
    %v862 = vadd.f32 %v740, %v836
    %v863 = vadd.f32 %v741, %v839
    %v864 = vadd.f32 %v742, %v841
    %v865 = vadd.f32 %v743, %v844
    %v866 = vadd.f32 %v744, %v846
    %v867 = vadd.f32 %v745, %v849
    %v868 = vadd.f32 %v746, %v851
    %s869 = scalar_lea.vmem %s3, 32
    %v870 = vld [vmem:[%s869] sm:$0xff]
    %v871 = vld [vmem:[%s869 + $0x10] sm:$0xff]
    %v872 = vld [vmem:[%s869 + $0x20] sm:$0xff]
    %v873 = vld [vmem:[%s869 + $0x30] sm:$0xff]
    %v874 = vld [vmem:[%s869 + $0x40] sm:$0xff]
    %v875 = vld [vmem:[%s869 + $0x50] sm:$0xff]
    %v876 = vld [vmem:[%s869 + $0x60] sm:$0xff]
    %v877 = vld [vmem:[%s869 + $0x70] sm:$0xff]
    %v878 = vld [vmem:[%s869 + $0xa0] sm:$0xff]
    %v879 = vld [vmem:[%s869 + $0xb0] sm:$0xff]
    %v880 = vld [vmem:[%s869 + $0xc0] sm:$0xff]
    %v881 = vld [vmem:[%s869 + $0xd0] sm:$0xff]
    %v882 = vld [vmem:[%s869 + $0xe0] sm:$0xff]
    %v883 = vld [vmem:[%s869 + $0xf0] sm:$0xff]
    %v884 = vld [vmem:[%s869 + $0x100] sm:$0xff]
    %v885 = vld [vmem:[%s869 + $0x110] sm:$0xff]
    %v886 = vpack.c.bf16 %v871, %v870
    %v887 = vpack.c.bf16 %v873, %v872
    %v888 = vpack.c.bf16 %v875, %v874
    %v889 = vpack.c.bf16 %v877, %v876
    %v890 = vpack.c.bf16 %v879, %v878
    %v891 = vpack.c.bf16 %v881, %v880
    %v892 = vpack.c.bf16 %v883, %v882
    %v893 = vpack.c.bf16 %v885, %v884
    %s894 = scalar_lea.vmem %s4, 48
    %v895 = vld [vmem:[%s894] sm:$0xf]
    %v896 = vld [vmem:[%s894 + $0x4] sm:$0xf]
    %v899 = vunpack.c.l.b16 %v895
    %v900 = vunpack.c.l.b16 %v896
    %v901 = vpack.c.b16 %v900, %v899
    %v904 = vsel %vm227, %v886, 0
    %v907 = vsel %vm227, %v887, 0
    %v910 = vsel %vm227, %v888, 0
    %v913 = vsel %vm227, %v889, 0
    %v916 = vsel %vm227, %v890, 0
    %v919 = vsel %vm227, %v891, 0
    %v922 = vsel %vm227, %v892, 0
    %v925 = vsel %vm227, %v893, 0
    %927 = vmatpush.bf16.msra.mxu0 0
    %928 = vmatpush.bf16.msra.mxu0 0
    %929 = vmatpush.bf16.msra.mxu0 0
    %930 = vmatpush.bf16.msra.mxu0 0
    %931 = vmatpush.bf16.msra.mxu0 0
    %932 = vmatpush.bf16.msra.mxu0 0
    %933 = vmatpush.bf16.msra.mxu0 0
    %934 = vmatpush.bf16.msra.mxu0 %v901
    %935 = vmatmul.bf16.gmra.mxu0 %v904
    %v936 = vpop.f32.mrf.mxu0
    %v937 = vadd.f32 0.0, %v936
    %v938 = vpop.f32.mrf.mxu0
    %v939 = vadd.f32 0.0, %v938
    %940 = vmatmul.bf16.gmra.mxu0 %v907
    %v941 = vpop.f32.mrf.mxu0
    %v942 = vadd.f32 0.0, %v941
    %v943 = vpop.f32.mrf.mxu0
    %v944 = vadd.f32 0.0, %v943
    %945 = vmatmul.bf16.gmra.mxu0 %v910
    %v946 = vpop.f32.mrf.mxu0
    %v947 = vadd.f32 0.0, %v946
    %v948 = vpop.f32.mrf.mxu0
    %v949 = vadd.f32 0.0, %v948
    %950 = vmatmul.bf16.gmra.mxu0 %v913
    %v951 = vpop.f32.mrf.mxu0
    %v952 = vadd.f32 0.0, %v951
    %v953 = vpop.f32.mrf.mxu0
    %v954 = vadd.f32 0.0, %v953
    %955 = vmatmul.bf16.gmra.mxu0 %v916
    %v956 = vpop.f32.mrf.mxu0
    %v957 = vadd.f32 0.0, %v956
    %v958 = vpop.f32.mrf.mxu0
    %v959 = vadd.f32 0.0, %v958
    %960 = vmatmul.bf16.gmra.mxu0 %v919
    %v961 = vpop.f32.mrf.mxu0
    %v962 = vadd.f32 0.0, %v961
    %v963 = vpop.f32.mrf.mxu0
    %v964 = vadd.f32 0.0, %v963
    %965 = vmatmul.bf16.gmra.mxu0 %v922
    %v966 = vpop.f32.mrf.mxu0
    %v967 = vadd.f32 0.0, %v966
    %v968 = vpop.f32.mrf.mxu0
    %v969 = vadd.f32 0.0, %v968
    %970 = vmatmul.bf16.gmra.mxu0 %v925
    %v971 = vpop.f32.mrf.mxu0
    %v972 = vadd.f32 0.0, %v971
    %v973 = vpop.f32.mrf.mxu0
    %v974 = vadd.f32 0.0, %v973
    %975 = vdwg.mxu0
    %v976 = vadd.f32 %v853, %v937
    %v977 = vadd.f32 %v854, %v939
    %v978 = vadd.f32 %v855, %v942
    %v979 = vadd.f32 %v856, %v944
    %v980 = vadd.f32 %v857, %v947
    %v981 = vadd.f32 %v858, %v949
    %v982 = vadd.f32 %v859, %v952
    %v983 = vadd.f32 %v860, %v954
    %v984 = vadd.f32 %v861, %v957
    %v985 = vadd.f32 %v862, %v959
    %v986 = vadd.f32 %v863, %v962
    %v987 = vadd.f32 %v864, %v964
    %v988 = vadd.f32 %v865, %v967
    %v989 = vadd.f32 %v866, %v969
    %v990 = vadd.f32 %v867, %v972
    %v991 = vadd.f32 %v868, %v974
    %v992 = vld [vmem:[%s869 + $0x1] sm:$0xff]
    %v993 = vld [vmem:[%s869 + $0x11] sm:$0xff]
    %v994 = vld [vmem:[%s869 + $0x21] sm:$0xff]
    %v995 = vld [vmem:[%s869 + $0x31] sm:$0xff]
    %v996 = vld [vmem:[%s869 + $0x41] sm:$0xff]
    %v997 = vld [vmem:[%s869 + $0x51] sm:$0xff]
    %v998 = vld [vmem:[%s869 + $0x61] sm:$0xff]
    %v999 = vld [vmem:[%s869 + $0x71] sm:$0xff]
    %v1000 = vld [vmem:[%s869 + $0xa1] sm:$0xff]
    %v1001 = vld [vmem:[%s869 + $0xb1] sm:$0xff]
    %v1002 = vld [vmem:[%s869 + $0xc1] sm:$0xff]
    %v1003 = vld [vmem:[%s869 + $0xd1] sm:$0xff]
    %v1004 = vld [vmem:[%s869 + $0xe1] sm:$0xff]
    %v1005 = vld [vmem:[%s869 + $0xf1] sm:$0xff]
    %v1006 = vld [vmem:[%s869 + $0x101] sm:$0xff]
    %v1007 = vld [vmem:[%s869 + $0x111] sm:$0xff]
    %v1008 = vpack.c.bf16 %v993, %v992
    %v1009 = vpack.c.bf16 %v995, %v994
    %v1010 = vpack.c.bf16 %v997, %v996
    %v1011 = vpack.c.bf16 %v999, %v998
    %v1012 = vpack.c.bf16 %v1001, %v1000
    %v1013 = vpack.c.bf16 %v1003, %v1002
    %v1014 = vpack.c.bf16 %v1005, %v1004
    %v1015 = vpack.c.bf16 %v1007, %v1006
    %s1016 = scalar_lea.vmem %s4, 56
    %v1017 = vld [vmem:[%s1016] sm:$0xf]
    %v1018 = vld [vmem:[%s1016 + $0x4] sm:$0xf]
    %v1021 = vunpack.c.l.b16 %v1017
    %v1022 = vunpack.c.l.b16 %v1018
    %v1023 = vpack.c.b16 %v1022, %v1021
    %v1026 = vsel %vm227, %v1008, 0
    %v1029 = vsel %vm227, %v1009, 0
    %v1032 = vsel %vm227, %v1010, 0
    %v1035 = vsel %vm227, %v1011, 0
    %v1038 = vsel %vm227, %v1012, 0
    %v1041 = vsel %vm227, %v1013, 0
    %v1044 = vsel %vm227, %v1014, 0
    %v1047 = vsel %vm227, %v1015, 0
    %1049 = vmatpush.bf16.msra.mxu0 0
    %1050 = vmatpush.bf16.msra.mxu0 0
    %1051 = vmatpush.bf16.msra.mxu0 0
    %1052 = vmatpush.bf16.msra.mxu0 0
    %1053 = vmatpush.bf16.msra.mxu0 0
    %1054 = vmatpush.bf16.msra.mxu0 0
    %1055 = vmatpush.bf16.msra.mxu0 0
    %1056 = vmatpush.bf16.msra.mxu0 %v1023
    %1057 = vmatmul.bf16.gmra.mxu0 %v1026
    %v1058 = vpop.f32.mrf.mxu0
    %v1059 = vadd.f32 0.0, %v1058
    %v1060 = vpop.f32.mrf.mxu0
    %v1061 = vadd.f32 0.0, %v1060
    %1062 = vmatmul.bf16.gmra.mxu0 %v1029
    %v1063 = vpop.f32.mrf.mxu0
    %v1064 = vadd.f32 0.0, %v1063
    %v1065 = vpop.f32.mrf.mxu0
    %v1066 = vadd.f32 0.0, %v1065
    %1067 = vmatmul.bf16.gmra.mxu0 %v1032
    %v1068 = vpop.f32.mrf.mxu0
    %v1069 = vadd.f32 0.0, %v1068
    %v1070 = vpop.f32.mrf.mxu0
    %v1071 = vadd.f32 0.0, %v1070
    %1072 = vmatmul.bf16.gmra.mxu0 %v1035
    %v1073 = vpop.f32.mrf.mxu0
    %v1074 = vadd.f32 0.0, %v1073
    %v1075 = vpop.f32.mrf.mxu0
    %v1076 = vadd.f32 0.0, %v1075
    %1077 = vmatmul.bf16.gmra.mxu0 %v1038
    %v1078 = vpop.f32.mrf.mxu0
    %v1079 = vadd.f32 0.0, %v1078
    %v1080 = vpop.f32.mrf.mxu0
    %v1081 = vadd.f32 0.0, %v1080
    %1082 = vmatmul.bf16.gmra.mxu0 %v1041
    %v1083 = vpop.f32.mrf.mxu0
    %v1084 = vadd.f32 0.0, %v1083
    %v1085 = vpop.f32.mrf.mxu0
    %v1086 = vadd.f32 0.0, %v1085
    %1087 = vmatmul.bf16.gmra.mxu0 %v1044
    %v1088 = vpop.f32.mrf.mxu0
    %v1089 = vadd.f32 0.0, %v1088
    %v1090 = vpop.f32.mrf.mxu0
    %v1091 = vadd.f32 0.0, %v1090
    %1092 = vmatmul.bf16.gmra.mxu0 %v1047
    %v1093 = vpop.f32.mrf.mxu0
    %v1094 = vadd.f32 0.0, %v1093
    %v1095 = vpop.f32.mrf.mxu0
    %v1096 = vadd.f32 0.0, %v1095
    %1097 = vdwg.mxu0
    %v1098 = vadd.f32 %v976, %v1059
    %v1099 = vadd.f32 %v977, %v1061
    %v1100 = vadd.f32 %v978, %v1064
    %v1101 = vadd.f32 %v979, %v1066
    %v1102 = vadd.f32 %v980, %v1069
    %v1103 = vadd.f32 %v981, %v1071
    %v1104 = vadd.f32 %v982, %v1074
    %v1105 = vadd.f32 %v983, %v1076
    %v1106 = vadd.f32 %v984, %v1079
    %v1107 = vadd.f32 %v985, %v1081
    %v1108 = vadd.f32 %v986, %v1084
    %v1109 = vadd.f32 %v987, %v1086
    %v1110 = vadd.f32 %v988, %v1089
    %v1111 = vadd.f32 %v989, %v1091
    %v1112 = vadd.f32 %v990, %v1094
    %v1113 = vadd.f32 %v991, %v1096
    %v1114 = vld [vmem:[%s869 + $0x2] sm:$0xff]
    %v1115 = vld [vmem:[%s869 + $0x12] sm:$0xff]
    %v1116 = vld [vmem:[%s869 + $0x22] sm:$0xff]
    %v1117 = vld [vmem:[%s869 + $0x32] sm:$0xff]
    %v1118 = vld [vmem:[%s869 + $0x42] sm:$0xff]
    %v1119 = vld [vmem:[%s869 + $0x52] sm:$0xff]
    %v1120 = vld [vmem:[%s869 + $0x62] sm:$0xff]
    %v1121 = vld [vmem:[%s869 + $0x72] sm:$0xff]
    %v1122 = vld [vmem:[%s869 + $0xa2] sm:$0xff]
    %v1123 = vld [vmem:[%s869 + $0xb2] sm:$0xff]
    %v1124 = vld [vmem:[%s869 + $0xc2] sm:$0xff]
    %v1125 = vld [vmem:[%s869 + $0xd2] sm:$0xff]
    %v1126 = vld [vmem:[%s869 + $0xe2] sm:$0xff]
    %v1127 = vld [vmem:[%s869 + $0xf2] sm:$0xff]
    %v1128 = vld [vmem:[%s869 + $0x102] sm:$0xff]
    %v1129 = vld [vmem:[%s869 + $0x112] sm:$0xff]
    %v1130 = vpack.c.bf16 %v1115, %v1114
    %v1131 = vpack.c.bf16 %v1117, %v1116
    %v1132 = vpack.c.bf16 %v1119, %v1118
    %v1133 = vpack.c.bf16 %v1121, %v1120
    %v1134 = vpack.c.bf16 %v1123, %v1122
    %v1135 = vpack.c.bf16 %v1125, %v1124
    %v1136 = vpack.c.bf16 %v1127, %v1126
    %v1137 = vpack.c.bf16 %v1129, %v1128
    %s1138 = scalar_lea.vmem %s4, 64
    %v1139 = vld [vmem:[%s1138] sm:$0xf]
    %v1140 = vld [vmem:[%s1138 + $0x4] sm:$0xf]
    %v1143 = vunpack.c.l.b16 %v1139
    %v1144 = vunpack.c.l.b16 %v1140
    %v1145 = vpack.c.b16 %v1144, %v1143
    %v1148 = vsel %vm227, %v1130, 0
    %v1151 = vsel %vm227, %v1131, 0
    %v1154 = vsel %vm227, %v1132, 0
    %v1157 = vsel %vm227, %v1133, 0
    %v1160 = vsel %vm227, %v1134, 0
    %v1163 = vsel %vm227, %v1135, 0
    %v1166 = vsel %vm227, %v1136, 0
    %v1169 = vsel %vm227, %v1137, 0
    %1171 = vmatpush.bf16.msra.mxu0 0
    %1172 = vmatpush.bf16.msra.mxu0 0
    %1173 = vmatpush.bf16.msra.mxu0 0
    %1174 = vmatpush.bf16.msra.mxu0 0
    %1175 = vmatpush.bf16.msra.mxu0 0
    %1176 = vmatpush.bf16.msra.mxu0 0
    %1177 = vmatpush.bf16.msra.mxu0 0
    %1178 = vmatpush.bf16.msra.mxu0 %v1145
    %1179 = vmatmul.bf16.gmra.mxu0 %v1148
    %v1180 = vpop.f32.mrf.mxu0
    %v1181 = vadd.f32 0.0, %v1180
    %v1182 = vpop.f32.mrf.mxu0
    %v1183 = vadd.f32 0.0, %v1182
    %1184 = vmatmul.bf16.gmra.mxu0 %v1151
    %v1185 = vpop.f32.mrf.mxu0
    %v1186 = vadd.f32 0.0, %v1185
    %v1187 = vpop.f32.mrf.mxu0
    %v1188 = vadd.f32 0.0, %v1187
    %1189 = vmatmul.bf16.gmra.mxu0 %v1154
    %v1190 = vpop.f32.mrf.mxu0
    %v1191 = vadd.f32 0.0, %v1190
    %v1192 = vpop.f32.mrf.mxu0
    %v1193 = vadd.f32 0.0, %v1192
    %1194 = vmatmul.bf16.gmra.mxu0 %v1157
    %v1195 = vpop.f32.mrf.mxu0
    %v1196 = vadd.f32 0.0, %v1195
    %v1197 = vpop.f32.mrf.mxu0
    %v1198 = vadd.f32 0.0, %v1197
    %1199 = vmatmul.bf16.gmra.mxu0 %v1160
    %v1200 = vpop.f32.mrf.mxu0
    %v1201 = vadd.f32 0.0, %v1200
    %v1202 = vpop.f32.mrf.mxu0
    %v1203 = vadd.f32 0.0, %v1202
    %1204 = vmatmul.bf16.gmra.mxu0 %v1163
    %v1205 = vpop.f32.mrf.mxu0
    %v1206 = vadd.f32 0.0, %v1205
    %v1207 = vpop.f32.mrf.mxu0
    %v1208 = vadd.f32 0.0, %v1207
    %1209 = vmatmul.bf16.gmra.mxu0 %v1166
    %v1210 = vpop.f32.mrf.mxu0
    %v1211 = vadd.f32 0.0, %v1210
    %v1212 = vpop.f32.mrf.mxu0
    %v1213 = vadd.f32 0.0, %v1212
    %1214 = vmatmul.bf16.gmra.mxu0 %v1169
    %v1215 = vpop.f32.mrf.mxu0
    %v1216 = vadd.f32 0.0, %v1215
    %v1217 = vpop.f32.mrf.mxu0
    %v1218 = vadd.f32 0.0, %v1217
    %1219 = vdwg.mxu0
    %v1220 = vadd.f32 %v1098, %v1181
    %v1221 = vadd.f32 %v1099, %v1183
    %v1222 = vadd.f32 %v1100, %v1186
    %v1223 = vadd.f32 %v1101, %v1188
    %v1224 = vadd.f32 %v1102, %v1191
    %v1225 = vadd.f32 %v1103, %v1193
    %v1226 = vadd.f32 %v1104, %v1196
    %v1227 = vadd.f32 %v1105, %v1198
    %v1228 = vadd.f32 %v1106, %v1201
    %v1229 = vadd.f32 %v1107, %v1203
    %v1230 = vadd.f32 %v1108, %v1206
    %v1231 = vadd.f32 %v1109, %v1208
    %v1232 = vadd.f32 %v1110, %v1211
    %v1233 = vadd.f32 %v1111, %v1213
    %v1234 = vadd.f32 %v1112, %v1216
    %v1235 = vadd.f32 %v1113, %v1218
    %v1236 = vxor.u32 %v1220, 2147483648
    %v1237 = vxor.u32 %v1221, 2147483648
    %v1238 = vxor.u32 %v1222, 2147483648
    %v1239 = vxor.u32 %v1223, 2147483648
    %v1240 = vxor.u32 %v1224, 2147483648
    %v1241 = vxor.u32 %v1225, 2147483648
    %v1242 = vxor.u32 %v1226, 2147483648
    %v1243 = vxor.u32 %v1227, 2147483648
    %v1244 = vxor.u32 %v1228, 2147483648
    %v1245 = vxor.u32 %v1229, 2147483648
    %v1246 = vxor.u32 %v1230, 2147483648
    %v1247 = vxor.u32 %v1231, 2147483648
    %v1248 = vxor.u32 %v1232, 2147483648
    %v1249 = vxor.u32 %v1233, 2147483648
    %v1250 = vxor.u32 %v1234, 2147483648
    %v1251 = vxor.u32 %v1235, 2147483648
    %v1252 = vmul.f32 %v1236, 1.442695
    %v1253 = vpow.pop %v1252
    %v1254 = vmul.f32 %v1237, 1.442695
    %v1255 = vpow.pop %v1254
    %v1256 = vmul.f32 %v1238, 1.442695
    %v1257 = vpow.pop %v1256
    %v1258 = vmul.f32 %v1239, 1.442695
    %v1259 = vpow.pop %v1258
    %v1260 = vmul.f32 %v1240, 1.442695
    %v1261 = vpow.pop %v1260
    %v1262 = vmul.f32 %v1241, 1.442695
    %v1263 = vpow.pop %v1262
    %v1264 = vmul.f32 %v1242, 1.442695
    %v1265 = vpow.pop %v1264
    %v1266 = vmul.f32 %v1243, 1.442695
    %v1267 = vpow.pop %v1266
    %v1268 = vmul.f32 %v1244, 1.442695
    %v1269 = vpow.pop %v1268
    %v1270 = vmul.f32 %v1245, 1.442695
    %v1271 = vpow.pop %v1270
    %v1272 = vmul.f32 %v1246, 1.442695
    %v1273 = vpow.pop %v1272
    %v1274 = vmul.f32 %v1247, 1.442695
    %v1275 = vpow.pop %v1274
    %v1276 = vmul.f32 %v1248, 1.442695
    %v1277 = vpow.pop %v1276
    %v1278 = vmul.f32 %v1249, 1.442695
    %v1279 = vpow.pop %v1278
    %v1280 = vmul.f32 %v1250, 1.442695
    %v1281 = vpow.pop %v1280
    %v1282 = vmul.f32 %v1251, 1.442695
    %v1283 = vpow.pop %v1282
    %v1284 = vadd.f32 %v1253, 1.0
    %v1285 = vadd.f32 %v1255, 1.0
    %v1286 = vadd.f32 %v1257, 1.0
    %v1287 = vadd.f32 %v1259, 1.0
    %v1288 = vadd.f32 %v1261, 1.0
    %v1289 = vadd.f32 %v1263, 1.0
    %v1290 = vadd.f32 %v1265, 1.0
    %v1291 = vadd.f32 %v1267, 1.0
    %v1292 = vadd.f32 %v1269, 1.0
    %v1293 = vadd.f32 %v1271, 1.0
    %v1294 = vadd.f32 %v1273, 1.0
    %v1295 = vadd.f32 %v1275, 1.0
    %v1296 = vadd.f32 %v1277, 1.0
    %v1297 = vadd.f32 %v1279, 1.0
    %v1298 = vadd.f32 %v1281, 1.0
    %v1299 = vadd.f32 %v1283, 1.0
    %v1300 = vrcp.pop %v1284
    %v1301 = vmul.f32 %v1284, %v1300
    %v1302 = vsub.f32 1.0, %v1301
    %v1303 = vmul.f32 %v1300, %v1302
    %v1304 = vadd.f32 %v1300, %v1303
    %vm1305 = vweird.f32 %v1284
    %vm1306 = vweird.f32 %v1300
    %vm1307 = vmor %vm1305, %vm1306
    %v1308 = vsel %vm1307, %v1300, %v1304
    %v1309 = vand.u32 2147483647, %v1284
    %vm1310 = vcmp.eq.f32.partialorder %v1309, 8.507059e+37
    %v1311 = vand.u32 %v1284, 2147483648
    %v1312 = vor.u32 1.1754944e-38, %v1311
    %v1313 = vsel %vm1310, %v1312, %v1308
    %v1314 = vmul.f32 1.0, %v1313
    %v1315 = vrcp.pop %v1285
    %v1316 = vmul.f32 %v1285, %v1315
    %v1317 = vsub.f32 1.0, %v1316
    %v1318 = vmul.f32 %v1315, %v1317
    %v1319 = vadd.f32 %v1315, %v1318
    %vm1320 = vweird.f32 %v1285
    %vm1321 = vweird.f32 %v1315
    %vm1322 = vmor %vm1320, %vm1321
    %v1323 = vsel %vm1322, %v1315, %v1319
    %v1324 = vand.u32 2147483647, %v1285
    %vm1325 = vcmp.eq.f32.partialorder %v1324, 8.507059e+37
    %v1326 = vand.u32 %v1285, 2147483648
    %v1327 = vor.u32 1.1754944e-38, %v1326
    %v1328 = vsel %vm1325, %v1327, %v1323
    %v1329 = vmul.f32 1.0, %v1328
    %v1330 = vrcp.pop %v1286
    %v1331 = vmul.f32 %v1286, %v1330
    %v1332 = vsub.f32 1.0, %v1331
    %v1333 = vmul.f32 %v1330, %v1332
    %v1334 = vadd.f32 %v1330, %v1333
    %vm1335 = vweird.f32 %v1286
    %vm1336 = vweird.f32 %v1330
    %vm1337 = vmor %vm1335, %vm1336
    %v1338 = vsel %vm1337, %v1330, %v1334
    %v1339 = vand.u32 2147483647, %v1286
    %vm1340 = vcmp.eq.f32.partialorder %v1339, 8.507059e+37
    %v1341 = vand.u32 %v1286, 2147483648
    %v1342 = vor.u32 1.1754944e-38, %v1341
    %v1343 = vsel %vm1340, %v1342, %v1338
    %v1344 = vmul.f32 1.0, %v1343
    %v1345 = vrcp.pop %v1287
    %v1346 = vmul.f32 %v1287, %v1345
    %v1347 = vsub.f32 1.0, %v1346
    %v1348 = vmul.f32 %v1345, %v1347
    %v1349 = vadd.f32 %v1345, %v1348
    %vm1350 = vweird.f32 %v1287
    %vm1351 = vweird.f32 %v1345
    %vm1352 = vmor %vm1350, %vm1351
    %v1353 = vsel %vm1352, %v1345, %v1349
    %v1354 = vand.u32 2147483647, %v1287
    %vm1355 = vcmp.eq.f32.partialorder %v1354, 8.507059e+37
    %v1356 = vand.u32 %v1287, 2147483648
    %v1357 = vor.u32 1.1754944e-38, %v1356
    %v1358 = vsel %vm1355, %v1357, %v1353
    %v1359 = vmul.f32 1.0, %v1358
    %v1360 = vrcp.pop %v1288
    %v1361 = vmul.f32 %v1288, %v1360
    %v1362 = vsub.f32 1.0, %v1361
    %v1363 = vmul.f32 %v1360, %v1362
    %v1364 = vadd.f32 %v1360, %v1363
    %vm1365 = vweird.f32 %v1288
    %vm1366 = vweird.f32 %v1360
    %vm1367 = vmor %vm1365, %vm1366
    %v1368 = vsel %vm1367, %v1360, %v1364
    %v1369 = vand.u32 2147483647, %v1288
    %vm1370 = vcmp.eq.f32.partialorder %v1369, 8.507059e+37
    %v1371 = vand.u32 %v1288, 2147483648
    %v1372 = vor.u32 1.1754944e-38, %v1371
    %v1373 = vsel %vm1370, %v1372, %v1368
    %v1374 = vmul.f32 1.0, %v1373
    %v1375 = vrcp.pop %v1289
    %v1376 = vmul.f32 %v1289, %v1375
    %v1377 = vsub.f32 1.0, %v1376
    %v1378 = vmul.f32 %v1375, %v1377
    %v1379 = vadd.f32 %v1375, %v1378
    %vm1380 = vweird.f32 %v1289
    %vm1381 = vweird.f32 %v1375
    %vm1382 = vmor %vm1380, %vm1381
    %v1383 = vsel %vm1382, %v1375, %v1379
    %v1384 = vand.u32 2147483647, %v1289
    %vm1385 = vcmp.eq.f32.partialorder %v1384, 8.507059e+37
    %v1386 = vand.u32 %v1289, 2147483648
    %v1387 = vor.u32 1.1754944e-38, %v1386
    %v1388 = vsel %vm1385, %v1387, %v1383
    %v1389 = vmul.f32 1.0, %v1388
    %v1390 = vrcp.pop %v1290
    %v1391 = vmul.f32 %v1290, %v1390
    %v1392 = vsub.f32 1.0, %v1391
    %v1393 = vmul.f32 %v1390, %v1392
    %v1394 = vadd.f32 %v1390, %v1393
    %vm1395 = vweird.f32 %v1290
    %vm1396 = vweird.f32 %v1390
    %vm1397 = vmor %vm1395, %vm1396
    %v1398 = vsel %vm1397, %v1390, %v1394
    %v1399 = vand.u32 2147483647, %v1290
    %vm1400 = vcmp.eq.f32.partialorder %v1399, 8.507059e+37
    %v1401 = vand.u32 %v1290, 2147483648
    %v1402 = vor.u32 1.1754944e-38, %v1401
    %v1403 = vsel %vm1400, %v1402, %v1398
    %v1404 = vmul.f32 1.0, %v1403
    %v1405 = vrcp.pop %v1291
    %v1406 = vmul.f32 %v1291, %v1405
    %v1407 = vsub.f32 1.0, %v1406
    %v1408 = vmul.f32 %v1405, %v1407
    %v1409 = vadd.f32 %v1405, %v1408
    %vm1410 = vweird.f32 %v1291
    %vm1411 = vweird.f32 %v1405
    %vm1412 = vmor %vm1410, %vm1411
    %v1413 = vsel %vm1412, %v1405, %v1409
    %v1414 = vand.u32 2147483647, %v1291
    %vm1415 = vcmp.eq.f32.partialorder %v1414, 8.507059e+37
    %v1416 = vand.u32 %v1291, 2147483648
    %v1417 = vor.u32 1.1754944e-38, %v1416
    %v1418 = vsel %vm1415, %v1417, %v1413
    %v1419 = vmul.f32 1.0, %v1418
    %v1420 = vrcp.pop %v1292
    %v1421 = vmul.f32 %v1292, %v1420
    %v1422 = vsub.f32 1.0, %v1421
    %v1423 = vmul.f32 %v1420, %v1422
    %v1424 = vadd.f32 %v1420, %v1423
    %vm1425 = vweird.f32 %v1292
    %vm1426 = vweird.f32 %v1420
    %vm1427 = vmor %vm1425, %vm1426
    %v1428 = vsel %vm1427, %v1420, %v1424
    %v1429 = vand.u32 2147483647, %v1292
    %vm1430 = vcmp.eq.f32.partialorder %v1429, 8.507059e+37
    %v1431 = vand.u32 %v1292, 2147483648
    %v1432 = vor.u32 1.1754944e-38, %v1431
    %v1433 = vsel %vm1430, %v1432, %v1428
    %v1434 = vmul.f32 1.0, %v1433
    %v1435 = vrcp.pop %v1293
    %v1436 = vmul.f32 %v1293, %v1435
    %v1437 = vsub.f32 1.0, %v1436
    %v1438 = vmul.f32 %v1435, %v1437
    %v1439 = vadd.f32 %v1435, %v1438
    %vm1440 = vweird.f32 %v1293
    %vm1441 = vweird.f32 %v1435
    %vm1442 = vmor %vm1440, %vm1441
    %v1443 = vsel %vm1442, %v1435, %v1439
    %v1444 = vand.u32 2147483647, %v1293
    %vm1445 = vcmp.eq.f32.partialorder %v1444, 8.507059e+37
    %v1446 = vand.u32 %v1293, 2147483648
    %v1447 = vor.u32 1.1754944e-38, %v1446
    %v1448 = vsel %vm1445, %v1447, %v1443
    %v1449 = vmul.f32 1.0, %v1448
    %v1450 = vrcp.pop %v1294
    %v1451 = vmul.f32 %v1294, %v1450
    %v1452 = vsub.f32 1.0, %v1451
    %v1453 = vmul.f32 %v1450, %v1452
    %v1454 = vadd.f32 %v1450, %v1453
    %vm1455 = vweird.f32 %v1294
    %vm1456 = vweird.f32 %v1450
    %vm1457 = vmor %vm1455, %vm1456
    %v1458 = vsel %vm1457, %v1450, %v1454
    %v1459 = vand.u32 2147483647, %v1294
    %vm1460 = vcmp.eq.f32.partialorder %v1459, 8.507059e+37
    %v1461 = vand.u32 %v1294, 2147483648
    %v1462 = vor.u32 1.1754944e-38, %v1461
    %v1463 = vsel %vm1460, %v1462, %v1458
    %v1464 = vmul.f32 1.0, %v1463
    %v1465 = vrcp.pop %v1295
    %v1466 = vmul.f32 %v1295, %v1465
    %v1467 = vsub.f32 1.0, %v1466
    %v1468 = vmul.f32 %v1465, %v1467
    %v1469 = vadd.f32 %v1465, %v1468
    %vm1470 = vweird.f32 %v1295
    %vm1471 = vweird.f32 %v1465
    %vm1472 = vmor %vm1470, %vm1471
    %v1473 = vsel %vm1472, %v1465, %v1469
    %v1474 = vand.u32 2147483647, %v1295
    %vm1475 = vcmp.eq.f32.partialorder %v1474, 8.507059e+37
    %v1476 = vand.u32 %v1295, 2147483648
    %v1477 = vor.u32 1.1754944e-38, %v1476
    %v1478 = vsel %vm1475, %v1477, %v1473
    %v1479 = vmul.f32 1.0, %v1478
    %v1480 = vrcp.pop %v1296
    %v1481 = vmul.f32 %v1296, %v1480
    %v1482 = vsub.f32 1.0, %v1481
    %v1483 = vmul.f32 %v1480, %v1482
    %v1484 = vadd.f32 %v1480, %v1483
    %vm1485 = vweird.f32 %v1296
    %vm1486 = vweird.f32 %v1480
    %vm1487 = vmor %vm1485, %vm1486
    %v1488 = vsel %vm1487, %v1480, %v1484
    %v1489 = vand.u32 2147483647, %v1296
    %vm1490 = vcmp.eq.f32.partialorder %v1489, 8.507059e+37
    %v1491 = vand.u32 %v1296, 2147483648
    %v1492 = vor.u32 1.1754944e-38, %v1491
    %v1493 = vsel %vm1490, %v1492, %v1488
    %v1494 = vmul.f32 1.0, %v1493
    %v1495 = vrcp.pop %v1297
    %v1496 = vmul.f32 %v1297, %v1495
    %v1497 = vsub.f32 1.0, %v1496
    %v1498 = vmul.f32 %v1495, %v1497
    %v1499 = vadd.f32 %v1495, %v1498
    %vm1500 = vweird.f32 %v1297
    %vm1501 = vweird.f32 %v1495
    %vm1502 = vmor %vm1500, %vm1501
    %v1503 = vsel %vm1502, %v1495, %v1499
    %v1504 = vand.u32 2147483647, %v1297
    %vm1505 = vcmp.eq.f32.partialorder %v1504, 8.507059e+37
    %v1506 = vand.u32 %v1297, 2147483648
    %v1507 = vor.u32 1.1754944e-38, %v1506
    %v1508 = vsel %vm1505, %v1507, %v1503
    %v1509 = vmul.f32 1.0, %v1508
    %v1510 = vrcp.pop %v1298
    %v1511 = vmul.f32 %v1298, %v1510
    %v1512 = vsub.f32 1.0, %v1511
    %v1513 = vmul.f32 %v1510, %v1512
    %v1514 = vadd.f32 %v1510, %v1513
    %vm1515 = vweird.f32 %v1298
    %vm1516 = vweird.f32 %v1510
    %vm1517 = vmor %vm1515, %vm1516
    %v1518 = vsel %vm1517, %v1510, %v1514
    %v1519 = vand.u32 2147483647, %v1298
    %vm1520 = vcmp.eq.f32.partialorder %v1519, 8.507059e+37
    %v1521 = vand.u32 %v1298, 2147483648
    %v1522 = vor.u32 1.1754944e-38, %v1521
    %v1523 = vsel %vm1520, %v1522, %v1518
    %v1524 = vmul.f32 1.0, %v1523
    %v1525 = vrcp.pop %v1299
    %v1526 = vmul.f32 %v1299, %v1525
    %v1527 = vsub.f32 1.0, %v1526
    %v1528 = vmul.f32 %v1525, %v1527
    %v1529 = vadd.f32 %v1525, %v1528
    %vm1530 = vweird.f32 %v1299
    %vm1531 = vweird.f32 %v1525
    %vm1532 = vmor %vm1530, %vm1531
    %v1533 = vsel %vm1532, %v1525, %v1529
    %v1534 = vand.u32 2147483647, %v1299
    %vm1535 = vcmp.eq.f32.partialorder %v1534, 8.507059e+37
    %v1536 = vand.u32 %v1299, 2147483648
    %v1537 = vor.u32 1.1754944e-38, %v1536
    %v1538 = vsel %vm1535, %v1537, %v1533
    %v1539 = vmul.f32 1.0, %v1538
    %1540 = vst [vmem:[#allocation2] sm:$0xff] %v1314
    %1541 = vst [vmem:[#allocation2 + $0x8] sm:$0xff] %v1329
    %1542 = vst [vmem:[#allocation2 + $0x10] sm:$0xff] %v1344
    %1543 = vst [vmem:[#allocation2 + $0x18] sm:$0xff] %v1359
    %1544 = vst [vmem:[#allocation2 + $0x20] sm:$0xff] %v1374
    %1545 = vst [vmem:[#allocation2 + $0x28] sm:$0xff] %v1389
    %1546 = vst [vmem:[#allocation2 + $0x30] sm:$0xff] %v1404
    %1547 = vst [vmem:[#allocation2 + $0x38] sm:$0xff] %v1419
    %1548 = vst [vmem:[#allocation2 + $0x40] sm:$0xff] %v1434
    %1549 = vst [vmem:[#allocation2 + $0x48] sm:$0xff] %v1449
    %1550 = vst [vmem:[#allocation2 + $0x50] sm:$0xff] %v1464
    %1551 = vst [vmem:[#allocation2 + $0x58] sm:$0xff] %v1479
    %1552 = vst [vmem:[#allocation2 + $0x60] sm:$0xff] %v1494
    %1553 = vst [vmem:[#allocation2 + $0x68] sm:$0xff] %v1509
    %1554 = vst [vmem:[#allocation2 + $0x70] sm:$0xff] %v1524
    %1555 = vst [vmem:[#allocation2 + $0x78] sm:$0xff] %v1539
    %v1556 = vld [vmem:[%s5] sm:$0xff]
    %v1557 = vld [vmem:[%s5 + $0x8] sm:$0xff]
    %v1558 = vld [vmem:[%s5 + $0x10] sm:$0xff]
    %v1559 = vld [vmem:[%s5 + $0x18] sm:$0xff]
    %v1560 = vld [vmem:[%s5 + $0x20] sm:$0xff]
    %v1561 = vld [vmem:[%s5 + $0x28] sm:$0xff]
    %v1562 = vld [vmem:[%s5 + $0x30] sm:$0xff]
    %v1563 = vld [vmem:[%s5 + $0x38] sm:$0xff]
    %v1564 = vld [vmem:[%s5 + $0x40] sm:$0xff]
    %v1565 = vld [vmem:[%s5 + $0x48] sm:$0xff]
    %v1566 = vld [vmem:[%s5 + $0x50] sm:$0xff]
    %v1567 = vld [vmem:[%s5 + $0x58] sm:$0xff]
    %v1568 = vld [vmem:[%s5 + $0x60] sm:$0x77]
    %v1569 = vld [vmem:[%s5 + $0x68] sm:$0x77]
    %v1570 = vld [vmem:[%s6] sm:$0xf]
    %v1571 = vld [vmem:[%s6 + $0x4] sm:$0xf]
    %v1572 = vld [vmem:[%s6 + $0x8] sm:$0xf]
    %v1573 = vld [vmem:[%s6 + $0xc] sm:$0xf]
    %v1574 = vld [vmem:[%s6 + $0x10] sm:$0xf]
    %v1575 = vld [vmem:[%s6 + $0x14] sm:$0xf]
    %v1576 = vld [vmem:[%s6 + $0x18] sm:$0xf]
    %v1577 = vld [vmem:[%s6 + $0x1c] sm:$0xf]
    %v1578 = vld [vmem:[%s6 + $0x20] sm:$0xf]
    %v1579 = vld [vmem:[%s6 + $0x24] sm:$0xf]
    %v1580 = vld [vmem:[%s6 + $0x28] sm:$0xf]
    %v1581 = vld [vmem:[%s6 + $0x2c] sm:$0xf]
    %v1582 = vld [vmem:[%s6 + $0x30] sm:$0xf]
    %v1583 = vld [vmem:[%s6 + $0x34] sm:$0xf]
    %v1584 = vld [vmem:[%s6 + $0x38] sm:$0xf]
    %v1585 = vld [vmem:[%s6 + $0x3c] sm:$0xf]
    %v1586 = vld [vmem:[%s6 + $0x40] sm:$0xf]
    %v1587 = vld [vmem:[%s6 + $0x44] sm:$0xf]
    %v1588 = vld [vmem:[%s6 + $0x48] sm:$0xf]
    %v1589 = vld [vmem:[%s6 + $0x4c] sm:$0xf]
    %v1590 = vld [vmem:[%s6 + $0x50] sm:$0xf]
    %v1591 = vld [vmem:[%s6 + $0x54] sm:$0xf]
    %v1592 = vld [vmem:[%s6 + $0x58] sm:$0xf]
    %v1593 = vld [vmem:[%s6 + $0x5c] sm:$0xf]
    %v1594 = vld [vmem:[%s6 + $0x60] sm:$0xf]
    %v1595 = vld [vmem:[%s6 + $0x64] sm:$0xf]
    %v1596 = vld [vmem:[%s6 + $0x68] sm:$0xf]
    %v1597 = vld [vmem:[%s6 + $0x6c] sm:$0xf]
    %v1598 = vld [vmem:[%s6 + $0x70] sm:$0xf]
    %v1599 = vld [vmem:[%s6 + $0x74] sm:$0xf]
    %v1600 = vld [vmem:[%s6 + $0x78] sm:$0xf]
    %v1601 = vld [vmem:[%s6 + $0x7c] sm:$0xf]
    %v1602 = vld [vmem:[%s6 + $0x80] sm:$0xf]
    %v1603 = vld [vmem:[%s6 + $0x84] sm:$0xf]
    %v1604 = vld [vmem:[%s6 + $0x88] sm:$0xf]
    %v1605 = vld [vmem:[%s6 + $0x8c] sm:$0xf]
    %v1606 = vld [vmem:[%s6 + $0x90] sm:$0xf]
    %v1607 = vld [vmem:[%s6 + $0x94] sm:$0xf]
    %v1608 = vld [vmem:[%s6 + $0x98] sm:$0xf]
    %v1609 = vld [vmem:[%s6 + $0x9c] sm:$0xf]
    %v1610 = vld [vmem:[%s6 + $0xa0] sm:$0xf]
    %v1611 = vld [vmem:[%s6 + $0xa4] sm:$0xf]
    %v1612 = vld [vmem:[%s6 + $0xa8] sm:$0xf]
    %v1613 = vld [vmem:[%s6 + $0xac] sm:$0xf]
    %v1614 = vld [vmem:[%s6 + $0xb0] sm:$0xf]
    %v1615 = vld [vmem:[%s6 + $0xb4] sm:$0xf]
    %v1616 = vld [vmem:[%s6 + $0xb8] sm:$0xf]
    %v1617 = vld [vmem:[%s6 + $0xbc] sm:$0xf]
    %v1618 = vld [vmem:[%s6 + $0xc0] sm:$0xf]
    %v1619 = vld [vmem:[%s6 + $0xc4] sm:$0xf]
    %v1620 = vld [vmem:[%s6 + $0xc8] sm:$0xf]
    %v1621 = vld [vmem:[%s6 + $0xcc] sm:$0xf]
    %v1622 = vld [vmem:[%s6 + $0xd0] sm:$0xf]
    %v1623 = vld [vmem:[%s6 + $0xd4] sm:$0xf]
    %v1638 = vunpack.c.l.b16 %v1556
    %v1639 = vunpack.c.h.b16 %v1556
    %v1640 = vunpack.c.l.b16 %v1557
    %v1641 = vunpack.c.h.b16 %v1557
    %v1642 = vunpack.c.l.b16 %v1558
    %v1643 = vunpack.c.h.b16 %v1558
    %v1644 = vunpack.c.l.b16 %v1559
    %v1645 = vunpack.c.h.b16 %v1559
    %v1646 = vunpack.c.l.b16 %v1560
    %v1647 = vunpack.c.h.b16 %v1560
    %v1648 = vunpack.c.l.b16 %v1561
    %v1649 = vunpack.c.h.b16 %v1561
    %v1650 = vunpack.c.l.b16 %v1562
    %v1651 = vunpack.c.h.b16 %v1562
    %v1652 = vunpack.c.l.b16 %v1563
    %v1653 = vunpack.c.h.b16 %v1563
    %v1654 = vunpack.c.l.b16 %v1564
    %v1655 = vunpack.c.h.b16 %v1564
    %v1656 = vunpack.c.l.b16 %v1565
    %v1657 = vunpack.c.h.b16 %v1565
    %v1658 = vunpack.c.l.b16 %v1566
    %v1659 = vunpack.c.h.b16 %v1566
    %v1660 = vunpack.c.l.b16 %v1567
    %v1661 = vunpack.c.h.b16 %v1567
    %v1662 = vunpack.c.l.b16 %v1568
    %v1663 = vunpack.c.h.b16 %v1568
    %v1664 = vunpack.c.l.b16 %v1569
    %v1665 = vunpack.c.h.b16 %v1569
    %v1666 = vpack.c.b16 %v1642, %v1638
    %v1667 = vpack.c.b16 %v1643, %v1639
    %v1668 = vpack.c.b16 %v1644, %v1640
    %v1669 = vpack.c.b16 %v1645, %v1641
    %v1670 = vpack.c.b16 %v1650, %v1646
    %v1671 = vpack.c.b16 %v1651, %v1647
    %v1672 = vpack.c.b16 %v1652, %v1648
    %v1673 = vpack.c.b16 %v1653, %v1649
    %v1674 = vpack.c.b16 %v1658, %v1654
    %v1675 = vpack.c.b16 %v1659, %v1655
    %v1676 = vpack.c.b16 %v1660, %v1656
    %v1677 = vpack.c.b16 %v1661, %v1657
    %v1678 = vpack.c.b16 %v1662, %v1662
    %v1679 = vpack.c.b16 %v1663, %v1663
    %v1680 = vpack.c.b16 %v1664, %v1664
    %v1681 = vpack.c.b16 %v1665, %v1665
    %v1748 = vunpack.c.l.b16 %v1570
    %v1749 = vunpack.c.l.b16 %v1571
    %v1750 = vunpack.c.l.b16 %v1572
    %v1751 = vunpack.c.l.b16 %v1573
    %v1752 = vunpack.c.l.b16 %v1574
    %v1753 = vunpack.c.l.b16 %v1575
    %v1754 = vunpack.c.l.b16 %v1576
    %v1755 = vunpack.c.l.b16 %v1577
    %v1756 = vunpack.c.l.b16 %v1578
    %v1757 = vunpack.c.l.b16 %v1579
    %v1758 = vunpack.c.l.b16 %v1580
    %v1759 = vunpack.c.l.b16 %v1581
    %v1760 = vunpack.c.l.b16 %v1582
    %v1761 = vunpack.c.l.b16 %v1583
    %v1762 = vunpack.c.l.b16 %v1584
    %v1763 = vunpack.c.l.b16 %v1585
    %v1764 = vunpack.c.l.b16 %v1586
    %v1765 = vunpack.c.l.b16 %v1587
    %v1766 = vunpack.c.l.b16 %v1588
    %v1767 = vunpack.c.l.b16 %v1589
    %v1768 = vunpack.c.l.b16 %v1590
    %v1769 = vunpack.c.l.b16 %v1591
    %v1770 = vunpack.c.l.b16 %v1592
    %v1771 = vunpack.c.l.b16 %v1593
    %v1772 = vunpack.c.l.b16 %v1594
    %v1773 = vunpack.c.l.b16 %v1595
    %v1774 = vunpack.c.l.b16 %v1596
    %v1775 = vunpack.c.l.b16 %v1597
    %v1776 = vunpack.c.l.b16 %v1598
    %v1777 = vunpack.c.l.b16 %v1599
    %v1778 = vunpack.c.l.b16 %v1600
    %v1779 = vunpack.c.l.b16 %v1601
    %v1780 = vunpack.c.l.b16 %v1602
    %v1781 = vunpack.c.l.b16 %v1603
    %v1782 = vunpack.c.l.b16 %v1604
    %v1783 = vunpack.c.l.b16 %v1605
    %v1784 = vunpack.c.l.b16 %v1606
    %v1785 = vunpack.c.l.b16 %v1607
    %v1786 = vunpack.c.l.b16 %v1608
    %v1787 = vunpack.c.l.b16 %v1609
    %v1788 = vunpack.c.l.b16 %v1610
    %v1789 = vunpack.c.l.b16 %v1611
    %v1790 = vunpack.c.l.b16 %v1612
    %v1791 = vunpack.c.l.b16 %v1613
    %v1792 = vunpack.c.l.b16 %v1614
    %v1793 = vunpack.c.l.b16 %v1615
    %v1794 = vunpack.c.l.b16 %v1616
    %v1795 = vunpack.c.l.b16 %v1617
    %v1796 = vunpack.c.l.b16 %v1618
    %v1797 = vunpack.c.l.b16 %v1619
    %v1798 = vunpack.c.l.b16 %v1620
    %v1799 = vunpack.c.l.b16 %v1621
    %v1800 = vunpack.c.l.b16 %v1622
    %v1801 = vunpack.c.l.b16 %v1623
    %v1802 = vpack.c.b16 %v1749, %v1748
    %v1803 = vpack.c.b16 %v1751, %v1750
    %v1804 = vpack.c.b16 %v1753, %v1752
    %v1805 = vpack.c.b16 %v1755, %v1754
    %v1806 = vpack.c.b16 %v1757, %v1756
    %v1807 = vpack.c.b16 %v1759, %v1758
    %v1808 = vpack.c.b16 %v1761, %v1760
    %v1809 = vpack.c.b16 %v1763, %v1762
    %v1810 = vpack.c.b16 %v1765, %v1764
    %v1811 = vpack.c.b16 %v1767, %v1766
    %v1812 = vpack.c.b16 %v1769, %v1768
    %v1813 = vpack.c.b16 %v1771, %v1770
    %v1814 = vpack.c.b16 %v1773, %v1772
    %v1815 = vpack.c.b16 %v1775, %v1774
    %v1816 = vpack.c.b16 %v1777, %v1776
    %v1817 = vpack.c.b16 %v1779, %v1778
    %v1818 = vpack.c.b16 %v1781, %v1780
    %v1819 = vpack.c.b16 %v1783, %v1782
    %v1820 = vpack.c.b16 %v1785, %v1784
    %v1821 = vpack.c.b16 %v1787, %v1786
    %v1822 = vpack.c.b16 %v1789, %v1788
    %v1823 = vpack.c.b16 %v1791, %v1790
    %v1824 = vpack.c.b16 %v1793, %v1792
    %v1825 = vpack.c.b16 %v1795, %v1794
    %v1826 = vpack.c.b16 %v1797, %v1796
    %v1827 = vpack.c.b16 %v1799, %v1798
    %v1828 = vpack.c.b16 %v1801, %v1800
    %vm1856 = vcmask 392192
    %v1858 = vsel %vm1856, %v1669, 0
    %v1861 = vsel %vm1856, %v1673, 0
    %v1864 = vsel %vm1856, %v1677, 0
    %v1867 = vsel %vm1856, %v1681, 0
    %1869 = vmatpush.bf16.msra.mxu0 %v1809
    %1870 = vmatpush.bf16.msra.mxu0 %v1808
    %1871 = vmatpush.bf16.msra.mxu0 %v1807
    %1872 = vmatpush.bf16.msra.mxu0 %v1806
    %1873 = vmatpush.bf16.msra.mxu0 %v1805
    %1874 = vmatpush.bf16.msra.mxu0 %v1804
    %1875 = vmatpush.bf16.msra.mxu0 %v1803
    %1876 = vmatpush.bf16.msra.mxu0 %v1802
    %1877 = vmatmul.bf16.gmra.mxu0 %v1666
    %v1878 = vpop.f32.mrf.mxu0
    %v1879 = vadd.f32 0.0, %v1878
    %v1880 = vpop.f32.mrf.mxu0
    %v1881 = vadd.f32 0.0, %v1880
    %1882 = vmatmul.bf16.gmra.mxu0 %v1670
    %v1883 = vpop.f32.mrf.mxu0
    %v1884 = vadd.f32 0.0, %v1883
    %v1885 = vpop.f32.mrf.mxu0
    %v1886 = vadd.f32 0.0, %v1885
    %1887 = vmatmul.bf16.gmra.mxu0 %v1674
    %v1888 = vpop.f32.mrf.mxu0
    %v1889 = vadd.f32 0.0, %v1888
    %v1890 = vpop.f32.mrf.mxu0
    %v1891 = vadd.f32 0.0, %v1890
    %1892 = vmatmul.bf16.gmra.mxu0 %v1678
    %v1893 = vpop.f32.mrf.mxu0
    %v1894 = vadd.f32 0.0, %v1893
    %v1895 = vpop.f32.mrf.mxu0
    %1896 = vdwg.mxu0
    %1897 = vmatpush.bf16.msra.mxu0 %v1817
    %1898 = vmatpush.bf16.msra.mxu0 %v1816
    %1899 = vmatpush.bf16.msra.mxu0 %v1815
    %1900 = vmatpush.bf16.msra.mxu0 %v1814
    %1901 = vmatpush.bf16.msra.mxu0 %v1813
    %1902 = vmatpush.bf16.msra.mxu0 %v1812
    %1903 = vmatpush.bf16.msra.mxu0 %v1811
    %1904 = vmatpush.bf16.msra.mxu0 %v1810
    %1905 = vmatmul.bf16.gmra.mxu0 %v1667
    %v1906 = vpop.f32.mrf.mxu0
    %v1907 = vadd.f32 %v1879, %v1906
    %v1908 = vpop.f32.mrf.mxu0
    %v1909 = vadd.f32 %v1881, %v1908
    %1910 = vmatmul.bf16.gmra.mxu0 %v1671
    %v1911 = vpop.f32.mrf.mxu0
    %v1912 = vadd.f32 %v1884, %v1911
    %v1913 = vpop.f32.mrf.mxu0
    %v1914 = vadd.f32 %v1886, %v1913
    %1915 = vmatmul.bf16.gmra.mxu0 %v1675
    %v1916 = vpop.f32.mrf.mxu0
    %v1917 = vadd.f32 %v1889, %v1916
    %v1918 = vpop.f32.mrf.mxu0
    %v1919 = vadd.f32 %v1891, %v1918
    %1920 = vmatmul.bf16.gmra.mxu0 %v1679
    %v1921 = vpop.f32.mrf.mxu0
    %v1922 = vadd.f32 %v1894, %v1921
    %v1923 = vpop.f32.mrf.mxu0
    %1924 = vdwg.mxu0
    %1925 = vmatpush.bf16.msra.mxu0 %v1825
    %1926 = vmatpush.bf16.msra.mxu0 %v1824
    %1927 = vmatpush.bf16.msra.mxu0 %v1823
    %1928 = vmatpush.bf16.msra.mxu0 %v1822
    %1929 = vmatpush.bf16.msra.mxu0 %v1821
    %1930 = vmatpush.bf16.msra.mxu0 %v1820
    %1931 = vmatpush.bf16.msra.mxu0 %v1819
    %1932 = vmatpush.bf16.msra.mxu0 %v1818
    %1933 = vmatmul.bf16.gmra.mxu0 %v1668
    %v1934 = vpop.f32.mrf.mxu0
    %v1935 = vadd.f32 %v1907, %v1934
    %v1936 = vpop.f32.mrf.mxu0
    %v1937 = vadd.f32 %v1909, %v1936
    %1938 = vmatmul.bf16.gmra.mxu0 %v1672
    %v1939 = vpop.f32.mrf.mxu0
    %v1940 = vadd.f32 %v1912, %v1939
    %v1941 = vpop.f32.mrf.mxu0
    %v1942 = vadd.f32 %v1914, %v1941
    %1943 = vmatmul.bf16.gmra.mxu0 %v1676
    %v1944 = vpop.f32.mrf.mxu0
    %v1945 = vadd.f32 %v1917, %v1944
    %v1946 = vpop.f32.mrf.mxu0
    %v1947 = vadd.f32 %v1919, %v1946
    %1948 = vmatmul.bf16.gmra.mxu0 %v1680
    %v1949 = vpop.f32.mrf.mxu0
    %v1950 = vadd.f32 %v1922, %v1949
    %v1951 = vpop.f32.mrf.mxu0
    %1952 = vdwg.mxu0
    %1953 = vmatpush.bf16.msra.mxu0 0
    %1954 = vmatpush.bf16.msra.mxu0 0
    %1955 = vmatpush.bf16.msra.mxu0 0
    %1956 = vmatpush.bf16.msra.mxu0 0
    %1957 = vmatpush.bf16.msra.mxu0 0
    %1958 = vmatpush.bf16.msra.mxu0 %v1828
    %1959 = vmatpush.bf16.msra.mxu0 %v1827
    %1960 = vmatpush.bf16.msra.mxu0 %v1826
    %1961 = vmatmul.bf16.gmra.mxu0 %v1858
    %v1962 = vpop.f32.mrf.mxu0
    %v1963 = vadd.f32 %v1935, %v1962
    %v1964 = vpop.f32.mrf.mxu0
    %v1965 = vadd.f32 %v1937, %v1964
    %1966 = vmatmul.bf16.gmra.mxu0 %v1861
    %v1967 = vpop.f32.mrf.mxu0
    %v1968 = vadd.f32 %v1940, %v1967
    %v1969 = vpop.f32.mrf.mxu0
    %v1970 = vadd.f32 %v1942, %v1969
    %1971 = vmatmul.bf16.gmra.mxu0 %v1864
    %v1972 = vpop.f32.mrf.mxu0
    %v1973 = vadd.f32 %v1945, %v1972
    %v1974 = vpop.f32.mrf.mxu0
    %v1975 = vadd.f32 %v1947, %v1974
    %1976 = vmatmul.bf16.gmra.mxu0 %v1867
    %v1977 = vpop.f32.mrf.mxu0
    %v1978 = vadd.f32 %v1950, %v1977
    %v1979 = vpop.f32.mrf.mxu0
    %1980 = vdwg.mxu0
    %v1981 = vmax.f32 %v1963, 0.0
    %v1982 = vmax.f32 %v1965, 0.0
    %v1983 = vmax.f32 %v1968, 0.0
    %v1984 = vmax.f32 %v1970, 0.0
    %v1985 = vmax.f32 %v1973, 0.0
    %v1986 = vmax.f32 %v1975, 0.0
    %v1987 = vmax.f32 %v1978, 0.0
    %1988 = vst [vmem:[%s12] sm:$0xff] %v1981
    %1989 = vst [vmem:[%s12 + $0x8] sm:$0xff] %v1982
    %1990 = vst [vmem:[%s12 + $0x10] sm:$0xff] %v1983
    %1991 = vst [vmem:[%s12 + $0x18] sm:$0xff] %v1984
    %1992 = vst [vmem:[%s12 + $0x20] sm:$0xff] %v1985
    %1993 = vst [vmem:[%s12 + $0x28] sm:$0xff] %v1986
    %1994 = vst [vmem:[%s12 + $0x30] sm:$0x3f] %v1987
    %v1995 = vld [vmem:[%s7] sm:$0xf]
    %v1996 = vld [vmem:[%s7 + $0x4] sm:$0xf]
    %v1997 = vld [vmem:[%s7 + $0x8] sm:$0xf]
    %v1998 = vld [vmem:[%s7 + $0xc] sm:$0xf]
    %v1999 = vld [vmem:[%s7 + $0x10] sm:$0xf]
    %v2000 = vld [vmem:[%s7 + $0x14] sm:$0xf]
    %v2001 = vld [vmem:[%s7 + $0x18] sm:$0xf]
    %v2002 = vld [vmem:[%s7 + $0x1c] sm:$0xf]
    %v2003 = vld [vmem:[%s7 + $0x20] sm:$0xf]
    %v2004 = vld [vmem:[%s8] sm:$0xf]
    %v2005 = vld [vmem:[%s8 + $0x4] sm:$0xf]
    %v2006 = vld [vmem:[%s8 + $0x8] sm:$0xf]
    %v2007 = vld [vmem:[%s8 + $0xc] sm:$0xf]
    %v2008 = vld [vmem:[%s8 + $0x10] sm:$0xf]
    %v2009 = vld [vmem:[%s8 + $0x14] sm:$0xf]
    %v2010 = vld [vmem:[%s8 + $0x18] sm:$0xf]
    %v2011 = vld [vmem:[%s8 + $0x1c] sm:$0xf]
    %v2012 = vld [vmem:[%s9] sm:$0x1]
    %v2014 = vperm.slane %v2012, 0
    %v2025 = vunpack.c.l.b16 %v1995
    %v2026 = vunpack.c.l.b16 %v1996
    %v2027 = vunpack.c.l.b16 %v1997
    %v2028 = vunpack.c.l.b16 %v1998
    %v2029 = vunpack.c.l.b16 %v1999
    %v2030 = vunpack.c.l.b16 %v2000
    %v2031 = vunpack.c.l.b16 %v2001
    %v2032 = vunpack.c.l.b16 %v2002
    %v2033 = vunpack.c.l.b16 %v2003
    %v2034 = vpack.c.b16 %v2026, %v2025
    %v2035 = vpack.c.b16 %v2028, %v2027
    %v2036 = vpack.c.b16 %v2030, %v2029
    %v2037 = vpack.c.b16 %v2032, %v2031
    %v2038 = vpack.c.b16 %v2033, %v2033
    %v2047 = vunpack.c.l.b16 %v2004
    %v2048 = vunpack.c.l.b16 %v2005
    %v2049 = vunpack.c.l.b16 %v2006
    %v2050 = vunpack.c.l.b16 %v2007
    %v2051 = vunpack.c.l.b16 %v2008
    %v2052 = vunpack.c.l.b16 %v2009
    %v2053 = vunpack.c.l.b16 %v2010
    %v2054 = vunpack.c.l.b16 %v2011
    %v2055 = vpack.c.b16 %v2048, %v2047
    %v2056 = vpack.c.b16 %v2050, %v2049
    %v2057 = vpack.c.b16 %v2052, %v2051
    %v2058 = vpack.c.b16 %v2054, %v2053
    %vm2063 = vcmask 523264
    %v2065 = vsel %vm2063, %v2034, 0
    %v2068 = vsel %vm2063, %v2035, 0
    %v2071 = vsel %vm2063, %v2036, 0
    %v2074 = vsel %vm2063, %v2037, 0
    %v2077 = vsel %vm2063, %v2038, 0
    %2079 = vmatpush.bf16.msra.mxu0 0
    %2080 = vmatpush.bf16.msra.mxu0 0
    %2081 = vmatpush.bf16.msra.mxu0 0
    %2082 = vmatpush.bf16.msra.mxu0 0
    %2083 = vmatpush.bf16.msra.mxu0 %v2058
    %2084 = vmatpush.bf16.msra.mxu0 %v2057
    %2085 = vmatpush.bf16.msra.mxu0 %v2056
    %2086 = vmatpush.bf16.msra.mxu0 %v2055
    %2087 = vmatmul.bf16.gmra.mxu0 %v2065
    %v2088 = vpop.f32.mrf.mxu0
    %v2089 = vadd.f32 %v2014, %v2088
    %v2090 = vpop.f32.mrf.mxu0
    %v2091 = vadd.f32 %v2014, %v2090
    %2092 = vmatmul.bf16.gmra.mxu0 %v2068
    %v2093 = vpop.f32.mrf.mxu0
    %v2094 = vadd.f32 %v2014, %v2093
    %v2095 = vpop.f32.mrf.mxu0
    %v2096 = vadd.f32 %v2014, %v2095
    %2097 = vmatmul.bf16.gmra.mxu0 %v2071
    %v2098 = vpop.f32.mrf.mxu0
    %v2099 = vadd.f32 %v2014, %v2098
    %v2100 = vpop.f32.mrf.mxu0
    %v2101 = vadd.f32 %v2014, %v2100
    %2102 = vmatmul.bf16.gmra.mxu0 %v2074
    %v2103 = vpop.f32.mrf.mxu0
    %v2104 = vadd.f32 %v2014, %v2103
    %v2105 = vpop.f32.mrf.mxu0
    %v2106 = vadd.f32 %v2014, %v2105
    %2107 = vmatmul.bf16.gmra.mxu0 %v2077
    %v2108 = vpop.f32.mrf.mxu0
    %v2109 = vadd.f32 %v2014, %v2108
    %v2110 = vpop.f32.mrf.mxu0
    %2111 = vdwg.mxu0
    %v2112 = vtanh.pop %v2089
    %v2113 = vtanh.pop %v2091
    %v2114 = vtanh.pop %v2094
    %v2115 = vtanh.pop %v2096
    %v2116 = vtanh.pop %v2099
    %v2117 = vtanh.pop %v2101
    %v2118 = vtanh.pop %v2104
    %v2119 = vtanh.pop %v2106
    %v2120 = vtanh.pop %v2109
    %v2121 = vtanh.pop %v2112
    %v2122 = vtanh.pop %v2113
    %v2123 = vtanh.pop %v2114
    %v2124 = vtanh.pop %v2115
    %v2125 = vtanh.pop %v2116
    %v2126 = vtanh.pop %v2117
    %v2127 = vtanh.pop %v2118
    %v2128 = vtanh.pop %v2119
    %v2129 = vtanh.pop %v2120
    %2130 = vst [vmem:[%s13] sm:$0xff] %v2121
    %2131 = vst [vmem:[%s13 + $0x8] sm:$0xff] %v2122
    %2132 = vst [vmem:[%s13 + $0x10] sm:$0xff] %v2123
    %2133 = vst [vmem:[%s13 + $0x18] sm:$0xff] %v2124
    %2134 = vst [vmem:[%s13 + $0x20] sm:$0xff] %v2125
    %2135 = vst [vmem:[%s13 + $0x28] sm:$0xff] %v2126
    %2136 = vst [vmem:[%s13 + $0x30] sm:$0xff] %v2127
    %2137 = vst [vmem:[%s13 + $0x38] sm:$0xff] %v2128
    %2138 = vst [vmem:[%s13 + $0x40] sm:$0xff] %v2129
    // Predicated region
    $region42: #{model_tanh_forward.1} parent=1 // pred_check
      _
    $region43: #{model_tanh_forward.1} parent=1 // pred_check_branch
      %2140 = sbr.rel (0) target = $region45
    $region44: #{model_tanh_forward.1} parent=1 // pred_region
      _
    $region45: #{model_tanh_forward.1} parent=1 // pred_fallthru
      _
    // Predicated region
    $region46: #{model_tanh_forward.1} parent=1 // pred_check
      _
    $region47: #{model_tanh_forward.1} parent=1 // pred_check_branch
      %2142 = sbr.rel (0) target = $region49
    $region48: #{model_tanh_forward.1} parent=1 // pred_region
      %2144 = vsyncadd [#allocation3], 0
      %s2145 = sshll.u32 [#allocation2], 4
      %s2146 = int_to_ptr.vmem [resolvable:$true] %s2145
      %s2147 = sshll.u32 %s11, 4
      %s2148 = int_to_ptr.hbm [resolvable:$true] %s2147
      %2153 = dma.vmem_to_hbm [thread:$0]  %s2146, 2048, %s2148, [#allocation3], 128, 128, 8
    $region49: #{model_tanh_forward.1} parent=1 // pred_fallthru
      _
    // Predicated region
    $region50: #{model_tanh_forward.1} parent=1 // pred_check
      _
    $region51: #{model_tanh_forward.1} parent=1 // pred_check_branch
      %2155 = sbr.rel (0) target = $region53
    $region52: #{model_tanh_forward.1} parent=1 // pred_region
      _
    $region53: #{model_tanh_forward.1} parent=1 // pred_fallthru
      _
    // Predicated region
    $region54: #{model_tanh_forward.1} parent=1 // pred_check
      _
    $region55: #{model_tanh_forward.1} parent=1 // pred_check_branch
      %2157 = sbr.rel (0) target = $region57
    $region56: #{model_tanh_forward.1} parent=1 // pred_region
      _
    $region57: #{model_tanh_forward.1} parent=1 // pred_fallthru
      _
    // Predicated region
    $region58: #{model_tanh_forward.1} parent=1 // pred_check
      _
    $region59: #{model_tanh_forward.1} parent=1 // pred_check_branch
      %2159 = sbr.rel (0) target = $region61
    $region60: #{model_tanh_forward.1} parent=1 // pred_region
      _
    $region61: #{model_tanh_forward.1} parent=1 // pred_fallthru
      _
    // Predicated region
    $region62: #{model_tanh_forward.1} parent=1 // pred_check
      _
    $region63: #{model_tanh_forward.1} parent=1 // pred_check_branch
      %2161 = sbr.rel (0) target = $region65
    $region64: #{model_tanh_forward.1} parent=1 // pred_region
      %2163 = dma.done [#allocation3], 2048
    $region65: #{model_tanh_forward.1} parent=1 // pred_fallthru
      _
    // Predicated region
    $region66: #{model_tanh_forward.1} parent=1 // pred_check
      _
    $region67: #{model_tanh_forward.1} parent=1 // pred_check_branch
      %2165 = sbr.rel (0) target = $region69
    $region68: #{model_tanh_forward.1} parent=1 // pred_region
      _
    $region69: #{model_tanh_forward.1} parent=1 // pred_fallthru
      _
    // Predicated region
    $region70: #{model_tanh_forward.1} parent=1 // pred_check
      _
    $region71: #{model_tanh_forward.1} parent=1 // pred_check_branch
      %2167 = sbr.rel (0) target = $region73
    $region72: #{model_tanh_forward.1} parent=1 // pred_region
      _
    $region73: #{model_tanh_forward.1} parent=1 // pred_fallthru
      _
    %2168 = vsyncpa [#allocation3], 1

// kernel: model_tanh_forward.1
$region0: #{model_tanh_forward.1}
  #allocation0 [shape = 'u32[]', space=smem, size = 0x4, offset = 0x4, fixed_abs, tag = 'smem constant byte address 0x4 - core index']
  #allocation1 [shape = 'u32[72,128]{1,0:T(1,128)}', space=vmem, size = 0x9000, scoped, tag = 'internal scratch']
  %s0 = inlined_call_operand.vmem [shape: f32[20,2], index: 0, kind: input, shape index: {}]
  %s1 = inlined_call_operand.vmem [shape: f32[3,256], index: 1, kind: input, shape index: {}]
  %s2 = inlined_call_operand.vmem [shape: f32[1,256], index: 2, kind: input, shape index: {}]
  %s3 = inlined_call_operand.vmem [shape: bf16[128,144], index: 3, kind: input, shape index: {}]
  %s4 = inlined_call_operand.vmem [shape: bf16[144,128], index: 4, kind: input, shape index: {}]
  %s5 = inlined_call_operand.vmem [shape: bf16[54,432], index: 5, kind: input, shape index: {}]
  %s6 = inlined_call_operand.vmem [shape: bf16[432,128], index: 6, kind: input, shape index: {}]
  %s7 = inlined_call_operand.vmem [shape: bf16[72,64], index: 7, kind: input, shape index: {}]
  %s8 = inlined_call_operand.vmem [shape: bf16[64,128], index: 8, kind: input, shape index: {}]
  %s9 = inlined_call_operand.vmem [shape: f32[1,128], index: 9, kind: input, shape index: {}]
  %s10 = inlined_call_operand.vmem [shape: f32[19,256], index: 10, kind: output, shape index: {0}]
  %s11 = inlined_call_operand.hbm [shape: f32[128,128], index: 11, kind: output, shape index: {1}]
  %s12 = inlined_call_operand.vmem [shape: f32[54,128], index: 12, kind: output, shape index: {2}]
  %s13 = inlined_call_operand.vmem [shape: f32[72,128], index: 13, kind: output, shape index: {3}]
  %14 = xla_tuple %s10, %s11, %s12, %s13
  %s15 = sld [smem:[#allocation0]]
  $region74: #{model_tanh_forward.1} parent=0
    _
  %s17 = ssub.s32 1, %s15
  %s18 = scalar_select 0, %s17, %s15
  $region1: #{model_tanh_forward.1} parent=0
    #allocation2 [shape = 'u8[65536]{0}', space=vmem, size = 0x10000, scoped, tag = 'output window, operand 1, single buffered']
    #allocation3 [shape = 's32[1]{0}', space=sflag, size = 0x4, scoped, tag = 'scoped memory for model_tanh_forward.1']
    %19 = vsyncpa [#allocation3], 0
    // Predicated region
    $region2: #{model_tanh_forward.1} parent=1 // pred_check
      _
    $region3: #{model_tanh_forward.1} parent=1 // pred_check_branch
      %21 = sbr.rel (0) target = $region5
    $region4: #{model_tanh_forward.1} parent=1 // pred_region
      _
    $region5: #{model_tanh_forward.1} parent=1 // pred_fallthru
      _
    // Predicated region
    $region6: #{model_tanh_forward.1} parent=1 // pred_check
      _
    $region7: #{model_tanh_forward.1} parent=1 // pred_check_branch
      %23 = sbr.rel (0) target = $region9
    $region8: #{model_tanh_forward.1} parent=1 // pred_region
      _
    $region9: #{model_tanh_forward.1} parent=1 // pred_fallthru
      _
    // Predicated region
    $region10: #{model_tanh_forward.1} parent=1 // pred_check
      _
    $region11: #{model_tanh_forward.1} parent=1 // pred_check_branch
      %25 = sbr.rel (0) target = $region13
    $region12: #{model_tanh_forward.1} parent=1 // pred_region
      _
    $region13: #{model_tanh_forward.1} parent=1 // pred_fallthru
      _
    // Predicated region
    $region14: #{model_tanh_forward.1} parent=1 // pred_check
      _
    $region15: #{model_tanh_forward.1} parent=1 // pred_check_branch
      %27 = sbr.rel (0) target = $region17
    $region16: #{model_tanh_forward.1} parent=1 // pred_region
      _
    $region17: #{model_tanh_forward.1} parent=1 // pred_fallthru
      _
    // Predicated region
    $region18: #{model_tanh_forward.1} parent=1 // pred_check
      _
    $region19: #{model_tanh_forward.1} parent=1 // pred_check_branch
      %29 = sbr.rel (0) target = $region21
    $region20: #{model_tanh_forward.1} parent=1 // pred_region
      _
    $region21: #{model_tanh_forward.1} parent=1 // pred_fallthru
      _
    // Predicated region
    $region22: #{model_tanh_forward.1} parent=1 // pred_check
      _
    $region23: #{model_tanh_forward.1} parent=1 // pred_check_branch
      %31 = sbr.rel (0) target = $region25
    $region24: #{model_tanh_forward.1} parent=1 // pred_region
      _
    $region25: #{model_tanh_forward.1} parent=1 // pred_fallthru
      _
    // Predicated region
    $region26: #{model_tanh_forward.1} parent=1 // pred_check
      _
    $region27: #{model_tanh_forward.1} parent=1 // pred_check_branch
      %33 = sbr.rel (0) target = $region29
    $region28: #{model_tanh_forward.1} parent=1 // pred_region
      _
    $region29: #{model_tanh_forward.1} parent=1 // pred_fallthru
      _
    // Predicated region
    $region30: #{model_tanh_forward.1} parent=1 // pred_check
      _
    $region31: #{model_tanh_forward.1} parent=1 // pred_check_branch
      %35 = sbr.rel (0) target = $region33
    $region32: #{model_tanh_forward.1} parent=1 // pred_region
      _
    $region33: #{model_tanh_forward.1} parent=1 // pred_fallthru
      _
    // Predicated region
    $region34: #{model_tanh_forward.1} parent=1 // pred_check
      _
    $region35: #{model_tanh_forward.1} parent=1 // pred_check_branch
      %37 = sbr.rel (0) target = $region37
    $region36: #{model_tanh_forward.1} parent=1 // pred_region
      _
    $region37: #{model_tanh_forward.1} parent=1 // pred_fallthru
      _
    // Predicated region
    $region38: #{model_tanh_forward.1} parent=1 // pred_check
      _
    $region39: #{model_tanh_forward.1} parent=1 // pred_check_branch
      %39 = sbr.rel (0) target = $region41
    $region40: #{model_tanh_forward.1} parent=1 // pred_region
      _
    $region41: #{model_tanh_forward.1} parent=1 // pred_fallthru
      _
    %v41 = vld [vmem:[%s0] sm:$0xff]
    %v42 = vld [vmem:[%s0 + $0x8] sm:$0xff]
    %v43 = vld [vmem:[%s0 + $0x10] sm:$0xf]
    %v44 = vld [vmem:[%s1] sm:$0x77]
    %46 = vset.pattern.permute.xlu0 0
    %47 = vperm.xlu0 %46, %v41
    %v48 = vpop.permute.xlu0 %47
    %51 = vset.pattern.permute.xlu0 0
    %52 = vperm.xlu0 %51, %v42
    %v53 = vpop.permute.xlu0 %52
    %56 = vset.pattern.permute.xlu0 0
    %57 = vperm.xlu0 %56, %v43
    %v58 = vpop.permute.xlu0 %57
    %v61 = vperm.slane %v44, 0
    %v62 = vperm.slane %v44, 4
    %v65 = vperm.slane %v61, 0
    %v66 = vperm.slane %v62, 0
    %v67 = vmul.f32 %v48, %v65
    %v68 = vmul.f32 %v48, %v66
    %v69 = vmul.f32 %v53, %v65
    %v70 = vmul.f32 %v53, %v66
    %v71 = vmul.f32 %v58, %v65
    %v72 = vmul.f32 %v58, %v66
    %73 = vset.pattern.permute.xlu0 1
    %74 = vperm.xlu0 %73, %v41
    %v75 = vpop.permute.xlu0 %74
    %77 = vset.pattern.permute.xlu0 1
    %78 = vperm.xlu0 %77, %v42
    %v79 = vpop.permute.xlu0 %78
    %81 = vset.pattern.permute.xlu0 1
    %82 = vperm.xlu0 %81, %v43
    %v83 = vpop.permute.xlu0 %82
    %v85 = vperm.slane %v44, 1
    %v86 = vperm.slane %v44, 5
    %v89 = vperm.slane %v85, 1
    %v90 = vperm.slane %v86, 1
    %v91 = vmul.f32 %v75, %v89
    %v92 = vmul.f32 %v75, %v90
    %v93 = vmul.f32 %v79, %v89
    %v94 = vmul.f32 %v79, %v90
    %v95 = vmul.f32 %v83, %v89
    %v96 = vmul.f32 %v83, %v90
    %v97 = vadd.f32 %v67, %v91
    %v98 = vadd.f32 %v68, %v92
    %v99 = vadd.f32 %v69, %v93
    %v100 = vadd.f32 %v70, %v94
    %v101 = vadd.f32 %v71, %v95
    %v102 = vadd.f32 %v72, %v96
    %v103 = vperm.slane %v44, 2
    %v104 = vperm.slane %v44, 6
    %v107 = vperm.slane %v103, 2
    %v108 = vperm.slane %v104, 2
    %v109 = vmul.f32 %v48, %v107
    %v110 = vmul.f32 %v48, %v108
    %v111 = vmul.f32 %v53, %v107
    %v112 = vmul.f32 %v53, %v108
    %v113 = vmul.f32 %v58, %v107
    %v114 = vmul.f32 %v58, %v108
    %vm121 = vcmask 1046528
    %v122 = vrot.slane %v109, 1
    %v123 = vrot.slane %v111, 1
    %v124 = vsel %vm121, %v122, %v123
    %v125 = vrot.slane %v110, 1
    %v126 = vrot.slane %v112, 1
    %v127 = vsel %vm121, %v125, %v126
    %v128 = vrot.slane %v113, 1
    %v129 = vsel %vm121, %v123, %v128
    %v130 = vrot.slane %v114, 1
    %v131 = vsel %vm121, %v126, %v130
    %v138 = vadd.f32 %v97, %v124
    %v139 = vadd.f32 %v98, %v127
    %v140 = vadd.f32 %v99, %v129
    %v141 = vadd.f32 %v100, %v131
    %v142 = vadd.f32 %v101, %v128
    %v143 = vadd.f32 %v102, %v130
    %v144 = vld [vmem:[%s2] sm:$0x3]
    %v146 = vperm.slane %v144, 0
    %v147 = vperm.slane %v144, 1
    %v150 = vadd.f32 %v138, %v146
    %v151 = vadd.f32 %v139, %v147
    %v152 = vadd.f32 %v140, %v146
    %v153 = vadd.f32 %v141, %v147
    %v154 = vadd.f32 %v142, %v146
    %v155 = vadd.f32 %v143, %v147
    %v156 = vtanh.pop %v150
    %v157 = vtanh.pop %v151
    %v158 = vtanh.pop %v152
    %v159 = vtanh.pop %v153
    %v160 = vtanh.pop %v154
    %v161 = vtanh.pop %v155
    %162 = vst [vmem:[%s10] sm:$0xff] %v156
    %163 = vst [vmem:[%s10 + $0x8] sm:$0xff] %v157
    %164 = vst [vmem:[%s10 + $0x10] sm:$0xff] %v158
    %165 = vst [vmem:[%s10 + $0x18] sm:$0xff] %v159
    %166 = vst [vmem:[%s10 + $0x20] sm:$0x7] %v160
    %167 = vst [vmem:[%s10 + $0x28] sm:$0x7] %v161
    %v168 = vld [vmem:[%s3] sm:$0xff]
    %v169 = vld [vmem:[%s3 + $0x8] sm:$0xff]
    %v170 = vld [vmem:[%s3 + $0x10] sm:$0xff]
    %v171 = vld [vmem:[%s3 + $0x18] sm:$0xff]
    %v172 = vld [vmem:[%s3 + $0x20] sm:$0xff]
    %v173 = vld [vmem:[%s3 + $0x28] sm:$0xff]
    %v174 = vld [vmem:[%s3 + $0x30] sm:$0xff]
    %v175 = vld [vmem:[%s3 + $0x38] sm:$0xff]
    %v176 = vld [vmem:[%s3 + $0x40] sm:$0xff]
    %v177 = vld [vmem:[%s3 + $0x48] sm:$0xff]
    %v178 = vld [vmem:[%s3 + $0x50] sm:$0xff]
    %v179 = vld [vmem:[%s3 + $0x58] sm:$0xff]
    %v180 = vld [vmem:[%s3 + $0x60] sm:$0xff]
    %v181 = vld [vmem:[%s3 + $0x68] sm:$0xff]
    %v182 = vld [vmem:[%s3 + $0x70] sm:$0xff]
    %v183 = vld [vmem:[%s3 + $0x78] sm:$0xff]
    %v184 = vld [vmem:[%s4] sm:$0xf]
    %v185 = vld [vmem:[%s4 + $0x4] sm:$0xf]
    %v186 = vld [vmem:[%s4 + $0x8] sm:$0xf]
    %v187 = vld [vmem:[%s4 + $0xc] sm:$0xf]
    %v188 = vld [vmem:[%s4 + $0x10] sm:$0xf]
    %v189 = vld [vmem:[%s4 + $0x14] sm:$0xf]
    %v190 = vld [vmem:[%s4 + $0x18] sm:$0xf]
    %v191 = vld [vmem:[%s4 + $0x1c] sm:$0xf]
    %v192 = vld [vmem:[%s4 + $0x20] sm:$0xf]
    %v193 = vld [vmem:[%s4 + $0x24] sm:$0xf]
    %v194 = vld [vmem:[%s4 + $0x28] sm:$0xf]
    %v195 = vld [vmem:[%s4 + $0x2c] sm:$0xf]
    %v196 = vld [vmem:[%s4 + $0x30] sm:$0xf]
    %v197 = vld [vmem:[%s4 + $0x34] sm:$0xf]
    %v198 = vld [vmem:[%s4 + $0x38] sm:$0xf]
    %v199 = vld [vmem:[%s4 + $0x3c] sm:$0xf]
    %v200 = vld [vmem:[%s4 + $0x40] sm:$0xf]
    %v201 = vld [vmem:[%s4 + $0x44] sm:$0xf]
    %v218 = vunpack.c.l.b16 %v168
    %v219 = vunpack.c.h.b16 %v168
    %v220 = vunpack.c.l.b16 %v169
    %v221 = vunpack.c.h.b16 %v169
    %v222 = vunpack.c.l.b16 %v170
    %v223 = vunpack.c.h.b16 %v170
    %v224 = vunpack.c.l.b16 %v171
    %v225 = vunpack.c.h.b16 %v171
    %v226 = vunpack.c.l.b16 %v172
    %v227 = vunpack.c.h.b16 %v172
    %v228 = vunpack.c.l.b16 %v173
    %v229 = vunpack.c.h.b16 %v173
    %v230 = vunpack.c.l.b16 %v174
    %v231 = vunpack.c.h.b16 %v174
    %v232 = vunpack.c.l.b16 %v175
    %v233 = vunpack.c.h.b16 %v175
    %v234 = vunpack.c.l.b16 %v176
    %v235 = vunpack.c.h.b16 %v176
    %v236 = vunpack.c.l.b16 %v177
    %v237 = vunpack.c.h.b16 %v177
    %v238 = vunpack.c.l.b16 %v178
    %v239 = vunpack.c.h.b16 %v178
    %v240 = vunpack.c.l.b16 %v179
    %v241 = vunpack.c.h.b16 %v179
    %v242 = vunpack.c.l.b16 %v180
    %v243 = vunpack.c.h.b16 %v180
    %v244 = vunpack.c.l.b16 %v181
    %v245 = vunpack.c.h.b16 %v181
    %v246 = vunpack.c.l.b16 %v182
    %v247 = vunpack.c.h.b16 %v182
    %v248 = vunpack.c.l.b16 %v183
    %v249 = vunpack.c.h.b16 %v183
    %v250 = vpack.c.b16 %v220, %v218
    %v251 = vpack.c.b16 %v221, %v219
    %v252 = vpack.c.b16 %v224, %v222
    %v253 = vpack.c.b16 %v225, %v223
    %v254 = vpack.c.b16 %v228, %v226
    %v255 = vpack.c.b16 %v229, %v227
    %v256 = vpack.c.b16 %v232, %v230
    %v257 = vpack.c.b16 %v233, %v231
    %v258 = vpack.c.b16 %v236, %v234
    %v259 = vpack.c.b16 %v237, %v235
    %v260 = vpack.c.b16 %v240, %v238
    %v261 = vpack.c.b16 %v241, %v239
    %v262 = vpack.c.b16 %v244, %v242
    %v263 = vpack.c.b16 %v245, %v243
    %v264 = vpack.c.b16 %v248, %v246
    %v265 = vpack.c.b16 %v249, %v247
    %v292 = vunpack.c.l.b16 %v184
    %v293 = vunpack.c.l.b16 %v185
    %v294 = vunpack.c.l.b16 %v186
    %v295 = vunpack.c.l.b16 %v187
    %v296 = vunpack.c.l.b16 %v188
    %v297 = vunpack.c.l.b16 %v189
    %v298 = vunpack.c.l.b16 %v190
    %v299 = vunpack.c.l.b16 %v191
    %v300 = vunpack.c.l.b16 %v192
    %v301 = vunpack.c.l.b16 %v193
    %v302 = vunpack.c.l.b16 %v194
    %v303 = vunpack.c.l.b16 %v195
    %v304 = vunpack.c.l.b16 %v196
    %v305 = vunpack.c.l.b16 %v197
    %v306 = vunpack.c.l.b16 %v198
    %v307 = vunpack.c.l.b16 %v199
    %v308 = vunpack.c.l.b16 %v200
    %v309 = vunpack.c.l.b16 %v201
    %v310 = vpack.c.b16 %v293, %v292
    %v311 = vpack.c.b16 %v295, %v294
    %v312 = vpack.c.b16 %v297, %v296
    %v313 = vpack.c.b16 %v299, %v298
    %v314 = vpack.c.b16 %v301, %v300
    %v315 = vpack.c.b16 %v303, %v302
    %v316 = vpack.c.b16 %v305, %v304
    %v317 = vpack.c.b16 %v307, %v306
    %v318 = vpack.c.b16 %v309, %v308
    %vm328 = vcmask 130048
    %v330 = vsel %vm328, %v251, 0
    %v333 = vsel %vm328, %v253, 0
    %v336 = vsel %vm328, %v255, 0
    %v339 = vsel %vm328, %v257, 0
    %v342 = vsel %vm328, %v259, 0
    %v345 = vsel %vm328, %v261, 0
    %v348 = vsel %vm328, %v263, 0
    %v351 = vsel %vm328, %v265, 0
    %353 = vmatpush.bf16.msra.mxu0 %v317
    %354 = vmatpush.bf16.msra.mxu0 %v316
    %355 = vmatpush.bf16.msra.mxu0 %v315
    %356 = vmatpush.bf16.msra.mxu0 %v314
    %357 = vmatpush.bf16.msra.mxu0 %v313
    %358 = vmatpush.bf16.msra.mxu0 %v312
    %359 = vmatpush.bf16.msra.mxu0 %v311
    %360 = vmatpush.bf16.msra.mxu0 %v310
    %361 = vmatmul.bf16.gmra.mxu0 %v250
    %v362 = vpop.f32.mrf.mxu0
    %v363 = vadd.f32 0.0, %v362
    %v364 = vpop.f32.mrf.mxu0
    %v365 = vadd.f32 0.0, %v364
    %366 = vmatmul.bf16.gmra.mxu0 %v252
    %v367 = vpop.f32.mrf.mxu0
    %v368 = vadd.f32 0.0, %v367
    %v369 = vpop.f32.mrf.mxu0
    %v370 = vadd.f32 0.0, %v369
    %371 = vmatmul.bf16.gmra.mxu0 %v254
    %v372 = vpop.f32.mrf.mxu0
    %v373 = vadd.f32 0.0, %v372
    %v374 = vpop.f32.mrf.mxu0
    %v375 = vadd.f32 0.0, %v374
    %376 = vmatmul.bf16.gmra.mxu0 %v256
    %v377 = vpop.f32.mrf.mxu0
    %v378 = vadd.f32 0.0, %v377
    %v379 = vpop.f32.mrf.mxu0
    %v380 = vadd.f32 0.0, %v379
    %381 = vmatmul.bf16.gmra.mxu0 %v258
    %v382 = vpop.f32.mrf.mxu0
    %v383 = vadd.f32 0.0, %v382
    %v384 = vpop.f32.mrf.mxu0
    %v385 = vadd.f32 0.0, %v384
    %386 = vmatmul.bf16.gmra.mxu0 %v260
    %v387 = vpop.f32.mrf.mxu0
    %v388 = vadd.f32 0.0, %v387
    %v389 = vpop.f32.mrf.mxu0
    %v390 = vadd.f32 0.0, %v389
    %391 = vmatmul.bf16.gmra.mxu0 %v262
    %v392 = vpop.f32.mrf.mxu0
    %v393 = vadd.f32 0.0, %v392
    %v394 = vpop.f32.mrf.mxu0
    %v395 = vadd.f32 0.0, %v394
    %396 = vmatmul.bf16.gmra.mxu0 %v264
    %v397 = vpop.f32.mrf.mxu0
    %v398 = vadd.f32 0.0, %v397
    %v399 = vpop.f32.mrf.mxu0
    %v400 = vadd.f32 0.0, %v399
    %401 = vdwg.mxu0
    %402 = vmatpush.bf16.msra.mxu0 0
    %403 = vmatpush.bf16.msra.mxu0 0
    %404 = vmatpush.bf16.msra.mxu0 0
    %405 = vmatpush.bf16.msra.mxu0 0
    %406 = vmatpush.bf16.msra.mxu0 0
    %407 = vmatpush.bf16.msra.mxu0 0
    %408 = vmatpush.bf16.msra.mxu0 0
    %409 = vmatpush.bf16.msra.mxu0 %v318
    %410 = vmatmul.bf16.gmra.mxu0 %v330
    %v411 = vpop.f32.mrf.mxu0
    %v412 = vadd.f32 %v363, %v411
    %v413 = vpop.f32.mrf.mxu0
    %v414 = vadd.f32 %v365, %v413
    %415 = vmatmul.bf16.gmra.mxu0 %v333
    %v416 = vpop.f32.mrf.mxu0
    %v417 = vadd.f32 %v368, %v416
    %v418 = vpop.f32.mrf.mxu0
    %v419 = vadd.f32 %v370, %v418
    %420 = vmatmul.bf16.gmra.mxu0 %v336
    %v421 = vpop.f32.mrf.mxu0
    %v422 = vadd.f32 %v373, %v421
    %v423 = vpop.f32.mrf.mxu0
    %v424 = vadd.f32 %v375, %v423
    %425 = vmatmul.bf16.gmra.mxu0 %v339
    %v426 = vpop.f32.mrf.mxu0
    %v427 = vadd.f32 %v378, %v426
    %v428 = vpop.f32.mrf.mxu0
    %v429 = vadd.f32 %v380, %v428
    %430 = vmatmul.bf16.gmra.mxu0 %v342
    %v431 = vpop.f32.mrf.mxu0
    %v432 = vadd.f32 %v383, %v431
    %v433 = vpop.f32.mrf.mxu0
    %v434 = vadd.f32 %v385, %v433
    %435 = vmatmul.bf16.gmra.mxu0 %v345
    %v436 = vpop.f32.mrf.mxu0
    %v437 = vadd.f32 %v388, %v436
    %v438 = vpop.f32.mrf.mxu0
    %v439 = vadd.f32 %v390, %v438
    %440 = vmatmul.bf16.gmra.mxu0 %v348
    %v441 = vpop.f32.mrf.mxu0
    %v442 = vadd.f32 %v393, %v441
    %v443 = vpop.f32.mrf.mxu0
    %v444 = vadd.f32 %v395, %v443
    %445 = vmatmul.bf16.gmra.mxu0 %v351
    %v446 = vpop.f32.mrf.mxu0
    %v447 = vadd.f32 %v398, %v446
    %v448 = vpop.f32.mrf.mxu0
    %v449 = vadd.f32 %v400, %v448
    %450 = vdwg.mxu0
    %v451 = vxor.u32 %v412, 2147483648
    %v452 = vxor.u32 %v414, 2147483648
    %v453 = vxor.u32 %v417, 2147483648
    %v454 = vxor.u32 %v419, 2147483648
    %v455 = vxor.u32 %v422, 2147483648
    %v456 = vxor.u32 %v424, 2147483648
    %v457 = vxor.u32 %v427, 2147483648
    %v458 = vxor.u32 %v429, 2147483648
    %v459 = vxor.u32 %v432, 2147483648
    %v460 = vxor.u32 %v434, 2147483648
    %v461 = vxor.u32 %v437, 2147483648
    %v462 = vxor.u32 %v439, 2147483648
    %v463 = vxor.u32 %v442, 2147483648
    %v464 = vxor.u32 %v444, 2147483648
    %v465 = vxor.u32 %v447, 2147483648
    %v466 = vxor.u32 %v449, 2147483648
    %v467 = vmul.f32 %v451, 1.442695
    %v468 = vpow.pop %v467
    %v469 = vmul.f32 %v452, 1.442695
    %v470 = vpow.pop %v469
    %v471 = vmul.f32 %v453, 1.442695
    %v472 = vpow.pop %v471
    %v473 = vmul.f32 %v454, 1.442695
    %v474 = vpow.pop %v473
    %v475 = vmul.f32 %v455, 1.442695
    %v476 = vpow.pop %v475
    %v477 = vmul.f32 %v456, 1.442695
    %v478 = vpow.pop %v477
    %v479 = vmul.f32 %v457, 1.442695
    %v480 = vpow.pop %v479
    %v481 = vmul.f32 %v458, 1.442695
    %v482 = vpow.pop %v481
    %v483 = vmul.f32 %v459, 1.442695
    %v484 = vpow.pop %v483
    %v485 = vmul.f32 %v460, 1.442695
    %v486 = vpow.pop %v485
    %v487 = vmul.f32 %v461, 1.442695
    %v488 = vpow.pop %v487
    %v489 = vmul.f32 %v462, 1.442695
    %v490 = vpow.pop %v489
    %v491 = vmul.f32 %v463, 1.442695
    %v492 = vpow.pop %v491
    %v493 = vmul.f32 %v464, 1.442695
    %v494 = vpow.pop %v493
    %v495 = vmul.f32 %v465, 1.442695
    %v496 = vpow.pop %v495
    %v497 = vmul.f32 %v466, 1.442695
    %v498 = vpow.pop %v497
    %v499 = vadd.f32 %v468, 1.0
    %v500 = vadd.f32 %v470, 1.0
    %v501 = vadd.f32 %v472, 1.0
    %v502 = vadd.f32 %v474, 1.0
    %v503 = vadd.f32 %v476, 1.0
    %v504 = vadd.f32 %v478, 1.0
    %v505 = vadd.f32 %v480, 1.0
    %v506 = vadd.f32 %v482, 1.0
    %v507 = vadd.f32 %v484, 1.0
    %v508 = vadd.f32 %v486, 1.0
    %v509 = vadd.f32 %v488, 1.0
    %v510 = vadd.f32 %v490, 1.0
    %v511 = vadd.f32 %v492, 1.0
    %v512 = vadd.f32 %v494, 1.0
    %v513 = vadd.f32 %v496, 1.0
    %v514 = vadd.f32 %v498, 1.0
    %v515 = vrcp.pop %v499
    %v516 = vmul.f32 %v499, %v515
    %v517 = vsub.f32 1.0, %v516
    %v518 = vmul.f32 %v515, %v517
    %v519 = vadd.f32 %v515, %v518
    %vm520 = vweird.f32 %v499
    %vm521 = vweird.f32 %v515
    %vm522 = vmor %vm520, %vm521
    %v523 = vsel %vm522, %v515, %v519
    %v524 = vand.u32 2147483647, %v499
    %vm525 = vcmp.eq.f32.partialorder %v524, 8.507059e+37
    %v526 = vand.u32 %v499, 2147483648
    %v527 = vor.u32 1.1754944e-38, %v526
    %v528 = vsel %vm525, %v527, %v523
    %v529 = vmul.f32 1.0, %v528
    %v530 = vrcp.pop %v500
    %v531 = vmul.f32 %v500, %v530
    %v532 = vsub.f32 1.0, %v531
    %v533 = vmul.f32 %v530, %v532
    %v534 = vadd.f32 %v530, %v533
    %vm535 = vweird.f32 %v500
    %vm536 = vweird.f32 %v530
    %vm537 = vmor %vm535, %vm536
    %v538 = vsel %vm537, %v530, %v534
    %v539 = vand.u32 2147483647, %v500
    %vm540 = vcmp.eq.f32.partialorder %v539, 8.507059e+37
    %v541 = vand.u32 %v500, 2147483648
    %v542 = vor.u32 1.1754944e-38, %v541
    %v543 = vsel %vm540, %v542, %v538
    %v544 = vmul.f32 1.0, %v543
    %v545 = vrcp.pop %v501
    %v546 = vmul.f32 %v501, %v545
    %v547 = vsub.f32 1.0, %v546
    %v548 = vmul.f32 %v545, %v547
    %v549 = vadd.f32 %v545, %v548
    %vm550 = vweird.f32 %v501
    %vm551 = vweird.f32 %v545
    %vm552 = vmor %vm550, %vm551
    %v553 = vsel %vm552, %v545, %v549
    %v554 = vand.u32 2147483647, %v501
    %vm555 = vcmp.eq.f32.partialorder %v554, 8.507059e+37
    %v556 = vand.u32 %v501, 2147483648
    %v557 = vor.u32 1.1754944e-38, %v556
    %v558 = vsel %vm555, %v557, %v553
    %v559 = vmul.f32 1.0, %v558
    %v560 = vrcp.pop %v502
    %v561 = vmul.f32 %v502, %v560
    %v562 = vsub.f32 1.0, %v561
    %v563 = vmul.f32 %v560, %v562
    %v564 = vadd.f32 %v560, %v563
    %vm565 = vweird.f32 %v502
    %vm566 = vweird.f32 %v560
    %vm567 = vmor %vm565, %vm566
    %v568 = vsel %vm567, %v560, %v564
    %v569 = vand.u32 2147483647, %v502
    %vm570 = vcmp.eq.f32.partialorder %v569, 8.507059e+37
    %v571 = vand.u32 %v502, 2147483648
    %v572 = vor.u32 1.1754944e-38, %v571
    %v573 = vsel %vm570, %v572, %v568
    %v574 = vmul.f32 1.0, %v573
    %v575 = vrcp.pop %v503
    %v576 = vmul.f32 %v503, %v575
    %v577 = vsub.f32 1.0, %v576
    %v578 = vmul.f32 %v575, %v577
    %v579 = vadd.f32 %v575, %v578
    %vm580 = vweird.f32 %v503
    %vm581 = vweird.f32 %v575
    %vm582 = vmor %vm580, %vm581
    %v583 = vsel %vm582, %v575, %v579
    %v584 = vand.u32 2147483647, %v503
    %vm585 = vcmp.eq.f32.partialorder %v584, 8.507059e+37
    %v586 = vand.u32 %v503, 2147483648
    %v587 = vor.u32 1.1754944e-38, %v586
    %v588 = vsel %vm585, %v587, %v583
    %v589 = vmul.f32 1.0, %v588
    %v590 = vrcp.pop %v504
    %v591 = vmul.f32 %v504, %v590
    %v592 = vsub.f32 1.0, %v591
    %v593 = vmul.f32 %v590, %v592
    %v594 = vadd.f32 %v590, %v593
    %vm595 = vweird.f32 %v504
    %vm596 = vweird.f32 %v590
    %vm597 = vmor %vm595, %vm596
    %v598 = vsel %vm597, %v590, %v594
    %v599 = vand.u32 2147483647, %v504
    %vm600 = vcmp.eq.f32.partialorder %v599, 8.507059e+37
    %v601 = vand.u32 %v504, 2147483648
    %v602 = vor.u32 1.1754944e-38, %v601
    %v603 = vsel %vm600, %v602, %v598
    %v604 = vmul.f32 1.0, %v603
    %v605 = vrcp.pop %v505
    %v606 = vmul.f32 %v505, %v605
    %v607 = vsub.f32 1.0, %v606
    %v608 = vmul.f32 %v605, %v607
    %v609 = vadd.f32 %v605, %v608
    %vm610 = vweird.f32 %v505
    %vm611 = vweird.f32 %v605
    %vm612 = vmor %vm610, %vm611
    %v613 = vsel %vm612, %v605, %v609
    %v614 = vand.u32 2147483647, %v505
    %vm615 = vcmp.eq.f32.partialorder %v614, 8.507059e+37
    %v616 = vand.u32 %v505, 2147483648
    %v617 = vor.u32 1.1754944e-38, %v616
    %v618 = vsel %vm615, %v617, %v613
    %v619 = vmul.f32 1.0, %v618
    %v620 = vrcp.pop %v506
    %v621 = vmul.f32 %v506, %v620
    %v622 = vsub.f32 1.0, %v621
    %v623 = vmul.f32 %v620, %v622
    %v624 = vadd.f32 %v620, %v623
    %vm625 = vweird.f32 %v506
    %vm626 = vweird.f32 %v620
    %vm627 = vmor %vm625, %vm626
    %v628 = vsel %vm627, %v620, %v624
    %v629 = vand.u32 2147483647, %v506
    %vm630 = vcmp.eq.f32.partialorder %v629, 8.507059e+37
    %v631 = vand.u32 %v506, 2147483648
    %v632 = vor.u32 1.1754944e-38, %v631
    %v633 = vsel %vm630, %v632, %v628
    %v634 = vmul.f32 1.0, %v633
    %v635 = vrcp.pop %v507
    %v636 = vmul.f32 %v507, %v635
    %v637 = vsub.f32 1.0, %v636
    %v638 = vmul.f32 %v635, %v637
    %v639 = vadd.f32 %v635, %v638
    %vm640 = vweird.f32 %v507
    %vm641 = vweird.f32 %v635
    %vm642 = vmor %vm640, %vm641
    %v643 = vsel %vm642, %v635, %v639
    %v644 = vand.u32 2147483647, %v507
    %vm645 = vcmp.eq.f32.partialorder %v644, 8.507059e+37
    %v646 = vand.u32 %v507, 2147483648
    %v647 = vor.u32 1.1754944e-38, %v646
    %v648 = vsel %vm645, %v647, %v643
    %v649 = vmul.f32 1.0, %v648
    %v650 = vrcp.pop %v508
    %v651 = vmul.f32 %v508, %v650
    %v652 = vsub.f32 1.0, %v651
    %v653 = vmul.f32 %v650, %v652
    %v654 = vadd.f32 %v650, %v653
    %vm655 = vweird.f32 %v508
    %vm656 = vweird.f32 %v650
    %vm657 = vmor %vm655, %vm656
    %v658 = vsel %vm657, %v650, %v654
    %v659 = vand.u32 2147483647, %v508
    %vm660 = vcmp.eq.f32.partialorder %v659, 8.507059e+37
    %v661 = vand.u32 %v508, 2147483648
    %v662 = vor.u32 1.1754944e-38, %v661
    %v663 = vsel %vm660, %v662, %v658
    %v664 = vmul.f32 1.0, %v663
    %v665 = vrcp.pop %v509
    %v666 = vmul.f32 %v509, %v665
    %v667 = vsub.f32 1.0, %v666
    %v668 = vmul.f32 %v665, %v667
    %v669 = vadd.f32 %v665, %v668
    %vm670 = vweird.f32 %v509
    %vm671 = vweird.f32 %v665
    %vm672 = vmor %vm670, %vm671
    %v673 = vsel %vm672, %v665, %v669
    %v674 = vand.u32 2147483647, %v509
    %vm675 = vcmp.eq.f32.partialorder %v674, 8.507059e+37
    %v676 = vand.u32 %v509, 2147483648
    %v677 = vor.u32 1.1754944e-38, %v676
    %v678 = vsel %vm675, %v677, %v673
    %v679 = vmul.f32 1.0, %v678
    %v680 = vrcp.pop %v510
    %v681 = vmul.f32 %v510, %v680
    %v682 = vsub.f32 1.0, %v681
    %v683 = vmul.f32 %v680, %v682
    %v684 = vadd.f32 %v680, %v683
    %vm685 = vweird.f32 %v510
    %vm686 = vweird.f32 %v680
    %vm687 = vmor %vm685, %vm686
    %v688 = vsel %vm687, %v680, %v684
    %v689 = vand.u32 2147483647, %v510
    %vm690 = vcmp.eq.f32.partialorder %v689, 8.507059e+37
    %v691 = vand.u32 %v510, 2147483648
    %v692 = vor.u32 1.1754944e-38, %v691
    %v693 = vsel %vm690, %v692, %v688
    %v694 = vmul.f32 1.0, %v693
    %v695 = vrcp.pop %v511
    %v696 = vmul.f32 %v511, %v695
    %v697 = vsub.f32 1.0, %v696
    %v698 = vmul.f32 %v695, %v697
    %v699 = vadd.f32 %v695, %v698
    %vm700 = vweird.f32 %v511
    %vm701 = vweird.f32 %v695
    %vm702 = vmor %vm700, %vm701
    %v703 = vsel %vm702, %v695, %v699
    %v704 = vand.u32 2147483647, %v511
    %vm705 = vcmp.eq.f32.partialorder %v704, 8.507059e+37
    %v706 = vand.u32 %v511, 2147483648
    %v707 = vor.u32 1.1754944e-38, %v706
    %v708 = vsel %vm705, %v707, %v703
    %v709 = vmul.f32 1.0, %v708
    %v710 = vrcp.pop %v512
    %v711 = vmul.f32 %v512, %v710
    %v712 = vsub.f32 1.0, %v711
    %v713 = vmul.f32 %v710, %v712
    %v714 = vadd.f32 %v710, %v713
    %vm715 = vweird.f32 %v512
    %vm716 = vweird.f32 %v710
    %vm717 = vmor %vm715, %vm716
    %v718 = vsel %vm717, %v710, %v714
    %v719 = vand.u32 2147483647, %v512
    %vm720 = vcmp.eq.f32.partialorder %v719, 8.507059e+37
    %v721 = vand.u32 %v512, 2147483648
    %v722 = vor.u32 1.1754944e-38, %v721
    %v723 = vsel %vm720, %v722, %v718
    %v724 = vmul.f32 1.0, %v723
    %v725 = vrcp.pop %v513
    %v726 = vmul.f32 %v513, %v725
    %v727 = vsub.f32 1.0, %v726
    %v728 = vmul.f32 %v725, %v727
    %v729 = vadd.f32 %v725, %v728
    %vm730 = vweird.f32 %v513
    %vm731 = vweird.f32 %v725
    %vm732 = vmor %vm730, %vm731
    %v733 = vsel %vm732, %v725, %v729
    %v734 = vand.u32 2147483647, %v513
    %vm735 = vcmp.eq.f32.partialorder %v734, 8.507059e+37
    %v736 = vand.u32 %v513, 2147483648
    %v737 = vor.u32 1.1754944e-38, %v736
    %v738 = vsel %vm735, %v737, %v733
    %v739 = vmul.f32 1.0, %v738
    %v740 = vrcp.pop %v514
    %v741 = vmul.f32 %v514, %v740
    %v742 = vsub.f32 1.0, %v741
    %v743 = vmul.f32 %v740, %v742
    %v744 = vadd.f32 %v740, %v743
    %vm745 = vweird.f32 %v514
    %vm746 = vweird.f32 %v740
    %vm747 = vmor %vm745, %vm746
    %v748 = vsel %vm747, %v740, %v744
    %v749 = vand.u32 2147483647, %v514
    %vm750 = vcmp.eq.f32.partialorder %v749, 8.507059e+37
    %v751 = vand.u32 %v514, 2147483648
    %v752 = vor.u32 1.1754944e-38, %v751
    %v753 = vsel %vm750, %v752, %v748
    %v754 = vmul.f32 1.0, %v753
    %755 = vst [vmem:[#allocation2] sm:$0xff] %v529
    %756 = vst [vmem:[#allocation2 + $0x8] sm:$0xff] %v544
    %757 = vst [vmem:[#allocation2 + $0x10] sm:$0xff] %v559
    %758 = vst [vmem:[#allocation2 + $0x18] sm:$0xff] %v574
    %759 = vst [vmem:[#allocation2 + $0x20] sm:$0xff] %v589
    %760 = vst [vmem:[#allocation2 + $0x28] sm:$0xff] %v604
    %761 = vst [vmem:[#allocation2 + $0x30] sm:$0xff] %v619
    %762 = vst [vmem:[#allocation2 + $0x38] sm:$0xff] %v634
    %763 = vst [vmem:[#allocation2 + $0x40] sm:$0xff] %v649
    %764 = vst [vmem:[#allocation2 + $0x48] sm:$0xff] %v664
    %765 = vst [vmem:[#allocation2 + $0x50] sm:$0xff] %v679
    %766 = vst [vmem:[#allocation2 + $0x58] sm:$0xff] %v694
    %767 = vst [vmem:[#allocation2 + $0x60] sm:$0xff] %v709
    %768 = vst [vmem:[#allocation2 + $0x68] sm:$0xff] %v724
    %769 = vst [vmem:[#allocation2 + $0x70] sm:$0xff] %v739
    %770 = vst [vmem:[#allocation2 + $0x78] sm:$0xff] %v754
    %v771 = vld [vmem:[%s5] sm:$0xff]
    %v772 = vld [vmem:[%s5 + $0x8] sm:$0xff]
    %v773 = vld [vmem:[%s5 + $0x10] sm:$0xff]
    %v774 = vld [vmem:[%s5 + $0x18] sm:$0xff]
    %v775 = vld [vmem:[%s5 + $0x20] sm:$0xff]
    %v776 = vld [vmem:[%s5 + $0x28] sm:$0xff]
    %v777 = vld [vmem:[%s5 + $0x30] sm:$0xff]
    %v778 = vld [vmem:[%s5 + $0x38] sm:$0xff]
    %v779 = vld [vmem:[%s5 + $0x40] sm:$0xff]
    %v780 = vld [vmem:[%s5 + $0x48] sm:$0xff]
    %v781 = vld [vmem:[%s5 + $0x50] sm:$0xff]
    %v782 = vld [vmem:[%s5 + $0x58] sm:$0xff]
    %v783 = vld [vmem:[%s5 + $0x60] sm:$0x77]
    %v784 = vld [vmem:[%s5 + $0x68] sm:$0x77]
    %v785 = vld [vmem:[%s6] sm:$0xf]
    %v786 = vld [vmem:[%s6 + $0x4] sm:$0xf]
    %v787 = vld [vmem:[%s6 + $0x8] sm:$0xf]
    %v788 = vld [vmem:[%s6 + $0xc] sm:$0xf]
    %v789 = vld [vmem:[%s6 + $0x10] sm:$0xf]
    %v790 = vld [vmem:[%s6 + $0x14] sm:$0xf]
    %v791 = vld [vmem:[%s6 + $0x18] sm:$0xf]
    %v792 = vld [vmem:[%s6 + $0x1c] sm:$0xf]
    %v793 = vld [vmem:[%s6 + $0x20] sm:$0xf]
    %v794 = vld [vmem:[%s6 + $0x24] sm:$0xf]
    %v795 = vld [vmem:[%s6 + $0x28] sm:$0xf]
    %v796 = vld [vmem:[%s6 + $0x2c] sm:$0xf]
    %v797 = vld [vmem:[%s6 + $0x30] sm:$0xf]
    %v798 = vld [vmem:[%s6 + $0x34] sm:$0xf]
    %v799 = vld [vmem:[%s6 + $0x38] sm:$0xf]
    %v800 = vld [vmem:[%s6 + $0x3c] sm:$0xf]
    %v801 = vld [vmem:[%s6 + $0x40] sm:$0xf]
    %v802 = vld [vmem:[%s6 + $0x44] sm:$0xf]
    %v803 = vld [vmem:[%s6 + $0x48] sm:$0xf]
    %v804 = vld [vmem:[%s6 + $0x4c] sm:$0xf]
    %v805 = vld [vmem:[%s6 + $0x50] sm:$0xf]
    %v806 = vld [vmem:[%s6 + $0x54] sm:$0xf]
    %v807 = vld [vmem:[%s6 + $0x58] sm:$0xf]
    %v808 = vld [vmem:[%s6 + $0x5c] sm:$0xf]
    %v809 = vld [vmem:[%s6 + $0x60] sm:$0xf]
    %v810 = vld [vmem:[%s6 + $0x64] sm:$0xf]
    %v811 = vld [vmem:[%s6 + $0x68] sm:$0xf]
    %v812 = vld [vmem:[%s6 + $0x6c] sm:$0xf]
    %v813 = vld [vmem:[%s6 + $0x70] sm:$0xf]
    %v814 = vld [vmem:[%s6 + $0x74] sm:$0xf]
    %v815 = vld [vmem:[%s6 + $0x78] sm:$0xf]
    %v816 = vld [vmem:[%s6 + $0x7c] sm:$0xf]
    %v817 = vld [vmem:[%s6 + $0x80] sm:$0xf]
    %v818 = vld [vmem:[%s6 + $0x84] sm:$0xf]
    %v819 = vld [vmem:[%s6 + $0x88] sm:$0xf]
    %v820 = vld [vmem:[%s6 + $0x8c] sm:$0xf]
    %v821 = vld [vmem:[%s6 + $0x90] sm:$0xf]
    %v822 = vld [vmem:[%s6 + $0x94] sm:$0xf]
    %v823 = vld [vmem:[%s6 + $0x98] sm:$0xf]
    %v824 = vld [vmem:[%s6 + $0x9c] sm:$0xf]
    %v825 = vld [vmem:[%s6 + $0xa0] sm:$0xf]
    %v826 = vld [vmem:[%s6 + $0xa4] sm:$0xf]
    %v827 = vld [vmem:[%s6 + $0xa8] sm:$0xf]
    %v828 = vld [vmem:[%s6 + $0xac] sm:$0xf]
    %v829 = vld [vmem:[%s6 + $0xb0] sm:$0xf]
    %v830 = vld [vmem:[%s6 + $0xb4] sm:$0xf]
    %v831 = vld [vmem:[%s6 + $0xb8] sm:$0xf]
    %v832 = vld [vmem:[%s6 + $0xbc] sm:$0xf]
    %v833 = vld [vmem:[%s6 + $0xc0] sm:$0xf]
    %v834 = vld [vmem:[%s6 + $0xc4] sm:$0xf]
    %v835 = vld [vmem:[%s6 + $0xc8] sm:$0xf]
    %v836 = vld [vmem:[%s6 + $0xcc] sm:$0xf]
    %v837 = vld [vmem:[%s6 + $0xd0] sm:$0xf]
    %v838 = vld [vmem:[%s6 + $0xd4] sm:$0xf]
    %v853 = vunpack.c.l.b16 %v771
    %v854 = vunpack.c.h.b16 %v771
    %v855 = vunpack.c.l.b16 %v772
    %v856 = vunpack.c.h.b16 %v772
    %v857 = vunpack.c.l.b16 %v773
    %v858 = vunpack.c.h.b16 %v773
    %v859 = vunpack.c.l.b16 %v774
    %v860 = vunpack.c.h.b16 %v774
    %v861 = vunpack.c.l.b16 %v775
    %v862 = vunpack.c.h.b16 %v775
    %v863 = vunpack.c.l.b16 %v776
    %v864 = vunpack.c.h.b16 %v776
    %v865 = vunpack.c.l.b16 %v777
    %v866 = vunpack.c.h.b16 %v777
    %v867 = vunpack.c.l.b16 %v778
    %v868 = vunpack.c.h.b16 %v778
    %v869 = vunpack.c.l.b16 %v779
    %v870 = vunpack.c.h.b16 %v779
    %v871 = vunpack.c.l.b16 %v780
    %v872 = vunpack.c.h.b16 %v780
    %v873 = vunpack.c.l.b16 %v781
    %v874 = vunpack.c.h.b16 %v781
    %v875 = vunpack.c.l.b16 %v782
    %v876 = vunpack.c.h.b16 %v782
    %v877 = vunpack.c.l.b16 %v783
    %v878 = vunpack.c.h.b16 %v783
    %v879 = vunpack.c.l.b16 %v784
    %v880 = vunpack.c.h.b16 %v784
    %v881 = vpack.c.b16 %v857, %v853
    %v882 = vpack.c.b16 %v858, %v854
    %v883 = vpack.c.b16 %v859, %v855
    %v884 = vpack.c.b16 %v860, %v856
    %v885 = vpack.c.b16 %v865, %v861
    %v886 = vpack.c.b16 %v866, %v862
    %v887 = vpack.c.b16 %v867, %v863
    %v888 = vpack.c.b16 %v868, %v864
    %v889 = vpack.c.b16 %v873, %v869
    %v890 = vpack.c.b16 %v874, %v870
    %v891 = vpack.c.b16 %v875, %v871
    %v892 = vpack.c.b16 %v876, %v872
    %v893 = vpack.c.b16 %v877, %v877
    %v894 = vpack.c.b16 %v878, %v878
    %v895 = vpack.c.b16 %v879, %v879
    %v896 = vpack.c.b16 %v880, %v880
    %v963 = vunpack.c.l.b16 %v785
    %v964 = vunpack.c.l.b16 %v786
    %v965 = vunpack.c.l.b16 %v787
    %v966 = vunpack.c.l.b16 %v788
    %v967 = vunpack.c.l.b16 %v789
    %v968 = vunpack.c.l.b16 %v790
    %v969 = vunpack.c.l.b16 %v791
    %v970 = vunpack.c.l.b16 %v792
    %v971 = vunpack.c.l.b16 %v793
    %v972 = vunpack.c.l.b16 %v794
    %v973 = vunpack.c.l.b16 %v795
    %v974 = vunpack.c.l.b16 %v796
    %v975 = vunpack.c.l.b16 %v797
    %v976 = vunpack.c.l.b16 %v798
    %v977 = vunpack.c.l.b16 %v799
    %v978 = vunpack.c.l.b16 %v800
    %v979 = vunpack.c.l.b16 %v801
    %v980 = vunpack.c.l.b16 %v802
    %v981 = vunpack.c.l.b16 %v803
    %v982 = vunpack.c.l.b16 %v804
    %v983 = vunpack.c.l.b16 %v805
    %v984 = vunpack.c.l.b16 %v806
    %v985 = vunpack.c.l.b16 %v807
    %v986 = vunpack.c.l.b16 %v808
    %v987 = vunpack.c.l.b16 %v809
    %v988 = vunpack.c.l.b16 %v810
    %v989 = vunpack.c.l.b16 %v811
    %v990 = vunpack.c.l.b16 %v812
    %v991 = vunpack.c.l.b16 %v813
    %v992 = vunpack.c.l.b16 %v814
    %v993 = vunpack.c.l.b16 %v815
    %v994 = vunpack.c.l.b16 %v816
    %v995 = vunpack.c.l.b16 %v817
    %v996 = vunpack.c.l.b16 %v818
    %v997 = vunpack.c.l.b16 %v819
    %v998 = vunpack.c.l.b16 %v820
    %v999 = vunpack.c.l.b16 %v821
    %v1000 = vunpack.c.l.b16 %v822
    %v1001 = vunpack.c.l.b16 %v823
    %v1002 = vunpack.c.l.b16 %v824
    %v1003 = vunpack.c.l.b16 %v825
    %v1004 = vunpack.c.l.b16 %v826
    %v1005 = vunpack.c.l.b16 %v827
    %v1006 = vunpack.c.l.b16 %v828
    %v1007 = vunpack.c.l.b16 %v829
    %v1008 = vunpack.c.l.b16 %v830
    %v1009 = vunpack.c.l.b16 %v831
    %v1010 = vunpack.c.l.b16 %v832
    %v1011 = vunpack.c.l.b16 %v833
    %v1012 = vunpack.c.l.b16 %v834
    %v1013 = vunpack.c.l.b16 %v835
    %v1014 = vunpack.c.l.b16 %v836
    %v1015 = vunpack.c.l.b16 %v837
    %v1016 = vunpack.c.l.b16 %v838
    %v1017 = vpack.c.b16 %v964, %v963
    %v1018 = vpack.c.b16 %v966, %v965
    %v1019 = vpack.c.b16 %v968, %v967
    %v1020 = vpack.c.b16 %v970, %v969
    %v1021 = vpack.c.b16 %v972, %v971
    %v1022 = vpack.c.b16 %v974, %v973
    %v1023 = vpack.c.b16 %v976, %v975
    %v1024 = vpack.c.b16 %v978, %v977
    %v1025 = vpack.c.b16 %v980, %v979
    %v1026 = vpack.c.b16 %v982, %v981
    %v1027 = vpack.c.b16 %v984, %v983
    %v1028 = vpack.c.b16 %v986, %v985
    %v1029 = vpack.c.b16 %v988, %v987
    %v1030 = vpack.c.b16 %v990, %v989
    %v1031 = vpack.c.b16 %v992, %v991
    %v1032 = vpack.c.b16 %v994, %v993
    %v1033 = vpack.c.b16 %v996, %v995
    %v1034 = vpack.c.b16 %v998, %v997
    %v1035 = vpack.c.b16 %v1000, %v999
    %v1036 = vpack.c.b16 %v1002, %v1001
    %v1037 = vpack.c.b16 %v1004, %v1003
    %v1038 = vpack.c.b16 %v1006, %v1005
    %v1039 = vpack.c.b16 %v1008, %v1007
    %v1040 = vpack.c.b16 %v1010, %v1009
    %v1041 = vpack.c.b16 %v1012, %v1011
    %v1042 = vpack.c.b16 %v1014, %v1013
    %v1043 = vpack.c.b16 %v1016, %v1015
    %vm1071 = vcmask 392192
    %v1073 = vsel %vm1071, %v884, 0
    %v1076 = vsel %vm1071, %v888, 0
    %v1079 = vsel %vm1071, %v892, 0
    %v1082 = vsel %vm1071, %v896, 0
    %1084 = vmatpush.bf16.msra.mxu0 %v1024
    %1085 = vmatpush.bf16.msra.mxu0 %v1023
    %1086 = vmatpush.bf16.msra.mxu0 %v1022
    %1087 = vmatpush.bf16.msra.mxu0 %v1021
    %1088 = vmatpush.bf16.msra.mxu0 %v1020
    %1089 = vmatpush.bf16.msra.mxu0 %v1019
    %1090 = vmatpush.bf16.msra.mxu0 %v1018
    %1091 = vmatpush.bf16.msra.mxu0 %v1017
    %1092 = vmatmul.bf16.gmra.mxu0 %v881
    %v1093 = vpop.f32.mrf.mxu0
    %v1094 = vadd.f32 0.0, %v1093
    %v1095 = vpop.f32.mrf.mxu0
    %v1096 = vadd.f32 0.0, %v1095
    %1097 = vmatmul.bf16.gmra.mxu0 %v885
    %v1098 = vpop.f32.mrf.mxu0
    %v1099 = vadd.f32 0.0, %v1098
    %v1100 = vpop.f32.mrf.mxu0
    %v1101 = vadd.f32 0.0, %v1100
    %1102 = vmatmul.bf16.gmra.mxu0 %v889
    %v1103 = vpop.f32.mrf.mxu0
    %v1104 = vadd.f32 0.0, %v1103
    %v1105 = vpop.f32.mrf.mxu0
    %v1106 = vadd.f32 0.0, %v1105
    %1107 = vmatmul.bf16.gmra.mxu0 %v893
    %v1108 = vpop.f32.mrf.mxu0
    %v1109 = vadd.f32 0.0, %v1108
    %v1110 = vpop.f32.mrf.mxu0
    %1111 = vdwg.mxu0
    %1112 = vmatpush.bf16.msra.mxu0 %v1032
    %1113 = vmatpush.bf16.msra.mxu0 %v1031
    %1114 = vmatpush.bf16.msra.mxu0 %v1030
    %1115 = vmatpush.bf16.msra.mxu0 %v1029
    %1116 = vmatpush.bf16.msra.mxu0 %v1028
    %1117 = vmatpush.bf16.msra.mxu0 %v1027
    %1118 = vmatpush.bf16.msra.mxu0 %v1026
    %1119 = vmatpush.bf16.msra.mxu0 %v1025
    %1120 = vmatmul.bf16.gmra.mxu0 %v882
    %v1121 = vpop.f32.mrf.mxu0
    %v1122 = vadd.f32 %v1094, %v1121
    %v1123 = vpop.f32.mrf.mxu0
    %v1124 = vadd.f32 %v1096, %v1123
    %1125 = vmatmul.bf16.gmra.mxu0 %v886
    %v1126 = vpop.f32.mrf.mxu0
    %v1127 = vadd.f32 %v1099, %v1126
    %v1128 = vpop.f32.mrf.mxu0
    %v1129 = vadd.f32 %v1101, %v1128
    %1130 = vmatmul.bf16.gmra.mxu0 %v890
    %v1131 = vpop.f32.mrf.mxu0
    %v1132 = vadd.f32 %v1104, %v1131
    %v1133 = vpop.f32.mrf.mxu0
    %v1134 = vadd.f32 %v1106, %v1133
    %1135 = vmatmul.bf16.gmra.mxu0 %v894
    %v1136 = vpop.f32.mrf.mxu0
    %v1137 = vadd.f32 %v1109, %v1136
    %v1138 = vpop.f32.mrf.mxu0
    %1139 = vdwg.mxu0
    %1140 = vmatpush.bf16.msra.mxu0 %v1040
    %1141 = vmatpush.bf16.msra.mxu0 %v1039
    %1142 = vmatpush.bf16.msra.mxu0 %v1038
    %1143 = vmatpush.bf16.msra.mxu0 %v1037
    %1144 = vmatpush.bf16.msra.mxu0 %v1036
    %1145 = vmatpush.bf16.msra.mxu0 %v1035
    %1146 = vmatpush.bf16.msra.mxu0 %v1034
    %1147 = vmatpush.bf16.msra.mxu0 %v1033
    %1148 = vmatmul.bf16.gmra.mxu0 %v883
    %v1149 = vpop.f32.mrf.mxu0
    %v1150 = vadd.f32 %v1122, %v1149
    %v1151 = vpop.f32.mrf.mxu0
    %v1152 = vadd.f32 %v1124, %v1151
    %1153 = vmatmul.bf16.gmra.mxu0 %v887
    %v1154 = vpop.f32.mrf.mxu0
    %v1155 = vadd.f32 %v1127, %v1154
    %v1156 = vpop.f32.mrf.mxu0
    %v1157 = vadd.f32 %v1129, %v1156
    %1158 = vmatmul.bf16.gmra.mxu0 %v891
    %v1159 = vpop.f32.mrf.mxu0
    %v1160 = vadd.f32 %v1132, %v1159
    %v1161 = vpop.f32.mrf.mxu0
    %v1162 = vadd.f32 %v1134, %v1161
    %1163 = vmatmul.bf16.gmra.mxu0 %v895
    %v1164 = vpop.f32.mrf.mxu0
    %v1165 = vadd.f32 %v1137, %v1164
    %v1166 = vpop.f32.mrf.mxu0
    %1167 = vdwg.mxu0
    %1168 = vmatpush.bf16.msra.mxu0 0
    %1169 = vmatpush.bf16.msra.mxu0 0
    %1170 = vmatpush.bf16.msra.mxu0 0
    %1171 = vmatpush.bf16.msra.mxu0 0
    %1172 = vmatpush.bf16.msra.mxu0 0
    %1173 = vmatpush.bf16.msra.mxu0 %v1043
    %1174 = vmatpush.bf16.msra.mxu0 %v1042
    %1175 = vmatpush.bf16.msra.mxu0 %v1041
    %1176 = vmatmul.bf16.gmra.mxu0 %v1073
    %v1177 = vpop.f32.mrf.mxu0
    %v1178 = vadd.f32 %v1150, %v1177
    %v1179 = vpop.f32.mrf.mxu0
    %v1180 = vadd.f32 %v1152, %v1179
    %1181 = vmatmul.bf16.gmra.mxu0 %v1076
    %v1182 = vpop.f32.mrf.mxu0
    %v1183 = vadd.f32 %v1155, %v1182
    %v1184 = vpop.f32.mrf.mxu0
    %v1185 = vadd.f32 %v1157, %v1184
    %1186 = vmatmul.bf16.gmra.mxu0 %v1079
    %v1187 = vpop.f32.mrf.mxu0
    %v1188 = vadd.f32 %v1160, %v1187
    %v1189 = vpop.f32.mrf.mxu0
    %v1190 = vadd.f32 %v1162, %v1189
    %1191 = vmatmul.bf16.gmra.mxu0 %v1082
    %v1192 = vpop.f32.mrf.mxu0
    %v1193 = vadd.f32 %v1165, %v1192
    %v1194 = vpop.f32.mrf.mxu0
    %1195 = vdwg.mxu0
    %v1196 = vmax.f32 %v1178, 0.0
    %v1197 = vmax.f32 %v1180, 0.0
    %v1198 = vmax.f32 %v1183, 0.0
    %v1199 = vmax.f32 %v1185, 0.0
    %v1200 = vmax.f32 %v1188, 0.0
    %v1201 = vmax.f32 %v1190, 0.0
    %v1202 = vmax.f32 %v1193, 0.0
    %1203 = vst [vmem:[%s12] sm:$0xff] %v1196
    %1204 = vst [vmem:[%s12 + $0x8] sm:$0xff] %v1197
    %1205 = vst [vmem:[%s12 + $0x10] sm:$0xff] %v1198
    %1206 = vst [vmem:[%s12 + $0x18] sm:$0xff] %v1199
    %1207 = vst [vmem:[%s12 + $0x20] sm:$0xff] %v1200
    %1208 = vst [vmem:[%s12 + $0x28] sm:$0xff] %v1201
    %1209 = vst [vmem:[%s12 + $0x30] sm:$0x3f] %v1202
    %v1210 = vld [vmem:[%s7] sm:$0xf]
    %v1211 = vld [vmem:[%s7 + $0x4] sm:$0xf]
    %v1212 = vld [vmem:[%s7 + $0x8] sm:$0xf]
    %v1213 = vld [vmem:[%s7 + $0xc] sm:$0xf]
    %v1214 = vld [vmem:[%s7 + $0x10] sm:$0xf]
    %v1215 = vld [vmem:[%s7 + $0x14] sm:$0xf]
    %v1216 = vld [vmem:[%s7 + $0x18] sm:$0xf]
    %v1217 = vld [vmem:[%s7 + $0x1c] sm:$0xf]
    %v1218 = vld [vmem:[%s7 + $0x20] sm:$0xf]
    %v1219 = vld [vmem:[%s8] sm:$0xf]
    %v1220 = vld [vmem:[%s8 + $0x4] sm:$0xf]
    %v1221 = vld [vmem:[%s8 + $0x8] sm:$0xf]
    %v1222 = vld [vmem:[%s8 + $0xc] sm:$0xf]
    %v1223 = vld [vmem:[%s8 + $0x10] sm:$0xf]
    %v1224 = vld [vmem:[%s8 + $0x14] sm:$0xf]
    %v1225 = vld [vmem:[%s8 + $0x18] sm:$0xf]
    %v1226 = vld [vmem:[%s8 + $0x1c] sm:$0xf]
    %v1227 = vld [vmem:[%s9] sm:$0x1]
    %v1229 = vperm.slane %v1227, 0
    %v1240 = vunpack.c.l.b16 %v1210
    %v1241 = vunpack.c.l.b16 %v1211
    %v1242 = vunpack.c.l.b16 %v1212
    %v1243 = vunpack.c.l.b16 %v1213
    %v1244 = vunpack.c.l.b16 %v1214
    %v1245 = vunpack.c.l.b16 %v1215
    %v1246 = vunpack.c.l.b16 %v1216
    %v1247 = vunpack.c.l.b16 %v1217
    %v1248 = vunpack.c.l.b16 %v1218
    %v1249 = vpack.c.b16 %v1241, %v1240
    %v1250 = vpack.c.b16 %v1243, %v1242
    %v1251 = vpack.c.b16 %v1245, %v1244
    %v1252 = vpack.c.b16 %v1247, %v1246
    %v1253 = vpack.c.b16 %v1248, %v1248
    %v1262 = vunpack.c.l.b16 %v1219
    %v1263 = vunpack.c.l.b16 %v1220
    %v1264 = vunpack.c.l.b16 %v1221
    %v1265 = vunpack.c.l.b16 %v1222
    %v1266 = vunpack.c.l.b16 %v1223
    %v1267 = vunpack.c.l.b16 %v1224
    %v1268 = vunpack.c.l.b16 %v1225
    %v1269 = vunpack.c.l.b16 %v1226
    %v1270 = vpack.c.b16 %v1263, %v1262
    %v1271 = vpack.c.b16 %v1265, %v1264
    %v1272 = vpack.c.b16 %v1267, %v1266
    %v1273 = vpack.c.b16 %v1269, %v1268
    %vm1278 = vcmask 523264
    %v1280 = vsel %vm1278, %v1249, 0
    %v1283 = vsel %vm1278, %v1250, 0
    %v1286 = vsel %vm1278, %v1251, 0
    %v1289 = vsel %vm1278, %v1252, 0
    %v1292 = vsel %vm1278, %v1253, 0
    %1294 = vmatpush.bf16.msra.mxu0 0
    %1295 = vmatpush.bf16.msra.mxu0 0
    %1296 = vmatpush.bf16.msra.mxu0 0
    %1297 = vmatpush.bf16.msra.mxu0 0
    %1298 = vmatpush.bf16.msra.mxu0 %v1273
    %1299 = vmatpush.bf16.msra.mxu0 %v1272
    %1300 = vmatpush.bf16.msra.mxu0 %v1271
    %1301 = vmatpush.bf16.msra.mxu0 %v1270
    %1302 = vmatmul.bf16.gmra.mxu0 %v1280
    %v1303 = vpop.f32.mrf.mxu0
    %v1304 = vadd.f32 %v1229, %v1303
    %v1305 = vpop.f32.mrf.mxu0
    %v1306 = vadd.f32 %v1229, %v1305
    %1307 = vmatmul.bf16.gmra.mxu0 %v1283
    %v1308 = vpop.f32.mrf.mxu0
    %v1309 = vadd.f32 %v1229, %v1308
    %v1310 = vpop.f32.mrf.mxu0
    %v1311 = vadd.f32 %v1229, %v1310
    %1312 = vmatmul.bf16.gmra.mxu0 %v1286
    %v1313 = vpop.f32.mrf.mxu0
    %v1314 = vadd.f32 %v1229, %v1313
    %v1315 = vpop.f32.mrf.mxu0
    %v1316 = vadd.f32 %v1229, %v1315
    %1317 = vmatmul.bf16.gmra.mxu0 %v1289
    %v1318 = vpop.f32.mrf.mxu0
    %v1319 = vadd.f32 %v1229, %v1318
    %v1320 = vpop.f32.mrf.mxu0
    %v1321 = vadd.f32 %v1229, %v1320
    %1322 = vmatmul.bf16.gmra.mxu0 %v1292
    %v1323 = vpop.f32.mrf.mxu0
    %v1324 = vadd.f32 %v1229, %v1323
    %v1325 = vpop.f32.mrf.mxu0
    %1326 = vdwg.mxu0
    %v1327 = vtanh.pop %v1304
    %v1328 = vtanh.pop %v1306
    %v1329 = vtanh.pop %v1309
    %v1330 = vtanh.pop %v1311
    %v1331 = vtanh.pop %v1314
    %v1332 = vtanh.pop %v1316
    %v1333 = vtanh.pop %v1319
    %v1334 = vtanh.pop %v1321
    %v1335 = vtanh.pop %v1324
    %v1336 = vtanh.pop %v1327
    %v1337 = vtanh.pop %v1328
    %v1338 = vtanh.pop %v1329
    %v1339 = vtanh.pop %v1330
    %v1340 = vtanh.pop %v1331
    %v1341 = vtanh.pop %v1332
    %v1342 = vtanh.pop %v1333
    %v1343 = vtanh.pop %v1334
    %v1344 = vtanh.pop %v1335
    %1345 = vst [vmem:[%s13] sm:$0xff] %v1336
    %1346 = vst [vmem:[%s13 + $0x8] sm:$0xff] %v1337
    %1347 = vst [vmem:[%s13 + $0x10] sm:$0xff] %v1338
    %1348 = vst [vmem:[%s13 + $0x18] sm:$0xff] %v1339
    %1349 = vst [vmem:[%s13 + $0x20] sm:$0xff] %v1340
    %1350 = vst [vmem:[%s13 + $0x28] sm:$0xff] %v1341
    %1351 = vst [vmem:[%s13 + $0x30] sm:$0xff] %v1342
    %1352 = vst [vmem:[%s13 + $0x38] sm:$0xff] %v1343
    %1353 = vst [vmem:[%s13 + $0x40] sm:$0xff] %v1344
    // Predicated region
    $region42: #{model_tanh_forward.1} parent=1 // pred_check
      _
    $region43: #{model_tanh_forward.1} parent=1 // pred_check_branch
      %1355 = sbr.rel (0) target = $region45
    $region44: #{model_tanh_forward.1} parent=1 // pred_region
      _
    $region45: #{model_tanh_forward.1} parent=1 // pred_fallthru
      _
    // Predicated region
    $region46: #{model_tanh_forward.1} parent=1 // pred_check
      _
    $region47: #{model_tanh_forward.1} parent=1 // pred_check_branch
      %1357 = sbr.rel (0) target = $region49
    $region48: #{model_tanh_forward.1} parent=1 // pred_region
      %1359 = vsyncadd [#allocation3], 0
      %s1360 = sshll.u32 [#allocation2], 4
      %s1361 = int_to_ptr.vmem [resolvable:$true] %s1360
      %s1362 = sshll.u32 %s11, 4
      %s1363 = int_to_ptr.hbm [resolvable:$true] %s1362
      %1368 = dma.vmem_to_hbm [thread:$0]  %s1361, 2048, %s1363, [#allocation3], 128, 128, 8
    $region49: #{model_tanh_forward.1} parent=1 // pred_fallthru
      _
    // Predicated region
    $region50: #{model_tanh_forward.1} parent=1 // pred_check
      _
    $region51: #{model_tanh_forward.1} parent=1 // pred_check_branch
      %1370 = sbr.rel (0) target = $region53
    $region52: #{model_tanh_forward.1} parent=1 // pred_region
      _
    $region53: #{model_tanh_forward.1} parent=1 // pred_fallthru
      _
    // Predicated region
    $region54: #{model_tanh_forward.1} parent=1 // pred_check
      _
    $region55: #{model_tanh_forward.1} parent=1 // pred_check_branch
      %1372 = sbr.rel (0) target = $region57
    $region56: #{model_tanh_forward.1} parent=1 // pred_region
      _
    $region57: #{model_tanh_forward.1} parent=1 // pred_fallthru
      _
    // Predicated region
    $region58: #{model_tanh_forward.1} parent=1 // pred_check
      _
    $region59: #{model_tanh_forward.1} parent=1 // pred_check_branch
      %1374 = sbr.rel (0) target = $region61
    $region60: #{model_tanh_forward.1} parent=1 // pred_region
      _
    $region61: #{model_tanh_forward.1} parent=1 // pred_fallthru
      _
    // Predicated region
    $region62: #{model_tanh_forward.1} parent=1 // pred_check
      _
    $region63: #{model_tanh_forward.1} parent=1 // pred_check_branch
      %1376 = sbr.rel (0) target = $region65
    $region64: #{model_tanh_forward.1} parent=1 // pred_region
      %1378 = dma.done [#allocation3], 2048
    $region65: #{model_tanh_forward.1} parent=1 // pred_fallthru
      _
    // Predicated region
    $region66: #{model_tanh_forward.1} parent=1 // pred_check
      _
    $region67: #{model_tanh_forward.1} parent=1 // pred_check_branch
      %1380 = sbr.rel (0) target = $region69
    $region68: #{model_tanh_forward.1} parent=1 // pred_region
      _
    $region69: #{model_tanh_forward.1} parent=1 // pred_fallthru
      _
    // Predicated region
    $region70: #{model_tanh_forward.1} parent=1 // pred_check
      _
    $region71: #{model_tanh_forward.1} parent=1 // pred_check_branch
      %1382 = sbr.rel (0) target = $region73
    $region72: #{model_tanh_forward.1} parent=1 // pred_region
      _
    $region73: #{model_tanh_forward.1} parent=1 // pred_fallthru
      _
    %1383 = vsyncpa [#allocation3], 1

</llo_original>
